<compile_context>
chip_gen: v7x
topology: tpu7x:2x2x1
jax: 0.10.0
libtpu: 0.0.40
codegen_flags: <defaults>
</compile_context>

<pallas_src>
from math import sqrt

import jax
import jax.numpy as jnp
from jax.experimental import pallas as pl
from jax.experimental.pallas import tpu as pltpu

_EPS = 1e-5                                   # nn.BatchNorm2d default eps
_VMEM_LIMIT = 48 * 1024 * 1024                # safe on v5e/v6e (128 MiB) and v7x (64 MiB)
# bf16 intermediates halve HBM traffic for the memory-bound 1x1 stages; all
# accumulation, BN statistics and coefficients stay f32.  Set to jnp.float32 for
# bit-closer parity with the PyTorch reference.
_INTERMEDIATE_DTYPE = jnp.bfloat16


# ---------------------------------------------------------------------------
# small helpers
# ---------------------------------------------------------------------------
def _round_up(x, m):
    return -(-x // m) * m


def _pick_spatial_tile(hw, bytes_per_col, budget=10 * 1024 * 1024):
    """Largest multiple-of-128 divisor of hw whose double-buffered per-step
    footprint stays under `budget`; falls back to the full extent."""
    cap = max(128, (budget // max(1, 2 * bytes_per_col)) // 128 * 128)
    best = None
    t = 128
    while t <= min(hw, cap):
        if hw % t == 0:
            best = t
        t += 128
    return best if best is not None else hw


def _pick_top_pad(w):
    """>=3 zero pad rows, chosen so the interior store lands lane-aligned."""
    for p in range(3, 35):
        if (p * w) % 128 == 0:
            return p
    return 3


def _pick_row_chunk(h, w, cap=2048):
    """Rows per deconv output chunk: TH*W lane-dense (multiple of 128 when
    possible), <= cap elements, TH divides H."""
    if h * w <= cap:
        return h
    best = None
    for th in range(1, h + 1):
        if h % th == 0 and th * w <= cap and (th * w) % 128 == 0:
            best = th
    if best is None:
        for th in range(1, h + 1):
            if h % th == 0 and th * w <= cap:
                best = th
    return best if best is not None else h


def _deconv_geometry(h, w, th, pt):
    """Static tap plan: per chunk, per (kh,kw) tap a 128-aligned window start,
    the in-window shift and the window length.  Returns (chunk_len, buffer_len,
    taps)."""
    ch = th * w
    taps = []
    max_end = (pt + h + 2) * w                # keep two zero rows below the image
    for blk in range(h // th):
        r0 = blk * th
        row = []
        for kh in range(3):
            for kw in range(3):
                g = (pt + r0 + 2 * kh - 2) * w + (2 * kw - 2)   # flat tap start
                a0 = (g // 128) * 128                           # aligned-down load
                sh = g - a0
                ln = _round_up(ch + sh, 128)
                row.append((kh * 3 + kw, a0, sh, ln))
                max_end = max(max_end, a0 + ln)
        taps.append((r0, row))
    return ch, _round_up(max_end, 128), taps


# ---------------------------------------------------------------------------
# kernel 1: 1x1 transposed conv (MXU) + per-block sum / sumsq partials
# ---------------------------------------------------------------------------
def _stage1_kernel(x_ref, w_ref, t1_ref, s_ref, q_ref):
    # x_ref: (C, TS)  w_ref: (n, C)  t1_ref: (n, TS)  s/q_ref: (n, 1) partials
    t = jnp.dot(w_ref[...], x_ref[...], preferred_element_type=jnp.float32)
    tc = t.astype(t1_ref.dtype)
    t1_ref[...] = tc
    tf = tc.astype(jnp.float32)               # stats of the stored values
    s_ref[...] = jnp.sum(tf, axis=1, keepdims=True)
    q_ref[...] = jnp.sum(tf * tf, axis=1, keepdims=True)


def _call_stage1(x3, w1t, ts):
    B, C, hw = x3.shape
    n = w1t.shape[0]
    sb = hw // ts
    return pl.pallas_call(
        _stage1_kernel,
        grid=(B, sb),
        in_specs=[
            pl.BlockSpec((None, C, ts), lambda b, s: (b, 0, s)),
            pl.BlockSpec((n, C), lambda b, s: (0, 0)),
        ],
        out_specs=(
            pl.BlockSpec((None, n, ts), lambda b, s: (b, 0, s)),
            pl.BlockSpec((None, None, n, 1), lambda b, s: (b, s, 0, 0)),
            pl.BlockSpec((None, None, n, 1), lambda b, s: (b, s, 0, 0)),
        ),
        out_shape=(
            jax.ShapeDtypeStruct((B, n, hw), _INTERMEDIATE_DTYPE),
            jax.ShapeDtypeStruct((B, sb, n, 1), jnp.float32),
            jax.ShapeDtypeStruct((B, sb, n, 1), jnp.float32),
        ),
        compiler_params=pltpu.CompilerParams(
            dimension_semantics=("parallel", "parallel"),
            vmem_limit_bytes=_VMEM_LIMIT),
    )(x3, w1t)


# ---------------------------------------------------------------------------
# kernel 2: 3x3 dilation-2 transposed conv, one image per grid step.
#   prologue: BN1+PReLU1 applied to the lane-dense flattened image, stored into
#             a row-padded flattened VMEM buffer (only the pads are zeroed).
#   body:     per row chunk, 9 MXU dots on aligned window loads (in-register
#             shift + column mask handle the +/-2 dilated column taps), one
#             lane-dense (n_out, TH*W) accumulator, lane-dense stores,
#             stage-2 sum/sumsq accumulated per image.
# ---------------------------------------------------------------------------
def _make_deconv_kernel(n_in, n_out, h, w, pt, length, taps, ch):
    hw = h * w

    def kernel(t1_ref, w2_ref, sc1_ref, sh1_ref, a1_ref,
               t2_ref, s_ref, q_ref, xpf_ref):
        # ---- prologue: BN1 + PReLU1, row-padded flattened image in VMEM ----
        act = t1_ref[...].astype(jnp.float32) * sc1_ref[...] + sh1_ref[...]
        act = jnp.where(act >= 0.0, act, a1_ref[0] * act)
        xpf_ref[:, 0:pt * w] = jnp.zeros((n_in, pt * w), jnp.float32)
        xpf_ref[:, pt * w:pt * w + hw] = act                  # lane-aligned store
        xpf_ref[:, pt * w + hw:length] = jnp.zeros(
            (n_in, length - pt * w - hw), jnp.float32)

        # column-validity masks for the +/-2 dilated column taps (period w)
        col = jax.lax.broadcasted_iota(jnp.int32, (1, ch), 1) % w
        mask_l = (col >= 2).astype(jnp.float32)
        mask_r = (col < (w - 2)).astype(jnp.float32)

        s_acc = jnp.zeros((n_out, 1), jnp.float32)
        q_acc = jnp.zeros((n_out, 1), jnp.float32)
        for r0, tap_list in taps:                             # static row chunks
            acc = jnp.zeros((n_out, ch), jnp.float32)
            for k, a0, sh, ln in tap_list:
                # aligned window load, then an in-register shift to the tap start
                win = xpf_ref[:, a0:a0 + ln][:, sh:sh + ch]   # (n_in, ch)
                kw = k % 3
                if kw == 0:
                    win = win * mask_l
                elif kw == 2:
                    win = win * mask_r
                acc = acc + jnp.dot(w2_ref[k], win,
                                    preferred_element_type=jnp.float32)
            out = acc.astype(t2_ref.dtype)
            t2_ref[:, r0 * w:r0 * w + ch] = out               # lane-dense store
            outf = out.astype(jnp.float32)
            s_acc = s_acc + jnp.sum(outf, axis=1, keepdims=True)
            q_acc = q_acc + jnp.sum(outf * outf, axis=1, keepdims=True)
        s_ref[...] = s_acc
        q_ref[...] = q_acc

    return kernel


def _call_deconv(t1, w2, sc1, sh1, a1, h, w):
    B, n_in, hw = t1.shape
    n_out = w2.shape[1]
    th = _pick_row_chunk(h, w)
    pt = _pick_top_pad(w)
    ch, length, taps = _deconv_geometry(h, w, th, pt)
    kernel = _make_deconv_kernel(n_in, n_out, h, w, pt, length, taps, ch)
    smem = pltpu.MemorySpace.SMEM
    # TODO(synk): at production n*H*W the per-image resident block + (n, L)
    # scratch should switch to a halo'd row-window (manual double-buffered DMA)
    # to bound VMEM on v7x's 64 MiB.
    return pl.pallas_call(
        kernel,
        grid=(B,),
        in_specs=[
            pl.BlockSpec((None, n_in, hw), lambda b: (b, 0, 0)),
            pl.BlockSpec((9, n_out, n_in), lambda b: (0, 0, 0)),
            pl.BlockSpec((n_in, 1), lambda b: (0, 0)),
            pl.BlockSpec((n_in, 1), lambda b: (0, 0)),
            pl.BlockSpec((1,), lambda b: (0,), memory_space=smem),
        ],
        out_specs=(
            pl.BlockSpec((None, n_out, hw), lambda b: (b, 0, 0)),
            pl.BlockSpec((None, n_out, 1), lambda b: (b, 0, 0)),
            pl.BlockSpec((None, n_out, 1), lambda b: (b, 0, 0)),
        ),
        out_shape=(
            jax.ShapeDtypeStruct((B, n_out, hw), _INTERMEDIATE_DTYPE),
            jax.ShapeDtypeStruct((B, n_out, 1), jnp.float32),
            jax.ShapeDtypeStruct((B, n_out, 1), jnp.float32),
        ),
        scratch_shapes=[pltpu.VMEM((n_in, length), jnp.float32)],
        compiler_params=pltpu.CompilerParams(
            dimension_semantics=("parallel",),
            vmem_limit_bytes=_VMEM_LIMIT),
    )(t1, w2, sc1, sh1, a1)


# ---------------------------------------------------------------------------
# kernel 3: stage-2 BN + PReLU prologue, 1x1 expand (MXU), stage-3 stats only
#           (the expanded activation is never written to HBM)
# ---------------------------------------------------------------------------
def _stage3_stats_kernel(t2_ref, w_ref, sc2_ref, sh2_ref, a2_ref, s_ref, q_ref):
    a2v = t2_ref[...].astype(jnp.float32) * sc2_ref[...] + sh2_ref[...]
    a2v = jnp.where(a2v >= 0.0, a2v, a2_ref[0] * a2v)         # (n, TS)
    t3 = jnp.dot(w_ref[...], a2v, preferred_element_type=jnp.float32)  # (C, TS)
    s_ref[...] = jnp.sum(t3, axis=1, keepdims=True)
    q_ref[...] = jnp.sum(t3 * t3, axis=1, keepdims=True)


def _call_stage3_stats(t2f, w3t, sc2, sh2, a2, ts):
    B, n, hw = t2f.shape
    C = w3t.shape[0]
    sb = hw // ts
    smem = pltpu.MemorySpace.SMEM
    return pl.pallas_call(
        _stage3_stats_kernel,
        grid=(B, sb),
        in_specs=[
            pl.BlockSpec((None, n, ts), lambda b, s: (b, 0, s)),
            pl.BlockSpec((C, n), lambda b, s: (0, 0)),
            pl.BlockSpec((n, 1), lambda b, s: (0, 0)),
            pl.BlockSpec((n, 1), lambda b, s: (0, 0)),
            pl.BlockSpec((1,), lambda b, s: (0,), memory_space=smem),
        ],
        out_specs=(
            pl.BlockSpec((None, None, C, 1), lambda b, s: (b, s, 0, 0)),
            pl.BlockSpec((None, None, C, 1), lambda b, s: (b, s, 0, 0)),
        ),
        out_shape=(
            jax.ShapeDtypeStruct((B, sb, C, 1), jnp.float32),
            jax.ShapeDtypeStruct((B, sb, C, 1), jnp.float32),
        ),
        compiler_params=pltpu.CompilerParams(
            dimension_semantics=("parallel", "parallel"),
            vmem_limit_bytes=_VMEM_LIMIT),
    )(t2f, w3t, sc2, sh2, a2)


# ---------------------------------------------------------------------------
# kernel 4: recompute 1x1 expand, stage-3 BN, residual add, PReLU
# ---------------------------------------------------------------------------
def _stage3_final_kernel(t2_ref, x_ref, w_ref, sc2_ref, sh2_ref, a2_ref,
                         sc3_ref, sh3_ref, a3_ref, y_ref):
    a2v = t2_ref[...].astype(jnp.float32) * sc2_ref[...] + sh2_ref[...]
    a2v = jnp.where(a2v >= 0.0, a2v, a2_ref[0] * a2v)         # (n, TS)
    t3 = jnp.dot(w_ref[...], a2v, preferred_element_type=jnp.float32)  # (C, TS)
    y = t3 * sc3_ref[...] + sh3_ref[...] + x_ref[...]          # residual: + x
    y_ref[...] = jnp.where(y >= 0.0, y, a3_ref[0] * y)


def _call_stage3_final(t2f, x3, w3t, sc2, sh2, a2, sc3, sh3, a3, ts):
    B, n, hw = t2f.shape
    C = w3t.shape[0]
    sb = hw // ts
    smem = pltpu.MemorySpace.SMEM
    return pl.pallas_call(
        _stage3_final_kernel,
        grid=(B, sb),
        in_specs=[
            pl.BlockSpec((None, n, ts), lambda b, s: (b, 0, s)),
            pl.BlockSpec((None, C, ts), lambda b, s: (b, 0, s)),
            pl.BlockSpec((C, n), lambda b, s: (0, 0)),
            pl.BlockSpec((n, 1), lambda b, s: (0, 0)),
            pl.BlockSpec((n, 1), lambda b, s: (0, 0)),
            pl.BlockSpec((1,), lambda b, s: (0,), memory_space=smem),
            pl.BlockSpec((C, 1), lambda b, s: (0, 0)),
            pl.BlockSpec((C, 1), lambda b, s: (0, 0)),
            pl.BlockSpec((1,), lambda b, s: (0,), memory_space=smem),
        ],
        out_specs=pl.BlockSpec((None, C, ts), lambda b, s: (b, 0, s)),
        out_shape=jax.ShapeDtypeStruct((B, C, hw), jnp.float32),
        compiler_params=pltpu.CompilerParams(
            dimension_semantics=("parallel", "parallel"),
            vmem_limit_bytes=_VMEM_LIMIT),
    )(t2f, x3, w3t, sc2, sh2, a2, sc3, sh3, a3)


# ---------------------------------------------------------------------------
# tiny per-channel BatchNorm coefficient math (plain XLA between kernels)
# ---------------------------------------------------------------------------
def _bn_coeffs(psum, psumsq, count, gamma, beta):
    red = tuple(range(psum.ndim - 2))
    s = jnp.sum(psum, axis=red)[:, 0]          # (channels,)
    q = jnp.sum(psumsq, axis=red)[:, 0]
    mean = s / count
    # TODO(synk): E[x^2]-E[x]^2 can cancel for very large counts; switch to a
    # centered second pass if tighter parity with PyTorch BN is required.
    var = jnp.maximum(q / count - mean * mean, 0.0)   # biased training-mode var
    scale = gamma * jax.lax.rsqrt(var + _EPS)
    shift = beta - mean * scale
    return scale, shift


# ---------------------------------------------------------------------------
# forward pass
# ---------------------------------------------------------------------------
def deconv_bn_relu_forward(x_nchw, params):
    B, C, H, W = x_nchw.shape
    n = params["w1t"].shape[0]
    out_ch = params["w3t"].shape[0]
    hw = H * W
    x3 = x_nchw.reshape(B, C, hw).astype(jnp.float32)

    isz = jnp.dtype(_INTERMEDIATE_DTYPE).itemsize
    ts1 = _pick_spatial_tile(hw, C * 4 + n * isz)
    ts3 = _pick_spatial_tile(hw, n * isz + 2 * out_ch * 4)
    cnt = float(B * hw)

    # out1 = act1(bn_reduce(deconv_reduce(x)))  -- stats only; BN applied later
    t1, s1, q1 = _call_stage1(x3, params["w1t"], ts1)
    sc1, sh1 = _bn_coeffs(s1, q1, cnt, params["g1"], params["b1"])

    # out2 = act2(bn_conv(deconv_conv(out1)))   -- 3x3, dilation=2, padding=2
    t2, s2, q2 = _call_deconv(t1, params["w2"], sc1[:, None], sh1[:, None],
                              params["a1"], H, W)
    sc2, sh2 = _bn_coeffs(s2, q2, cnt, params["g2"], params["b2"])

    # out3 = act3(bn_expend(deconv_expend(out2)) + x) -- two passes (global BN
    # stats); the expanded pre-BN activation is recomputed, not HBM round-tripped
    s3, q3 = _call_stage3_stats(t2, params["w3t"], sc2[:, None], sh2[:, None],
                                params["a2"], ts3)
    sc3, sh3 = _bn_coeffs(s3, q3, cnt, params["g3"], params["b3"])

    y = _call_stage3_final(t2, x3, params["w3t"], sc2[:, None], sh2[:, None],
                           params["a2"], sc3[:, None], sh3[:, None],
                           params["a3"], ts3)
    return y.reshape(B, C, H, W)


# ---------------------------------------------------------------------------
# deterministic parameter init (shapes from the module's __init__)
# ---------------------------------------------------------------------------
def init_params(key, in_ch, out_ch):
    assert in_ch == out_ch, "residual '+ x' in the module requires in_ch == out_ch"
    n = out_ch // 2
    ks = jax.random.split(key, 9)
    # nn.ConvTranspose2d weight layout is (C_in, C_out, kH, kW)
    wt1 = jax.random.normal(ks[0], (in_ch, n, 1, 1), jnp.float32) / sqrt(in_ch)
    wt2 = jax.random.normal(ks[1], (n, n, 3, 3), jnp.float32) / sqrt(9 * n)
    wt3 = jax.random.normal(ks[2], (n, out_ch, 1, 1), jnp.float32) / sqrt(n)
    # effective regular-conv weight of the stride-1 transposed conv:
    # w2[kh*3+kw, o, c] = wt2[c, o, 2-kh, 2-kw]
    w2 = jnp.transpose(jnp.flip(wt2, axis=(2, 3)), (2, 3, 1, 0)).reshape(9, n, n)
    return {
        "w1t": wt1[:, :, 0, 0].T,      # (n, C_in)   channels-first matmul weight
        "w2": w2,                      # (9, n, n)   per-tap MXU matrices
        "w3t": wt3[:, :, 0, 0].T,      # (C_out, n)
        "g1": 1.0 + 0.1 * jax.random.normal(ks[3], (n,), jnp.float32),
        "b1": 0.1 * jax.random.normal(ks[4], (n,), jnp.float32),
        "g2": 1.0 + 0.1 * jax.random.normal(ks[5], (n,), jnp.float32),
        "b2": 0.1 * jax.random.normal(ks[6], (n,), jnp.float32),
        "g3": 1.0 + 0.1 * jax.random.normal(ks[7], (out_ch,), jnp.float32),
        "b3": 0.1 * jax.random.normal(ks[8], (out_ch,), jnp.float32),
        "a1": jnp.full((1,), 0.25, jnp.float32),   # nn.PReLU() default init
        "a2": jnp.full((1,), 0.25, jnp.float32),
        "a3": jnp.full((1,), 0.25, jnp.float32),
    }


# TODO(synk): BatchNorm running_mean/running_var buffer updates (train-mode side
# effect) are not tracked; they do not affect the forward output computed here.

if __name__ == "__main__":
    key = jax.random.PRNGKey(0)
    kp, kx = jax.random.split(key)
    in_ch = out_ch = 8
    params = init_params(kp, in_ch, out_ch)
    x = jax.random.normal(kx, (2, in_ch, 16, 16), jnp.float32)   # NCHW, like PyTorch
    out = jax.jit(deconv_bn_relu_forward)(x, params)
    jax.block_until_ready(out)
    assert out.shape == x.shape and out.dtype == jnp.float32
    print("KERNEL_OK")
</pallas_src>

<mosaic_0001>
module attributes {stable_mosaic.version = 11 : i64} {
  func.func @_stage1_kernel(%arg0: i32, %arg1: i32, %arg2: memref<1x8x256xf32, #tpu.memory_space<vmem>>, %arg3: memref<4x8xf32, #tpu.memory_space<vmem>>, %arg4: memref<1x4x256xbf16, #tpu.memory_space<vmem>>, %arg5: memref<1x1x4x1xf32, #tpu.memory_space<vmem>>, %arg6: memref<1x1x4x1xf32, #tpu.memory_space<vmem>>) attributes {dimension_semantics = [#tpu.dimension_semantics<parallel>, #tpu.dimension_semantics<parallel>], iteration_bounds = array<i64: 2, 1>, scalar_prefetch = 0 : i64, scratch_operands = 0 : i64, tpu.core_type = #tpu.core_type<tc>, window_params = [{transform_indices = @transform_0, window_bounds = array<i64: 1, 8, 256>}, {pipeline_mode = #tpu.pipeline_mode<synchronous>, transform_indices = @transform_1, window_bounds = array<i64: 4, 8>}, {transform_indices = @transform_2, window_bounds = array<i64: 1, 4, 256>}, {transform_indices = @transform_3, window_bounds = array<i64: 1, 1, 4, 1>}, {transform_indices = @transform_4, window_bounds = array<i64: 1, 1, 4, 1>}]} {
    %c0 = arith.constant 0 : index
    %c0_0 = arith.constant 0 : index
    %0 = vector.load %arg3[%c0, %c0_0] : memref<4x8xf32, #tpu.memory_space<vmem>>, vector<4x8xf32>
    %c0_1 = arith.constant 0 : index
    %c0_2 = arith.constant 0 : index
    %c0_3 = arith.constant 0 : index
    %1 = vector.load %arg2[%c0_1, %c0_2, %c0_3] : memref<1x8x256xf32, #tpu.memory_space<vmem>>, vector<1x8x256xf32>
    %2 = vector.shape_cast %1 : vector<1x8x256xf32> to vector<8x256xf32>
    %cst = arith.constant dense<0.000000e+00> : vector<4x256xf32>
    %3 = tpu.matmul %0, %2, %cst {dimension_numbers = #tpu.dot_dimension_numbers<[1], [0], [0], [1], [0, 0, 1, 1], [], []>} : vector<4x8xf32>, vector<8x256xf32>, vector<4x256xf32> -> vector<4x256xf32>
    %4 = arith.truncf %3 : vector<4x256xf32> to vector<4x256xbf16>
    %c0_4 = arith.constant 0 : index
    %c0_5 = arith.constant 0 : index
    %c0_6 = arith.constant 0 : index
    %5 = vector.load %arg4[%c0_4, %c0_5, %c0_6] : memref<1x4x256xbf16, #tpu.memory_space<vmem>>, vector<1x4x256xbf16>
    %6 = vector.shape_cast %5 : vector<1x4x256xbf16> to vector<4x256xbf16>
    %7 = vector.shape_cast %4 : vector<4x256xbf16> to vector<1x4x256xbf16>
    tpu.vector_store %arg4[%c0_4, %c0_5, %c0_6], %7 {strides = array<i32>} : memref<1x4x256xbf16, #tpu.memory_space<vmem>>, vector<1x4x256xbf16>,
    %8 = arith.extf %4 : vector<4x256xbf16> to vector<4x256xf32>
    %cst_7 = arith.constant dense<0.000000e+00> : vector<4xf32>
    %9 = vector.multi_reduction <add>, %8, %cst_7 [1] : vector<4x256xf32> to vector<4xf32>
    %10 = vector.shape_cast %9 : vector<4xf32> to vector<4x1xf32>
    %c0_8 = arith.constant 0 : index
    %c0_9 = arith.constant 0 : index
    %c0_10 = arith.constant 0 : index
    %c0_11 = arith.constant 0 : index
    %11 = vector.load %arg5[%c0_8, %c0_9, %c0_10, %c0_11] : memref<1x1x4x1xf32, #tpu.memory_space<vmem>>, vector<1x1x4x1xf32>
    %12 = vector.shape_cast %11 : vector<1x1x4x1xf32> to vector<4x1xf32>
    %13 = vector.shape_cast %10 : vector<4x1xf32> to vector<1x1x4x1xf32>
    tpu.vector_store %arg5[%c0_8, %c0_9, %c0_10, %c0_11], %13 {strides = array<i32>} : memref<1x1x4x1xf32, #tpu.memory_space<vmem>>, vector<1x1x4x1xf32>,
    %14 = arith.mulf %8, %8 : vector<4x256xf32>
    %cst_12 = arith.constant dense<0.000000e+00> : vector<4xf32>
    %15 = vector.multi_reduction <add>, %14, %cst_12 [1] : vector<4x256xf32> to vector<4xf32>
    %16 = vector.shape_cast %15 : vector<4xf32> to vector<4x1xf32>
    %c0_13 = arith.constant 0 : index
    %c0_14 = arith.constant 0 : index
    %c0_15 = arith.constant 0 : index
    %c0_16 = arith.constant 0 : index
    %17 = vector.load %arg6[%c0_13, %c0_14, %c0_15, %c0_16] : memref<1x1x4x1xf32, #tpu.memory_space<vmem>>, vector<1x1x4x1xf32>
    %18 = vector.shape_cast %17 : vector<1x1x4x1xf32> to vector<4x1xf32>
    %19 = vector.shape_cast %16 : vector<4x1xf32> to vector<1x1x4x1xf32>
    tpu.vector_store %arg6[%c0_13, %c0_14, %c0_15, %c0_16], %19 {strides = array<i32>} : memref<1x1x4x1xf32, #tpu.memory_space<vmem>>, vector<1x1x4x1xf32>,
    return
  }
  func.func @transform_0(%arg0: i32, %arg1: i32) -> (i32, i32, i32) {
    %c0_i32 = arith.constant 0 : i32
    %c0_i32_0 = arith.constant 0 : i32
    return %arg0, %c0_i32, %arg1 : i32, i32, i32
  }
  func.func @transform_1(%arg0: i32, %arg1: i32) -> (i32, i32) {
    %c0_i32 = arith.constant 0 : i32
    %c0_i32_0 = arith.constant 0 : i32
    %c0_i32_1 = arith.constant 0 : i32
    return %c0_i32, %c0_i32_0 : i32, i32
  }
  func.func @transform_2(%arg0: i32, %arg1: i32) -> (i32, i32, i32) {
    %c0_i32 = arith.constant 0 : i32
    %c0_i32_0 = arith.constant 0 : i32
    return %arg0, %c0_i32, %arg1 : i32, i32, i32
  }
  func.func @transform_3(%arg0: i32, %arg1: i32) -> (i32, i32, i32, i32) {
    %c0_i32 = arith.constant 0 : i32
    %c0_i32_0 = arith.constant 0 : i32
    %c0_i32_1 = arith.constant 0 : i32
    return %arg0, %arg1, %c0_i32, %c0_i32_0 : i32, i32, i32, i32
  }
  func.func @transform_4(%arg0: i32, %arg1: i32) -> (i32, i32, i32, i32) {
    %c0_i32 = arith.constant 0 : i32
    %c0_i32_0 = arith.constant 0 : i32
    %c0_i32_1 = arith.constant 0 : i32
    return %arg0, %arg1, %c0_i32, %c0_i32_0 : i32, i32, i32, i32
  }
}

module attributes {stable_mosaic.version = 11 : i64} {
  func.func @kernel(%arg0: i32, %arg1: memref<1x4x256xbf16, #tpu.memory_space<vmem>>, %arg2: memref<9x4x4xf32, #tpu.memory_space<vmem>>, %arg3: memref<4x1xf32, #tpu.memory_space<vmem>>, %arg4: memref<4x1xf32, #tpu.memory_space<vmem>>, %arg5: memref<1xf32, #tpu.memory_space<smem>>, %arg6: memref<1x4x256xbf16, #tpu.memory_space<vmem>>, %arg7: memref<1x4x1xf32, #tpu.memory_space<vmem>>, %arg8: memref<1x4x1xf32, #tpu.memory_space<vmem>>, %arg9: memref<4x512xf32, #tpu.memory_space<vmem>>) attributes {dimension_semantics = [#tpu.dimension_semantics<parallel>], iteration_bounds = array<i64: 2>, scalar_prefetch = 0 : i64, scratch_operands = 1 : i64, tpu.core_type = #tpu.core_type<tc>, window_params = [{transform_indices = @transform_0, window_bounds = array<i64: 1, 4, 256>}, {pipeline_mode = #tpu.pipeline_mode<synchronous>, transform_indices = @transform_1, window_bounds = array<i64: 9, 4, 4>}, {pipeline_mode = #tpu.pipeline_mode<synchronous>, transform_indices = @transform_2, window_bounds = array<i64: 4, 1>}, {pipeline_mode = #tpu.pipeline_mode<synchronous>, transform_indices = @transform_3, window_bounds = array<i64: 4, 1>}, {transform_indices = @transform_4, window_bounds = array<i64: 1>}, {transform_indices = @transform_5, window_bounds = array<i64: 1, 4, 256>}, {transform_indices = @transform_6, window_bounds = array<i64: 1, 4, 1>}, {transform_indices = @transform_7, window_bounds = array<i64: 1, 4, 1>}]} {
    %c0 = arith.constant 0 : index
    %c0_0 = arith.constant 0 : index
    %c0_1 = arith.constant 0 : index
    %0 = vector.load %arg1[%c0, %c0_0, %c0_1] : memref<1x4x256xbf16, #tpu.memory_space<vmem>>, vector<1x4x256xbf16>
    %1 = vector.shape_cast %0 : vector<1x4x256xbf16> to vector<4x256xbf16>
    %2 = arith.extf %1 : vector<4x256xbf16> to vector<4x256xf32>
    %c0_2 = arith.constant 0 : index
    %c0_3 = arith.constant 0 : index
    %3 = vector.load %arg3[%c0_2, %c0_3] : memref<4x1xf32, #tpu.memory_space<vmem>>, vector<4x1xf32>
    %4 = vector.broadcast %3 : vector<4x1xf32> to vector<4x256xf32>
    %5 = arith.mulf %2, %4 : vector<4x256xf32>
    %c0_4 = arith.constant 0 : index
    %c0_5 = arith.constant 0 : index
    %6 = vector.load %arg4[%c0_4, %c0_5] : memref<4x1xf32, #tpu.memory_space<vmem>>, vector<4x1xf32>
    %7 = vector.broadcast %6 : vector<4x1xf32> to vector<4x256xf32>
    %8 = arith.addf %5, %7 : vector<4x256xf32>
    %cst = arith.constant 0.000000e+00 : f32
    %9 = vector.broadcast %cst : f32 to vector<4x256xf32>
    %10 = arith.cmpf oge, %8, %9 : vector<4x256xf32>
    %c0_6 = arith.constant 0 : index
    %11 = memref.load %arg5[%c0_6] : memref<1xf32, #tpu.memory_space<smem>>
    %12 = vector.broadcast %11 : f32 to vector<4x256xf32>
    %13 = arith.mulf %12, %8 : vector<4x256xf32>
    %14 = arith.select %10, %8, %13 : vector<4x256xi1>, vector<4x256xf32>
    %cst_7 = arith.constant 0.000000e+00 : f32
    %15 = vector.broadcast %cst_7 : f32 to vector<4x128xf32>
    %c0_8 = arith.constant 0 : index
    %c0_9 = arith.constant 0 : index
    %16 = vector.load %arg9[%c0_8, %c0_9] : memref<4x512xf32, #tpu.memory_space<vmem>>, vector<4x128xf32>
    tpu.vector_store %arg9[%c0_8, %c0_9], %15 {strides = array<i32>} : memref<4x512xf32, #tpu.memory_space<vmem>>, vector<4x128xf32>,
    %c0_10 = arith.constant 0 : index
    %c128 = arith.constant 128 : index
    %17 = vector.load %arg9[%c0_10, %c128] : memref<4x512xf32, #tpu.memory_space<vmem>>, vector<4x256xf32>
    tpu.vector_store %arg9[%c0_10, %c128], %14 {strides = array<i32>} : memref<4x512xf32, #tpu.memory_space<vmem>>, vector<4x256xf32>,
    %cst_11 = arith.constant 0.000000e+00 : f32
    %18 = vector.broadcast %cst_11 : f32 to vector<4x128xf32>
    %c0_12 = arith.constant 0 : index
    %c384 = arith.constant 384 : index
    %19 = vector.load %arg9[%c0_12, %c384] : memref<4x512xf32, #tpu.memory_space<vmem>>, vector<4x128xf32>
    tpu.vector_store %arg9[%c0_12, %c384], %18 {strides = array<i32>} : memref<4x512xf32, #tpu.memory_space<vmem>>, vector<4x128xf32>,
    %20 = tpu.iota {dimensions = array<i32: 1>} : vector<1x256xi32>
    %c16_i32 = arith.constant 16 : i32
    %c0_i32 = arith.constant 0 : i32
    %21 = arith.cmpi eq, %c16_i32, %c0_i32 : i32
    %c1_i32 = arith.constant 1 : i32
    %22 = arith.select %21, %c1_i32, %c16_i32 : i32
    %23 = vector.broadcast %22 : i32 to vector<1x256xi32>
    %24 = arith.remsi %20, %23 : vector<1x256xi32>
    %c0_i32_13 = arith.constant 0 : i32
    %25 = vector.broadcast %c0_i32_13 : i32 to vector<1x256xi32>
    %26 = arith.cmpi ne, %24, %25 : vector<1x256xi32>
    %c0_i32_14 = arith.constant 0 : i32
    %27 = vector.broadcast %c0_i32_14 : i32 to vector<1x256xi32>
    %28 = arith.cmpi slt, %24, %27 : vector<1x256xi32>
    %c0_i32_15 = arith.constant 0 : i32
    %29 = arith.cmpi slt, %22, %c0_i32_15 : i32
    %30 = vector.broadcast %29 : i1 to vector<1x256xi1>
    %31 = vector.broadcast %30 : vector<1x256xi1> to vector<1x256xi1>
    %32 = arith.xori %28, %31 : vector<1x256xi1>
    %33 = arith.andi %32, %26 : vector<1x256xi1>
    %34 = vector.broadcast %22 : i32 to vector<1x256xi32>
    %35 = arith.addi %24, %34 : vector<1x256xi32>
    %36 = arith.select %33, %35, %24 : vector<1x256xi1>, vector<1x256xi32>
    %c2_i32 = arith.constant 2 : i32
    %37 = vector.broadcast %c2_i32 : i32 to vector<1x256xi32>
    %38 = arith.cmpi sge, %36, %37 : vector<1x256xi32>
    %39 = arith.extui %38 : vector<1x256xi1> to vector<1x256xi32>
    %40 = arith.sitofp %39 : vector<1x256xi32> to vector<1x256xf32>
    %c14_i32 = arith.constant 14 : i32
    %41 = vector.broadcast %c14_i32 : i32 to vector<1x256xi32>
    %42 = arith.cmpi slt, %36, %41 : vector<1x256xi32>
    %43 = arith.extui %42 : vector<1x256xi1> to vector<1x256xi32>
    %44 = arith.sitofp %43 : vector<1x256xi32> to vector<1x256xf32>
    %cst_16 = arith.constant 0.000000e+00 : f32
    %45 = vector.broadcast %cst_16 : f32 to vector<4x1xf32>
    %cst_17 = arith.constant 0.000000e+00 : f32
    %46 = vector.broadcast %cst_17 : f32 to vector<4x1xf32>
    %cst_18 = arith.constant 0.000000e+00 : f32
    %47 = vector.broadcast %cst_18 : f32 to vector<4x256xf32>
    %c0_19 = arith.constant 0 : index
    %c0_20 = arith.constant 0 : index
    %48 = vector.load %arg9[%c0_19, %c0_20] : memref<4x512xf32, #tpu.memory_space<vmem>>, vector<4x384xf32>
    %49 = vector.extract_strided_slice %48 {offsets = [0, 94], sizes = [4, 256], strides = [1, 1]} : vector<4x384xf32> to vector<4x256xf32>
    %50 = vector.broadcast %40 : vector<1x256xf32> to vector<4x256xf32>
    %51 = arith.mulf %49, %50 : vector<4x256xf32>
    %c0_21 = arith.constant 0 : index
    %c0_22 = arith.constant 0 : index
    %c0_23 = arith.constant 0 : index
    %52 = vector.load %arg2[%c0_21, %c0_22, %c0_23] : memref<9x4x4xf32, #tpu.memory_space<vmem>>, vector<1x4x4xf32>
    %53 = vector.shape_cast %52 : vector<1x4x4xf32> to vector<4x4xf32>
    %cst_24 = arith.constant dense<0.000000e+00> : vector<4x256xf32>
    %54 = tpu.matmul %53, %51, %cst_24 {dimension_numbers = #tpu.dot_dimension_numbers<[1], [0], [0], [1], [0, 0, 1, 1], [], []>} : vector<4x4xf32>, vector<4x256xf32>, vector<4x256xf32> -> vector<4x256xf32>
    %55 = arith.addf %47, %54 : vector<4x256xf32>
    %c0_25 = arith.constant 0 : index
    %c0_26 = arith.constant 0 : index
    %56 = vector.load %arg9[%c0_25, %c0_26] : memref<4x512xf32, #tpu.memory_space<vmem>>, vector<4x384xf32>
    %57 = vector.extract_strided_slice %56 {offsets = [0, 96], sizes = [4, 256], strides = [1, 1]} : vector<4x384xf32> to vector<4x256xf32>
    %c1 = arith.constant 1 : index
    %c0_27 = arith.constant 0 : index
    %c0_28 = arith.constant 0 : index
    %58 = vector.load %arg2[%c1, %c0_27, %c0_28] : memref<9x4x4xf32, #tpu.memory_space<vmem>>, vector<1x4x4xf32>
    %59 = vector.shape_cast %58 : vector<1x4x4xf32> to vector<4x4xf32>
    %cst_29 = arith.constant dense<0.000000e+00> : vector<4x256xf32>
    %60 = tpu.matmul %59, %57, %cst_29 {dimension_numbers = #tpu.dot_dimension_numbers<[1], [0], [0], [1], [0, 0, 1, 1], [], []>} : vector<4x4xf32>, vector<4x256xf32>, vector<4x256xf32> -> vector<4x256xf32>
    %61 = arith.addf %55, %60 : vector<4x256xf32>
    %c0_30 = arith.constant 0 : index
    %c0_31 = arith.constant 0 : index
    %62 = vector.load %arg9[%c0_30, %c0_31] : memref<4x512xf32, #tpu.memory_space<vmem>>, vector<4x384xf32>
    %63 = vector.extract_strided_slice %62 {offsets = [0, 98], sizes = [4, 256], strides = [1, 1]} : vector<4x384xf32> to vector<4x256xf32>
    %64 = vector.broadcast %44 : vector<1x256xf32> to vector<4x256xf32>
    %65 = arith.mulf %63, %64 : vector<4x256xf32>
    %c2 = arith.constant 2 : index
    %c0_32 = arith.constant 0 : index
    %c0_33 = arith.constant 0 : index
    %66 = vector.load %arg2[%c2, %c0_32, %c0_33] : memref<9x4x4xf32, #tpu.memory_space<vmem>>, vector<1x4x4xf32>
    %67 = vector.shape_cast %66 : vector<1x4x4xf32> to vector<4x4xf32>
    %cst_34 = arith.constant dense<0.000000e+00> : vector<4x256xf32>
    %68 = tpu.matmul %67, %65, %cst_34 {dimension_numbers = #tpu.dot_dimension_numbers<[1], [0], [0], [1], [0, 0, 1, 1], [], []>} : vector<4x4xf32>, vector<4x256xf32>, vector<4x256xf32> -> vector<4x256xf32>
    %69 = arith.addf %61, %68 : vector<4x256xf32>
    %c0_35 = arith.constant 0 : index
    %c0_36 = arith.constant 0 : index
    %70 = vector.load %arg9[%c0_35, %c0_36] : memref<4x512xf32, #tpu.memory_space<vmem>>, vector<4x384xf32>
    %71 = vector.extract_strided_slice %70 {offsets = [0, 126], sizes = [4, 256], strides = [1, 1]} : vector<4x384xf32> to vector<4x256xf32>
    %72 = vector.broadcast %40 : vector<1x256xf32> to vector<4x256xf32>
    %73 = arith.mulf %71, %72 : vector<4x256xf32>
    %c3 = arith.constant 3 : index
    %c0_37 = arith.constant 0 : index
    %c0_38 = arith.constant 0 : index
    %74 = vector.load %arg2[%c3, %c0_37, %c0_38] : memref<9x4x4xf32, #tpu.memory_space<vmem>>, vector<1x4x4xf32>
    %75 = vector.shape_cast %74 : vector<1x4x4xf32> to vector<4x4xf32>
    %cst_39 = arith.constant dense<0.000000e+00> : vector<4x256xf32>
    %76 = tpu.matmul %75, %73, %cst_39 {dimension_numbers = #tpu.dot_dimension_numbers<[1], [0], [0], [1], [0, 0, 1, 1], [], []>} : vector<4x4xf32>, vector<4x256xf32>, vector<4x256xf32> -> vector<4x256xf32>
    %77 = arith.addf %69, %76 : vector<4x256xf32>
    %c0_40 = arith.constant 0 : index
    %c128_41 = arith.constant 128 : index
    %78 = vector.load %arg9[%c0_40, %c128_41] : memref<4x512xf32, #tpu.memory_space<vmem>>, vector<4x256xf32>
    %c4 = arith.constant 4 : index
    %c0_42 = arith.constant 0 : index
    %c0_43 = arith.constant 0 : index
    %79 = vector.load %arg2[%c4, %c0_42, %c0_43] : memref<9x4x4xf32, #tpu.memory_space<vmem>>, vector<1x4x4xf32>
    %80 = vector.shape_cast %79 : vector<1x4x4xf32> to vector<4x4xf32>
    %cst_44 = arith.constant dense<0.000000e+00> : vector<4x256xf32>
    %81 = tpu.matmul %80, %78, %cst_44 {dimension_numbers = #tpu.dot_dimension_numbers<[1], [0], [0], [1], [0, 0, 1, 1], [], []>} : vector<4x4xf32>, vector<4x256xf32>, vector<4x256xf32> -> vector<4x256xf32>
    %82 = arith.addf %77, %81 : vector<4x256xf32>
    %c0_45 = arith.constant 0 : index
    %c128_46 = arith.constant 128 : index
    %83 = vector.load %arg9[%c0_45, %c128_46] : memref<4x512xf32, #tpu.memory_space<vmem>>, vector<4x384xf32>
    %84 = vector.extract_strided_slice %83 {offsets = [0, 2], sizes = [4, 256], strides = [1, 1]} : vector<4x384xf32> to vector<4x256xf32>
    %85 = vector.broadcast %44 : vector<1x256xf32> to vector<4x256xf32>
    %86 = arith.mulf %84, %85 : vector<4x256xf32>
    %c5 = arith.constant 5 : index
    %c0_47 = arith.constant 0 : index
    %c0_48 = arith.constant 0 : index
    %87 = vector.load %arg2[%c5, %c0_47, %c0_48] : memref<9x4x4xf32, #tpu.memory_space<vmem>>, vector<1x4x4xf32>
    %88 = vector.shape_cast %87 : vector<1x4x4xf32> to vector<4x4xf32>
    %cst_49 = arith.constant dense<0.000000e+00> : vector<4x256xf32>
    %89 = tpu.matmul %88, %86, %cst_49 {dimension_numbers = #tpu.dot_dimension_numbers<[1], [0], [0], [1], [0, 0, 1, 1], [], []>} : vector<4x4xf32>, vector<4x256xf32>, vector<4x256xf32> -> vector<4x256xf32>
    %90 = arith.addf %82, %89 : vector<4x256xf32>
    %c0_50 = arith.constant 0 : index
    %c128_51 = arith.constant 128 : index
    %91 = vector.load %arg9[%c0_50, %c128_51] : memref<4x512xf32, #tpu.memory_space<vmem>>, vector<4x384xf32>
    %92 = vector.extract_strided_slice %91 {offsets = [0, 30], sizes = [4, 256], strides = [1, 1]} : vector<4x384xf32> to vector<4x256xf32>
    %93 = vector.broadcast %40 : vector<1x256xf32> to vector<4x256xf32>
    %94 = arith.mulf %92, %93 : vector<4x256xf32>
    %c6 = arith.constant 6 : index
    %c0_52 = arith.constant 0 : index
    %c0_53 = arith.constant 0 : index
    %95 = vector.load %arg2[%c6, %c0_52, %c0_53] : memref<9x4x4xf32, #tpu.memory_space<vmem>>, vector<1x4x4xf32>
    %96 = vector.shape_cast %95 : vector<1x4x4xf32> to vector<4x4xf32>
    %cst_54 = arith.constant dense<0.000000e+00> : vector<4x256xf32>
    %97 = tpu.matmul %96, %94, %cst_54 {dimension_numbers = #tpu.dot_dimension_numbers<[1], [0], [0], [1], [0, 0, 1, 1], [], []>} : vector<4x4xf32>, vector<4x256xf32>, vector<4x256xf32> -> vector<4x256xf32>
    %98 = arith.addf %90, %97 : vector<4x256xf32>
    %c0_55 = arith.constant 0 : index
    %c128_56 = arith.constant 128 : index
    %99 = vector.load %arg9[%c0_55, %c128_56] : memref<4x512xf32, #tpu.memory_space<vmem>>, vector<4x384xf32>
    %100 = vector.extract_strided_slice %99 {offsets = [0, 32], sizes = [4, 256], strides = [1, 1]} : vector<4x384xf32> to vector<4x256xf32>
    %c7 = arith.constant 7 : index
    %c0_57 = arith.constant 0 : index
    %c0_58 = arith.constant 0 : index
    %101 = vector.load %arg2[%c7, %c0_57, %c0_58] : memref<9x4x4xf32, #tpu.memory_space<vmem>>, vector<1x4x4xf32>
    %102 = vector.shape_cast %101 : vector<1x4x4xf32> to vector<4x4xf32>
    %cst_59 = arith.constant dense<0.000000e+00> : vector<4x256xf32>
    %103 = tpu.matmul %102, %100, %cst_59 {dimension_numbers = #tpu.dot_dimension_numbers<[1], [0], [0], [1], [0, 0, 1, 1], [], []>} : vector<4x4xf32>, vector<4x256xf32>, vector<4x256xf32> -> vector<4x256xf32>
    %104 = arith.addf %98, %103 : vector<4x256xf32>
    %c0_60 = arith.constant 0 : index
    %c128_61 = arith.constant 128 : index
    %105 = vector.load %arg9[%c0_60, %c128_61] : memref<4x512xf32, #tpu.memory_space<vmem>>, vector<4x384xf32>
    %106 = vector.extract_strided_slice %105 {offsets = [0, 34], sizes = [4, 256], strides = [1, 1]} : vector<4x384xf32> to vector<4x256xf32>
    %107 = vector.broadcast %44 : vector<1x256xf32> to vector<4x256xf32>
    %108 = arith.mulf %106, %107 : vector<4x256xf32>
    %c8 = arith.constant 8 : index
    %c0_62 = arith.constant 0 : index
    %c0_63 = arith.constant 0 : index
    %109 = vector.load %arg2[%c8, %c0_62, %c0_63] : memref<9x4x4xf32, #tpu.memory_space<vmem>>, vector<1x4x4xf32>
    %110 = vector.shape_cast %109 : vector<1x4x4xf32> to vector<4x4xf32>
    %cst_64 = arith.constant dense<0.000000e+00> : vector<4x256xf32>
    %111 = tpu.matmul %110, %108, %cst_64 {dimension_numbers = #tpu.dot_dimension_numbers<[1], [0], [0], [1], [0, 0, 1, 1], [], []>} : vector<4x4xf32>, vector<4x256xf32>, vector<4x256xf32> -> vector<4x256xf32>
    %112 = arith.addf %104, %111 : vector<4x256xf32>
    %113 = arith.truncf %112 : vector<4x256xf32> to vector<4x256xbf16>
    %c0_65 = arith.constant 0 : index
    %c0_66 = arith.constant 0 : index
    %c0_67 = arith.constant 0 : index
    %114 = vector.load %arg6[%c0_65, %c0_66, %c0_67] : memref<1x4x256xbf16, #tpu.memory_space<vmem>>, vector<1x4x256xbf16>
    %115 = vector.shape_cast %114 : vector<1x4x256xbf16> to vector<4x256xbf16>
    %116 = vector.shape_cast %113 : vector<4x256xbf16> to vector<1x4x256xbf16>
    tpu.vector_store %arg6[%c0_65, %c0_66, %c0_67], %116 {strides = array<i32>} : memref<1x4x256xbf16, #tpu.memory_space<vmem>>, vector<1x4x256xbf16>,
    %117 = arith.extf %113 : vector<4x256xbf16> to vector<4x256xf32>
    %cst_68 = arith.constant dense<0.000000e+00> : vector<4xf32>
    %118 = vector.multi_reduction <add>, %117, %cst_68 [1] : vector<4x256xf32> to vector<4xf32>
    %119 = vector.shape_cast %118 : vector<4xf32> to vector<4x1xf32>
    %120 = arith.addf %45, %119 : vector<4x1xf32>
    %121 = arith.mulf %117, %117 : vector<4x256xf32>
    %cst_69 = arith.constant dense<0.000000e+00> : vector<4xf32>
    %122 = vector.multi_reduction <add>, %121, %cst_69 [1] : vector<4x256xf32> to vector<4xf32>
    %123 = vector.shape_cast %122 : vector<4xf32> to vector<4x1xf32>
    %124 = arith.addf %46, %123 : vector<4x1xf32>
    %c0_70 = arith.constant 0 : index
    %c0_71 = arith.constant 0 : index
    %c0_72 = arith.constant 0 : index
    %125 = vector.load %arg7[%c0_70, %c0_71, %c0_72] : memref<1x4x1xf32, #tpu.memory_space<vmem>>, vector<1x4x1xf32>
    %126 = vector.shape_cast %125 : vector<1x4x1xf32> to vector<4x1xf32>
    %127 = vector.shape_cast %120 : vector<4x1xf32> to vector<1x4x1xf32>
    tpu.vector_store %arg7[%c0_70, %c0_71, %c0_72], %127 {strides = array<i32>} : memref<1x4x1xf32, #tpu.memory_space<vmem>>, vector<1x4x1xf32>,
    %c0_73 = arith.constant 0 : index
    %c0_74 = arith.constant 0 : index
    %c0_75 = arith.constant 0 : index
    %128 = vector.load %arg8[%c0_73, %c0_74, %c0_75] : memref<1x4x1xf32, #tpu.memory_space<vmem>>, vector<1x4x1xf32>
    %129 = vector.shape_cast %128 : vector<1x4x1xf32> to vector<4x1xf32>
    %130 = vector.shape_cast %124 : vector<4x1xf32> to vector<1x4x1xf32>
    tpu.vector_store %arg8[%c0_73, %c0_74, %c0_75], %130 {strides = array<i32>} : memref<1x4x1xf32, #tpu.memory_space<vmem>>, vector<1x4x1xf32>,
    return
  }
  func.func @transform_0(%arg0: i32) -> (i32, i32, i32) {
    %c0_i32 = arith.constant 0 : i32
    %c0_i32_0 = arith.constant 0 : i32
    %c0_i32_1 = arith.constant 0 : i32
    return %arg0, %c0_i32, %c0_i32_0 : i32, i32, i32
  }
  func.func @transform_1(%arg0: i32) -> (i32, i32, i32) {
    %c0_i32 = arith.constant 0 : i32
    %c0_i32_0 = arith.constant 0 : i32
    %c0_i32_1 = arith.constant 0 : i32
    %c0_i32_2 = arith.constant 0 : i32
    return %c0_i32, %c0_i32_0, %c0_i32_1 : i32, i32, i32
  }
  func.func @transform_2(%arg0: i32) -> (i32, i32) {
    %c0_i32 = arith.constant 0 : i32
    %c0_i32_0 = arith.constant 0 : i32
    %c0_i32_1 = arith.constant 0 : i32
    return %c0_i32, %c0_i32_0 : i32, i32
  }
  func.func @transform_3(%arg0: i32) -> (i32, i32) {
    %c0_i32 = arith.constant 0 : i32
    %c0_i32_0 = arith.constant 0 : i32
    %c0_i32_1 = arith.constant 0 : i32
    return %c0_i32, %c0_i32_0 : i32, i32
  }
  func.func @transform_4(%arg0: i32) -> i32 {
    %c0_i32 = arith.constant 0 : i32
    %c0_i32_0 = arith.constant 0 : i32
    return %c0_i32 : i32
  }
  func.func @transform_5(%arg0: i32) -> (i32, i32, i32) {
    %c0_i32 = arith.constant 0 : i32
    %c0_i32_0 = arith.constant 0 : i32
    %c0_i32_1 = arith.constant 0 : i32
    return %arg0, %c0_i32, %c0_i32_0 : i32, i32, i32
  }
  func.func @transform_6(%arg0: i32) -> (i32, i32, i32) {
    %c0_i32 = arith.constant 0 : i32
    %c0_i32_0 = arith.constant 0 : i32
    %c0_i32_1 = arith.constant 0 : i32
    return %arg0, %c0_i32, %c0_i32_0 : i32, i32, i32
  }
  func.func @transform_7(%arg0: i32) -> (i32, i32, i32) {
    %c0_i32 = arith.constant 0 : i32
    %c0_i32_0 = arith.constant 0 : i32
    %c0_i32_1 = arith.constant 0 : i32
    return %arg0, %c0_i32, %c0_i32_0 : i32, i32, i32
  }
}

module attributes {stable_mosaic.version = 11 : i64} {
  func.func @_stage3_stats_kernel(%arg0: i32, %arg1: i32, %arg2: memref<1x4x256xbf16, #tpu.memory_space<vmem>>, %arg3: memref<8x4xf32, #tpu.memory_space<vmem>>, %arg4: memref<4x1xf32, #tpu.memory_space<vmem>>, %arg5: memref<4x1xf32, #tpu.memory_space<vmem>>, %arg6: memref<1xf32, #tpu.memory_space<smem>>, %arg7: memref<1x1x8x1xf32, #tpu.memory_space<vmem>>, %arg8: memref<1x1x8x1xf32, #tpu.memory_space<vmem>>) attributes {dimension_semantics = [#tpu.dimension_semantics<parallel>, #tpu.dimension_semantics<parallel>], iteration_bounds = array<i64: 2, 1>, scalar_prefetch = 0 : i64, scratch_operands = 0 : i64, tpu.core_type = #tpu.core_type<tc>, window_params = [{transform_indices = @transform_0, window_bounds = array<i64: 1, 4, 256>}, {pipeline_mode = #tpu.pipeline_mode<synchronous>, transform_indices = @transform_1, window_bounds = array<i64: 8, 4>}, {pipeline_mode = #tpu.pipeline_mode<synchronous>, transform_indices = @transform_2, window_bounds = array<i64: 4, 1>}, {pipeline_mode = #tpu.pipeline_mode<synchronous>, transform_indices = @transform_3, window_bounds = array<i64: 4, 1>}, {transform_indices = @transform_4, window_bounds = array<i64: 1>}, {transform_indices = @transform_5, window_bounds = array<i64: 1, 1, 8, 1>}, {transform_indices = @transform_6, window_bounds = array<i64: 1, 1, 8, 1>}]} {
    %c0 = arith.constant 0 : index
    %c0_0 = arith.constant 0 : index
    %c0_1 = arith.constant 0 : index
    %0 = vector.load %arg2[%c0, %c0_0, %c0_1] : memref<1x4x256xbf16, #tpu.memory_space<vmem>>, vector<1x4x256xbf16>
    %1 = vector.shape_cast %0 : vector<1x4x256xbf16> to vector<4x256xbf16>
    %2 = arith.extf %1 : vector<4x256xbf16> to vector<4x256xf32>
    %c0_2 = arith.constant 0 : index
    %c0_3 = arith.constant 0 : index
    %3 = vector.load %arg4[%c0_2, %c0_3] : memref<4x1xf32, #tpu.memory_space<vmem>>, vector<4x1xf32>
    %4 = vector.broadcast %3 : vector<4x1xf32> to vector<4x256xf32>
    %5 = arith.mulf %2, %4 : vector<4x256xf32>
    %c0_4 = arith.constant 0 : index
    %c0_5 = arith.constant 0 : index
    %6 = vector.load %arg5[%c0_4, %c0_5] : memref<4x1xf32, #tpu.memory_space<vmem>>, vector<4x1xf32>
    %7 = vector.broadcast %6 : vector<4x1xf32> to vector<4x256xf32>
    %8 = arith.addf %5, %7 : vector<4x256xf32>
    %cst = arith.constant 0.000000e+00 : f32
    %9 = vector.broadcast %cst : f32 to vector<4x256xf32>
    %10 = arith.cmpf oge, %8, %9 : vector<4x256xf32>
    %c0_6 = arith.constant 0 : index
    %11 = memref.load %arg6[%c0_6] : memref<1xf32, #tpu.memory_space<smem>>
    %12 = vector.broadcast %11 : f32 to vector<4x256xf32>
    %13 = arith.mulf %12, %8 : vector<4x256xf32>
    %14 = arith.select %10, %8, %13 : vector<4x256xi1>, vector<4x256xf32>
    %c0_7 = arith.constant 0 : index
    %c0_8 = arith.constant 0 : index
    %15 = vector.load %arg3[%c0_7, %c0_8] : memref<8x4xf32, #tpu.memory_space<vmem>>, vector<8x4xf32>
    %cst_9 = arith.constant dense<0.000000e+00> : vector<8x256xf32>
    %16 = tpu.matmul %15, %14, %cst_9 {dimension_numbers = #tpu.dot_dimension_numbers<[1], [0], [0], [1], [0, 0, 1, 1], [], []>} : vector<8x4xf32>, vector<4x256xf32>, vector<8x256xf32> -> vector<8x256xf32>
    %cst_10 = arith.constant dense<0.000000e+00> : vector<8xf32>
    %17 = vector.multi_reduction <add>, %16, %cst_10 [1] : vector<8x256xf32> to vector<8xf32>
    %18 = vector.shape_cast %17 : vector<8xf32> to vector<8x1xf32>
    %c0_11 = arith.constant 0 : index
    %c0_12 = arith.constant 0 : index
    %c0_13 = arith.constant 0 : index
    %c0_14 = arith.constant 0 : index
    %19 = vector.load %arg7[%c0_11, %c0_12, %c0_13, %c0_14] : memref<1x1x8x1xf32, #tpu.memory_space<vmem>>, vector<1x1x8x1xf32>
    %20 = vector.shape_cast %19 : vector<1x1x8x1xf32> to vector<8x1xf32>
    %21 = vector.shape_cast %18 : vector<8x1xf32> to vector<1x1x8x1xf32>
    tpu.vector_store %arg7[%c0_11, %c0_12, %c0_13, %c0_14], %21 {strides = array<i32>} : memref<1x1x8x1xf32, #tpu.memory_space<vmem>>, vector<1x1x8x1xf32>,
    %22 = arith.mulf %16, %16 : vector<8x256xf32>
    %cst_15 = arith.constant dense<0.000000e+00> : vector<8xf32>
    %23 = vector.multi_reduction <add>, %22, %cst_15 [1] : vector<8x256xf32> to vector<8xf32>
    %24 = vector.shape_cast %23 : vector<8xf32> to vector<8x1xf32>
    %c0_16 = arith.constant 0 : index
    %c0_17 = arith.constant 0 : index
    %c0_18 = arith.constant 0 : index
    %c0_19 = arith.constant 0 : index
    %25 = vector.load %arg8[%c0_16, %c0_17, %c0_18, %c0_19] : memref<1x1x8x1xf32, #tpu.memory_space<vmem>>, vector<1x1x8x1xf32>
    %26 = vector.shape_cast %25 : vector<1x1x8x1xf32> to vector<8x1xf32>
    %27 = vector.shape_cast %24 : vector<8x1xf32> to vector<1x1x8x1xf32>
    tpu.vector_store %arg8[%c0_16, %c0_17, %c0_18, %c0_19], %27 {strides = array<i32>} : memref<1x1x8x1xf32, #tpu.memory_space<vmem>>, vector<1x1x8x1xf32>,
    return
  }
  func.func @transform_0(%arg0: i32, %arg1: i32) -> (i32, i32, i32) {
    %c0_i32 = arith.constant 0 : i32
    %c0_i32_0 = arith.constant 0 : i32
    return %arg0, %c0_i32, %arg1 : i32, i32, i32
  }
  func.func @transform_1(%arg0: i32, %arg1: i32) -> (i32, i32) {
    %c0_i32 = arith.constant 0 : i32
    %c0_i32_0 = arith.constant 0 : i32
    %c0_i32_1 = arith.constant 0 : i32
    return %c0_i32, %c0_i32_0 : i32, i32
  }
  func.func @transform_2(%arg0: i32, %arg1: i32) -> (i32, i32) {
    %c0_i32 = arith.constant 0 : i32
    %c0_i32_0 = arith.constant 0 : i32
    %c0_i32_1 = arith.constant 0 : i32
    return %c0_i32, %c0_i32_0 : i32, i32
  }
  func.func @transform_3(%arg0: i32, %arg1: i32) -> (i32, i32) {
    %c0_i32 = arith.constant 0 : i32
    %c0_i32_0 = arith.constant 0 : i32
    %c0_i32_1 = arith.constant 0 : i32
    return %c0_i32, %c0_i32_0 : i32, i32
  }
  func.func @transform_4(%arg0: i32, %arg1: i32) -> i32 {
    %c0_i32 = arith.constant 0 : i32
    %c0_i32_0 = arith.constant 0 : i32
    return %c0_i32 : i32
  }
  func.func @transform_5(%arg0: i32, %arg1: i32) -> (i32, i32, i32, i32) {
    %c0_i32 = arith.constant 0 : i32
    %c0_i32_0 = arith.constant 0 : i32
    %c0_i32_1 = arith.constant 0 : i32
    return %arg0, %arg1, %c0_i32, %c0_i32_0 : i32, i32, i32, i32
  }
  func.func @transform_6(%arg0: i32, %arg1: i32) -> (i32, i32, i32, i32) {
    %c0_i32 = arith.constant 0 : i32
    %c0_i32_0 = arith.constant 0 : i32
    %c0_i32_1 = arith.constant 0 : i32
    return %arg0, %arg1, %c0_i32, %c0_i32_0 : i32, i32, i32, i32
  }
}

module attributes {stable_mosaic.version = 11 : i64} {
  func.func @_stage3_final_kernel(%arg0: i32, %arg1: i32, %arg2: memref<1x4x256xbf16, #tpu.memory_space<vmem>>, %arg3: memref<1x8x256xf32, #tpu.memory_space<vmem>>, %arg4: memref<8x4xf32, #tpu.memory_space<vmem>>, %arg5: memref<4x1xf32, #tpu.memory_space<vmem>>, %arg6: memref<4x1xf32, #tpu.memory_space<vmem>>, %arg7: memref<1xf32, #tpu.memory_space<smem>>, %arg8: memref<8x1xf32, #tpu.memory_space<vmem>>, %arg9: memref<8x1xf32, #tpu.memory_space<vmem>>, %arg10: memref<1xf32, #tpu.memory_space<smem>>, %arg11: memref<1x8x256xf32, #tpu.memory_space<vmem>>) attributes {dimension_semantics = [#tpu.dimension_semantics<parallel>, #tpu.dimension_semantics<parallel>], iteration_bounds = array<i64: 2, 1>, scalar_prefetch = 0 : i64, scratch_operands = 0 : i64, tpu.core_type = #tpu.core_type<tc>, window_params = [{transform_indices = @transform_0, window_bounds = array<i64: 1, 4, 256>}, {transform_indices = @transform_1, window_bounds = array<i64: 1, 8, 256>}, {pipeline_mode = #tpu.pipeline_mode<synchronous>, transform_indices = @transform_2, window_bounds = array<i64: 8, 4>}, {pipeline_mode = #tpu.pipeline_mode<synchronous>, transform_indices = @transform_3, window_bounds = array<i64: 4, 1>}, {pipeline_mode = #tpu.pipeline_mode<synchronous>, transform_indices = @transform_4, window_bounds = array<i64: 4, 1>}, {transform_indices = @transform_5, window_bounds = array<i64: 1>}, {pipeline_mode = #tpu.pipeline_mode<synchronous>, transform_indices = @transform_6, window_bounds = array<i64: 8, 1>}, {pipeline_mode = #tpu.pipeline_mode<synchronous>, transform_indices = @transform_7, window_bounds = array<i64: 8, 1>}, {transform_indices = @transform_8, window_bounds = array<i64: 1>}, {transform_indices = @transform_9, window_bounds = array<i64: 1, 8, 256>}]} {
    %c0 = arith.constant 0 : index
    %c0_0 = arith.constant 0 : index
    %c0_1 = arith.constant 0 : index
    %0 = vector.load %arg2[%c0, %c0_0, %c0_1] : memref<1x4x256xbf16, #tpu.memory_space<vmem>>, vector<1x4x256xbf16>
    %1 = vector.shape_cast %0 : vector<1x4x256xbf16> to vector<4x256xbf16>
    %2 = arith.extf %1 : vector<4x256xbf16> to vector<4x256xf32>
    %c0_2 = arith.constant 0 : index
    %c0_3 = arith.constant 0 : index
    %3 = vector.load %arg5[%c0_2, %c0_3] : memref<4x1xf32, #tpu.memory_space<vmem>>, vector<4x1xf32>
    %4 = vector.broadcast %3 : vector<4x1xf32> to vector<4x256xf32>
    %5 = arith.mulf %2, %4 : vector<4x256xf32>
    %c0_4 = arith.constant 0 : index
    %c0_5 = arith.constant 0 : index
    %6 = vector.load %arg6[%c0_4, %c0_5] : memref<4x1xf32, #tpu.memory_space<vmem>>, vector<4x1xf32>
    %7 = vector.broadcast %6 : vector<4x1xf32> to vector<4x256xf32>
    %8 = arith.addf %5, %7 : vector<4x256xf32>
    %cst = arith.constant 0.000000e+00 : f32
    %9 = vector.broadcast %cst : f32 to vector<4x256xf32>
    %10 = arith.cmpf oge, %8, %9 : vector<4x256xf32>
    %c0_6 = arith.constant 0 : index
    %11 = memref.load %arg7[%c0_6] : memref<1xf32, #tpu.memory_space<smem>>
    %12 = vector.broadcast %11 : f32 to vector<4x256xf32>
    %13 = arith.mulf %12, %8 : vector<4x256xf32>
    %14 = arith.select %10, %8, %13 : vector<4x256xi1>, vector<4x256xf32>
    %c0_7 = arith.constant 0 : index
    %c0_8 = arith.constant 0 : index
    %15 = vector.load %arg4[%c0_7, %c0_8] : memref<8x4xf32, #tpu.memory_space<vmem>>, vector<8x4xf32>
    %cst_9 = arith.constant dense<0.000000e+00> : vector<8x256xf32>
    %16 = tpu.matmul %15, %14, %cst_9 {dimension_numbers = #tpu.dot_dimension_numbers<[1], [0], [0], [1], [0, 0, 1, 1], [], []>} : vector<8x4xf32>, vector<4x256xf32>, vector<8x256xf32> -> vector<8x256xf32>
    %c0_10 = arith.constant 0 : index
    %c0_11 = arith.constant 0 : index
    %17 = vector.load %arg8[%c0_10, %c0_11] : memref<8x1xf32, #tpu.memory_space<vmem>>, vector<8x1xf32>
    %18 = vector.broadcast %17 : vector<8x1xf32> to vector<8x256xf32>
    %19 = arith.mulf %16, %18 : vector<8x256xf32>
    %c0_12 = arith.constant 0 : index
    %c0_13 = arith.constant 0 : index
    %20 = vector.load %arg9[%c0_12, %c0_13] : memref<8x1xf32, #tpu.memory_space<vmem>>, vector<8x1xf32>
    %21 = vector.broadcast %20 : vector<8x1xf32> to vector<8x256xf32>
    %22 = arith.addf %19, %21 : vector<8x256xf32>
    %c0_14 = arith.constant 0 : index
    %c0_15 = arith.constant 0 : index
    %c0_16 = arith.constant 0 : index
    %23 = vector.load %arg3[%c0_14, %c0_15, %c0_16] : memref<1x8x256xf32, #tpu.memory_space<vmem>>, vector<1x8x256xf32>
    %24 = vector.shape_cast %23 : vector<1x8x256xf32> to vector<8x256xf32>
    %25 = arith.addf %22, %24 : vector<8x256xf32>
    %cst_17 = arith.constant 0.000000e+00 : f32
    %26 = vector.broadcast %cst_17 : f32 to vector<8x256xf32>
    %27 = arith.cmpf oge, %25, %26 : vector<8x256xf32>
    %c0_18 = arith.constant 0 : index
    %28 = memref.load %arg10[%c0_18] : memref<1xf32, #tpu.memory_space<smem>>
    %29 = vector.broadcast %28 : f32 to vector<8x256xf32>
    %30 = arith.mulf %29, %25 : vector<8x256xf32>
    %31 = arith.select %27, %25, %30 : vector<8x256xi1>, vector<8x256xf32>
    %c0_19 = arith.constant 0 : index
    %c0_20 = arith.constant 0 : index
    %c0_21 = arith.constant 0 : index
    %32 = vector.load %arg11[%c0_19, %c0_20, %c0_21] : memref<1x8x256xf32, #tpu.memory_space<vmem>>, vector<1x8x256xf32>
    %33 = vector.shape_cast %32 : vector<1x8x256xf32> to vector<8x256xf32>
    %34 = vector.shape_cast %31 : vector<8x256xf32> to vector<1x8x256xf32>
    tpu.vector_store %arg11[%c0_19, %c0_20, %c0_21], %34 {strides = array<i32>} : memref<1x8x256xf32, #tpu.memory_space<vmem>>, vector<1x8x256xf32>,
    return
  }
  func.func @transform_0(%arg0: i32, %arg1: i32) -> (i32, i32, i32) {
    %c0_i32 = arith.constant 0 : i32
    %c0_i32_0 = arith.constant 0 : i32
    return %arg0, %c0_i32, %arg1 : i32, i32, i32
  }
  func.func @transform_1(%arg0: i32, %arg1: i32) -> (i32, i32, i32) {
    %c0_i32 = arith.constant 0 : i32
    %c0_i32_0 = arith.constant 0 : i32
    return %arg0, %c0_i32, %arg1 : i32, i32, i32
  }
  func.func @transform_2(%arg0: i32, %arg1: i32) -> (i32, i32) {
    %c0_i32 = arith.constant 0 : i32
    %c0_i32_0 = arith.constant 0 : i32
    %c0_i32_1 = arith.constant 0 : i32
    return %c0_i32, %c0_i32_0 : i32, i32
  }
  func.func @transform_3(%arg0: i32, %arg1: i32) -> (i32, i32) {
    %c0_i32 = arith.constant 0 : i32
    %c0_i32_0 = arith.constant 0 : i32
    %c0_i32_1 = arith.constant 0 : i32
    return %c0_i32, %c0_i32_0 : i32, i32
  }
  func.func @transform_4(%arg0: i32, %arg1: i32) -> (i32, i32) {
    %c0_i32 = arith.constant 0 : i32
    %c0_i32_0 = arith.constant 0 : i32
    %c0_i32_1 = arith.constant 0 : i32
    return %c0_i32, %c0_i32_0 : i32, i32
  }
  func.func @transform_5(%arg0: i32, %arg1: i32) -> i32 {
    %c0_i32 = arith.constant 0 : i32
    %c0_i32_0 = arith.constant 0 : i32
    return %c0_i32 : i32
  }
  func.func @transform_6(%arg0: i32, %arg1: i32) -> (i32, i32) {
    %c0_i32 = arith.constant 0 : i32
    %c0_i32_0 = arith.constant 0 : i32
    %c0_i32_1 = arith.constant 0 : i32
    return %c0_i32, %c0_i32_0 : i32, i32
  }
  func.func @transform_7(%arg0: i32, %arg1: i32) -> (i32, i32) {
    %c0_i32 = arith.constant 0 : i32
    %c0_i32_0 = arith.constant 0 : i32
    %c0_i32_1 = arith.constant 0 : i32
    return %c0_i32, %c0_i32_0 : i32, i32
  }
  func.func @transform_8(%arg0: i32, %arg1: i32) -> i32 {
    %c0_i32 = arith.constant 0 : i32
    %c0_i32_0 = arith.constant 0 : i32
    return %c0_i32 : i32
  }
  func.func @transform_9(%arg0: i32, %arg1: i32) -> (i32, i32, i32) {
    %c0_i32 = arith.constant 0 : i32
    %c0_i32_0 = arith.constant 0 : i32
    return %arg0, %c0_i32, %arg1 : i32, i32, i32
  }
}

</mosaic_0001>

<llo_original>
// kernel: deconv_bn_relu_forward.4
$region0: #{deconv_bn_relu_forward.4}
  #allocation0 [shape = 'u32[]', space=smem, size = 0x4, offset = 0x4, fixed_abs, tag = 'smem constant byte address 0x4 - core index']
  #allocation1 [shape = 'u32[144,128]{1,0:T(1,128)}', space=vmem, size = 0x12000, scoped, tag = 'internal scratch']
  %s0 = inlined_call_operand.vmem [shape: f32[2,8,256], index: 0, kind: input, shape index: {}]
  %s1 = inlined_call_operand.vmem [shape: f32[4,8], index: 1, kind: input, shape index: {}]
  %s2 = inlined_call_operand.vmem [shape: bf16[2,4,256], index: 2, kind: output, shape index: {0}]
  %s3 = inlined_call_operand.vmem [shape: f32[2,1,4,1], index: 3, kind: output, shape index: {1}]
  %s4 = inlined_call_operand.vmem [shape: f32[2,1,4,1], index: 4, kind: output, shape index: {2}]
  %5 = xla_tuple %s2, %s3, %s4
  %s6 = sld [smem:[#allocation0]]
  $region57: #{deconv_bn_relu_forward.4} parent=0
    _
  %s8 = ssub.s32 1, %s6
  %s9 = scalar_select 0, %s8, %s6
  loop: start=0, step=1, limit=4
  $region2: #{deconv_bn_relu_forward.4} parent=0 // loop_pre_header
    _
  $region3: #{deconv_bn_relu_forward.4} parent=0 // loop_header
    %s11 = sphi 0, %s15
    %p12 = scmp.ge.s32.totalorder %s11, 4
    %s18 = sphi 0, %s30
    %s19 = sphi 0, %s26
    %s20 = sphi 0, %s18
    %s21 = sphi 0, %s19
    %s22 = sphi 0, %s20
    %s23 = sphi 0, %s21
    %s35 = sphi 0, %s37
    %s38 = sphi 0, %s35
    %s39 = sphi 0, %s38
    %s55 = sphi 0, %s39
    %s59 = sphi 0, %s59
    %s61 = sphi 0, %s59
    %s62 = sphi 0, %s61
    %s76 = sphi 0, %s62
    %s84 = sphi 0, %s86
    %s87 = sphi 0, %s84
    %s88 = sphi 0, %s87
    %s104 = sphi 0, %s88
    %s112 = sphi 0, %s114
    %s115 = sphi 0, %s112
    %s116 = sphi 0, %s115
    %s132 = sphi 0, %s116
    %s140 = sphi 0, %s142
    %s143 = sphi 0, %s140
    %s144 = sphi 0, %s143
    %s160 = sphi 0, %s144
  $region4: #{deconv_bn_relu_forward.4} parent=0 // loop_header_branch
    %14 = sbr.rel (%p12) target = $region8
  $region5: #{deconv_bn_relu_forward.4} parent=0 // loop_body
    %s16 = ssub.s32 %s11, 1
    %s17 = ssub.s32 %s11, 2
    %s24 = sadd.s32 1, %s19
    %p25 = scmp.ge.s32.totalorder %s24, 1
    %s26 = scalar_select %p25, 0, %s24
    %s27 = sadd.s32 1, %s18
    %s28 = scalar_select %p25, %s27, %s18
    %p29 = scmp.ge.s32.totalorder %s28, 2
    %s30 = scalar_select %p29, 0, %s28
    %s31 = ssub.s32 %s18, %s30
    %s32 = ssub.s32 %s19, %s26
    %s33 = sor.u32 %s31, %s32
    %p34 = scmp.eq.s32.totalorder %s33, 0
    %s36 = sadd.s32 %s35, 1
    %s37 = scalar_select %p34, %s35, %s36
    %p40 = pneg %p34
    %p41 = scmp.eq.s32.totalorder %s11, 1
    %p42 = por %p40, %p41
    %p43 = scmp.ne.s32.totalorder %s35, %s38
    %p44 = scmp.eq.s32.totalorder %s11, 0
    %p45 = por %p43, %p44
    %p46 = scmp.ne.s32.totalorder %s35, %s38
    %p47 = scmp.eq.s32.totalorder %s16, 1
    %p48 = por %p46, %p47
    %p49 = scmp.ne.s32.totalorder %s38, %s39
    %p50 = scmp.eq.s32.totalorder %s16, 0
    %p51 = por %p49, %p50
    %p52 = scmp.ne.s32.totalorder %s38, %s39
    %p53 = scmp.eq.s32.totalorder %s17, 1
    %p54 = por %p52, %p53
    %p56 = scmp.ne.s32.totalorder %s39, %s55
    %p57 = scmp.eq.s32.totalorder %s17, 0
    %p58 = por %p56, %p57
    %s60 = sadd.s32 %s59, 1
    %p63 = scmp.eq.s32.totalorder %s11, 1
    %p64 = scmp.ne.s32.totalorder %s59, %s61
    %p65 = scmp.eq.s32.totalorder %s11, 0
    %p66 = por %p64, %p65
    %p67 = scmp.ne.s32.totalorder %s59, %s61
    %p68 = scmp.eq.s32.totalorder %s16, 1
    %p69 = por %p67, %p68
    %p70 = scmp.ne.s32.totalorder %s61, %s62
    %p71 = scmp.eq.s32.totalorder %s16, 0
    %p72 = por %p70, %p71
    %p73 = scmp.ne.s32.totalorder %s61, %s62
    %p74 = scmp.eq.s32.totalorder %s17, 1
    %p75 = por %p73, %p74
    %p77 = scmp.ne.s32.totalorder %s62, %s76
    %p78 = scmp.eq.s32.totalorder %s17, 0
    %p79 = por %p77, %p78
    %s80 = ssub.s32 %s18, %s30
    %s81 = ssub.s32 %s19, %s26
    %s82 = sor.u32 %s80, %s81
    %p83 = scmp.eq.s32.totalorder %s82, 0
    %s85 = sadd.s32 %s84, 1
    %s86 = scalar_select %p83, %s84, %s85
    %p89 = pneg %p83
    %p90 = scmp.eq.s32.totalorder %s11, 1
    %p91 = por %p89, %p90
    %p92 = scmp.ne.s32.totalorder %s84, %s87
    %p93 = scmp.eq.s32.totalorder %s11, 0
    %p94 = por %p92, %p93
    %p95 = scmp.ne.s32.totalorder %s84, %s87
    %p96 = scmp.eq.s32.totalorder %s16, 1
    %p97 = por %p95, %p96
    %p98 = scmp.ne.s32.totalorder %s87, %s88
    %p99 = scmp.eq.s32.totalorder %s16, 0
    %p100 = por %p98, %p99
    %p101 = scmp.ne.s32.totalorder %s87, %s88
    %p102 = scmp.eq.s32.totalorder %s17, 1
    %p103 = por %p101, %p102
    %p105 = scmp.ne.s32.totalorder %s88, %s104
    %p106 = scmp.eq.s32.totalorder %s17, 0
    %p107 = por %p105, %p106
    %s108 = ssub.s32 %s18, %s30
    %s109 = ssub.s32 %s19, %s26
    %s110 = sor.u32 %s108, %s109
    %p111 = scmp.eq.s32.totalorder %s110, 0
    %s113 = sadd.s32 %s112, 1
    %s114 = scalar_select %p111, %s112, %s113
    %p117 = pneg %p111
    %p118 = scmp.eq.s32.totalorder %s11, 1
    %p119 = por %p117, %p118
    %p120 = scmp.ne.s32.totalorder %s112, %s115
    %p121 = scmp.eq.s32.totalorder %s11, 0
    %p122 = por %p120, %p121
    %p123 = scmp.ne.s32.totalorder %s112, %s115
    %p124 = scmp.eq.s32.totalorder %s16, 1
    %p125 = por %p123, %p124
    %p126 = scmp.ne.s32.totalorder %s115, %s116
    %p127 = scmp.eq.s32.totalorder %s16, 0
    %p128 = por %p126, %p127
    %p129 = scmp.ne.s32.totalorder %s115, %s116
    %p130 = scmp.eq.s32.totalorder %s17, 1
    %p131 = por %p129, %p130
    %p133 = scmp.ne.s32.totalorder %s116, %s132
    %p134 = scmp.eq.s32.totalorder %s17, 0
    %p135 = por %p133, %p134
    %s136 = ssub.s32 %s18, %s30
    %s137 = ssub.s32 %s19, %s26
    %s138 = sor.u32 %s136, %s137
    %p139 = scmp.eq.s32.totalorder %s138, 0
    %s141 = sadd.s32 %s140, 1
    %s142 = scalar_select %p139, %s140, %s141
    %p145 = pneg %p139
    %p146 = scmp.eq.s32.totalorder %s11, 1
    %p147 = por %p145, %p146
    %p148 = scmp.ne.s32.totalorder %s140, %s143
    %p149 = scmp.eq.s32.totalorder %s11, 0
    %p150 = por %p148, %p149
    %p151 = scmp.ne.s32.totalorder %s140, %s143
    %p152 = scmp.eq.s32.totalorder %s16, 1
    %p153 = por %p151, %p152
    %p154 = scmp.ne.s32.totalorder %s143, %s144
    %p155 = scmp.eq.s32.totalorder %s16, 0
    %p156 = por %p154, %p155
    %p157 = scmp.ne.s32.totalorder %s143, %s144
    %p158 = scmp.eq.s32.totalorder %s17, 1
    %p159 = por %p157, %p158
    %p161 = scmp.ne.s32.totalorder %s144, %s160
    %p162 = scmp.eq.s32.totalorder %s17, 0
    %p163 = por %p161, %p162
    %p164 = scmp.le.s32.totalorder 1, %s11
    %p165 = scmp.lt.s32.totalorder %s11, 3
    %p166 = pnand %p164, %p165
    %p167 = pneg %p166
    // Predicated region
    $region9: #{deconv_bn_relu_forward.4} parent=5 // pred_check
      _
    $region10: #{deconv_bn_relu_forward.4} parent=5 // pred_check_branch
      %169 = sbr.rel (%p166) target = $region12
    $region11: #{deconv_bn_relu_forward.4} parent=5 // pred_region
      %s170 = ssub.s32 %s11, 1
      // Predicated region
      $region13: #{deconv_bn_relu_forward.4} parent=11 // pred_check
        %p171 = pneg %p72
      $region14: #{deconv_bn_relu_forward.4} parent=11 // pred_check_branch
        %173 = sbr.rel (%p171) target = $region16
      $region15: #{deconv_bn_relu_forward.4} parent=11 // pred_region
        _
      $region16: #{deconv_bn_relu_forward.4} parent=11 // pred_fallthru
        _
    $region12: #{deconv_bn_relu_forward.4} parent=5 // pred_fallthru
      _
    %p174 = scmp.lt.s32.totalorder %s11, 2
    // Predicated region
    $region17: #{deconv_bn_relu_forward.4} parent=5 // pred_check
      %p175 = pneg %p174
    $region18: #{deconv_bn_relu_forward.4} parent=5 // pred_check_branch
      %177 = sbr.rel (%p175) target = $region20
    $region19: #{deconv_bn_relu_forward.4} parent=5 // pred_region
      // Predicated region
      $region21: #{deconv_bn_relu_forward.4} parent=19 // pred_check
        %p178 = pneg %p45
      $region22: #{deconv_bn_relu_forward.4} parent=19 // pred_check_branch
        %180 = sbr.rel (%p178) target = $region24
      $region23: #{deconv_bn_relu_forward.4} parent=19 // pred_region
        %s181 = smul.u32 2, %s19
        %p182 = scmp.lt.s32.totalorder %s18, 1
        %s183 = scalar_select %p182, %s18, 1
        %p184 = scmp.lt.s32.totalorder %s181, 1
        %s185 = scalar_select %p184, %s181, 1
        %s186 = smul.addr %s183, 2
        %s187 = sadd.s32 %s185, %s186
        %s188 = smul.addr %s187, 8
        %s189 = scalar_lea.vmem %s0, %s188
        %s190 = smul.u32 2, %s19
      $region24: #{deconv_bn_relu_forward.4} parent=19 // pred_fallthru
        _
    $region20: #{deconv_bn_relu_forward.4} parent=5 // pred_fallthru
      _
    %p191 = scmp.le.s32.totalorder 1, %s11
    %p192 = scmp.lt.s32.totalorder %s11, 3
    %p193 = pnand %p191, %p192
    %p194 = pneg %p193
    // Predicated region
    $region25: #{deconv_bn_relu_forward.4} parent=5 // pred_check
      _
    $region26: #{deconv_bn_relu_forward.4} parent=5 // pred_check_branch
      %196 = sbr.rel (%p193) target = $region28
    $region27: #{deconv_bn_relu_forward.4} parent=5 // pred_region
      %s197 = ssub.s32 %s11, 1
      %s198 = smul.u32 2, %s21
      %p199 = scmp.lt.s32.totalorder %s20, 1
      %s200 = scalar_select %p199, %s20, 1
      %p201 = scmp.lt.s32.totalorder %s198, 1
      %s202 = scalar_select %p201, %s198, 1
      %s203 = smul.addr %s200, 2
      %s204 = sadd.s32 %s202, %s203
      %s205 = smul.addr %s204, 8
      %s206 = scalar_lea.vmem %s0, %s205
      %p207 = pneg %p51
      %p208 = pneg %p48
      %p209 = pneg %p72
      %p210 = pneg %p69
      %p211 = pneg %p100
      %p212 = pneg %p97
      %s213 = smul.u32 2, %s21
      %p214 = scmp.lt.s32.totalorder %s20, 1
      %s215 = scalar_select %p214, %s20, 1
      %p216 = scmp.lt.s32.totalorder %s213, 1
      %s217 = scalar_select %p216, %s213, 1
      %s218 = smul.addr %s215, 2
      %s219 = sadd.s32 %s217, %s218
      %s220 = smul.addr %s219, 2
      %s221 = scalar_lea.vmem %s2, %s220
      %p222 = pneg %p128
      %p223 = pneg %p125
      %p224 = scmp.lt.s32.totalorder %s20, 1
      %s225 = scalar_select %p224, %s20, 1
      %p226 = scmp.lt.s32.totalorder %s21, 0
      %s227 = scalar_select %p226, %s21, 0
      %s228 = sadd.s32 %s227, %s225
      %s229 = smul.addr %s228, 4
      %s230 = scalar_lea.vmem %s3, %s229
      %p231 = pneg %p156
      %p232 = pneg %p153
      %p233 = scmp.lt.s32.totalorder %s20, 1
      %s234 = scalar_select %p233, %s20, 1
      %p235 = scmp.lt.s32.totalorder %s21, 0
      %s236 = scalar_select %p235, %s21, 0
      %s237 = sadd.s32 %s236, %s234
      %s238 = smul.addr %s237, 4
      %s239 = scalar_lea.vmem %s4, %s238
      %s240 = smul.u32 2, %s21
      %p241 = scmp.lt.s32.totalorder %s20, 1
      %s242 = scalar_select %p241, %s20, 1
      %p243 = scmp.lt.s32.totalorder %s240, 1
      %s244 = scalar_select %p243, %s240, 1
      %s245 = smul.addr %s242, 2
      %s246 = sadd.s32 %s244, %s245
      %s247 = smul.addr %s246, 8
      %s248 = scalar_lea.vmem %s0, %s247
      %s249 = smul.u32 2, %s21
      %s250 = smul.u32 2, %s21
      %p251 = scmp.lt.s32.totalorder %s20, 1
      %s252 = scalar_select %p251, %s20, 1
      %p253 = scmp.lt.s32.totalorder %s250, 1
      %s254 = scalar_select %p253, %s250, 1
      %s255 = smul.addr %s252, 2
      %s256 = sadd.s32 %s254, %s255
      %s257 = smul.addr %s256, 2
      %s258 = scalar_lea.vmem %s2, %s257
      %s259 = smul.u32 2, %s21
      %p260 = scmp.lt.s32.totalorder %s20, 1
      %s261 = scalar_select %p260, %s20, 1
      %p262 = scmp.lt.s32.totalorder %s21, 0
      %s263 = scalar_select %p262, %s21, 0
      %s264 = sadd.s32 %s263, %s261
      %s265 = smul.addr %s264, 4
      %s266 = scalar_lea.vmem %s3, %s265
      %p267 = scmp.lt.s32.totalorder %s20, 1
      %s268 = scalar_select %p267, %s20, 1
      %p269 = scmp.lt.s32.totalorder %s21, 0
      %s270 = scalar_select %p269, %s21, 0
      %s271 = sadd.s32 %s270, %s268
      %s272 = smul.addr %s271, 4
      %s273 = scalar_lea.vmem %s4, %s272
      %v274 = vld [vmem:[%s1] sm:$0xf]
      %v275 = vld [vmem:[%s248] sm:$0xff]
      %v276 = vld [vmem:[%s248 + $0x8] sm:$0xff]
      %vm277 = vcmask 64512
      %v279 = vsel %vm277, %v274, 0
      %281 = vmatprep.subr.mxu0 %v276
      %282 = vmatpush1.msra.mxu0 %v275
      %283 = vmatprep.subr.mxu0 0.0
      %284 = vmatpush1.msra.mxu0 0.0
      %285 = vmatprep.subr.mxu0 0.0
      %286 = vmatpush1.msra.mxu0 0.0
      %287 = vmatprep.subr.mxu0 0.0
      %288 = vmatpush1.msra.mxu0 0.0
      %289 = vmatprep.subr.mxu0 0.0
      %290 = vmatpush1.msra.mxu0 0.0
      %291 = vmatprep.subr.mxu0 0.0
      %292 = vmatpush1.msra.mxu0 0.0
      %293 = vmatprep.subr.mxu0 0.0
      %294 = vmatpush1.msra.mxu0 0.0
      %295 = vmatprep.subr.mxu0 0.0
      %296 = vmatpush1.msra.mxu0 0.0
      %297 = vmatprep.subr.mxu0 0.0
      %298 = vmatpush1.msra.mxu0 0.0
      %299 = vmatprep.subr.mxu0 0.0
      %300 = vmatpush1.msra.mxu0 0.0
      %301 = vmatprep.subr.mxu0 0.0
      %302 = vmatpush1.msra.mxu0 0.0
      %303 = vmatprep.subr.mxu0 0.0
      %304 = vmatpush1.msra.mxu0 0.0
      %305 = vmatprep.subr.mxu0 0.0
      %306 = vmatpush1.msra.mxu0 0.0
      %307 = vmatprep.subr.mxu0 0.0
      %308 = vmatpush1.msra.mxu0 0.0
      %309 = vmatprep.subr.mxu0 0.0
      %310 = vmatpush1.msra.mxu0 0.0
      %311 = vmatprep.subr.mxu0 0.0
      %312 = vmatpush1.msra.mxu0 0.0
      %313 = vmatprep.subr.mxu0 0.0
      %314 = vmatpush1.msra.mxu0 0.0
      %315 = vmatprep.subr.mxu0 0.0
      %316 = vmatpush1.msra.mxu0 0.0
      %317 = vmatprep.subr.mxu0 0.0
      %318 = vmatpush1.msra.mxu0 0.0
      %319 = vmatprep.subr.mxu0 0.0
      %320 = vmatpush1.msra.mxu0 0.0
      %321 = vmatprep.subr.mxu0 0.0
      %322 = vmatpush1.msra.mxu0 0.0
      %323 = vmatprep.subr.mxu0 0.0
      %324 = vmatpush1.msra.mxu0 0.0
      %325 = vmatprep.subr.mxu0 0.0
      %326 = vmatpush1.msra.mxu0 0.0
      %327 = vmatprep.subr.mxu0 0.0
      %328 = vmatpush1.msra.mxu0 0.0
      %329 = vmatprep.subr.mxu0 0.0
      %330 = vmatpush1.msra.mxu0 0.0
      %331 = vmatprep.subr.mxu0 0.0
      %332 = vmatpush1.msra.mxu0 0.0
      %333 = vmatprep.subr.mxu0 0.0
      %334 = vmatpush1.msra.mxu0 0.0
      %335 = vmatprep.subr.mxu0 0.0
      %336 = vmatpush1.msra.mxu0 0.0
      %337 = vmatprep.subr.mxu0 0.0
      %338 = vmatpush1.msra.mxu0 0.0
      %339 = vmatprep.subr.mxu0 0.0
      %340 = vmatpush1.msra.mxu0 0.0
      %341 = vmatprep.subr.mxu0 0.0
      %342 = vmatpush1.msra.mxu0 0.0
      %343 = vmatprep.subr.mxu0 0.0
      %344 = vmatpush1.msra.mxu0 0.0
      %345 = vmatprep.mubr.f32.mxu0 0.0
      %346 = vmatmul.mubr.f32.gmra.mrb[0].mxu0 %v279
      %v347 = vpop.f32.mrb[0].mxu0
      %v348 = vadd.f32 0.0, %v347
      %v349 = vpop.f32.mrb[0].mxu0
      %v350 = vadd.f32 0.0, %v349
      %351 = vdwg.mxu0
      %v352 = vpack.c.bf16 %v348, %v348
      %v353 = vpack.c.bf16 %v350, %v350
      %v356 = vcombine.low %v352, %v353
      %v358 = vunpack.c.l.s4 1983009808
      %v359 = vunpack.c.0.s8 %v358
      %v360 = vlaneseq
      %v361 = vshrl.u32 %v360, 7
      %v362 = vsub.s32 %v359, %v361
      %v363 = vrot.slane %v356, %v362
      %365 = vst [vmem:[%s258] sm:$0xf] %v363
      %v366 = vunpack.c.l.bf16 %v352
      %v367 = vunpack.c.l.bf16 %v353
      %vm368 = vcmask 1043456
      %v369 = vsel %vm368, %v366, 0.0
      %v370 = vsel %vm368, %v367, 0.0
      %v371 = vadd.f32 %v369, %v370
      %372 = vadd.xlane.f32.xlu0 %v371
      %v373 = vpop.xlane.xlu0 %372
      %vm374 = vcmask 3072
      %375 = vst.msk [vmem:[%s266] sm:$0xf] %vm374, %v373
      %v376 = vmul.f32 %v366, %v366
      %v377 = vmul.f32 %v367, %v367
      %v378 = vsel %vm368, %v376, 0.0
      %v379 = vsel %vm368, %v377, 0.0
      %v380 = vadd.f32 %v378, %v379
      %381 = vadd.xlane.f32.xlu0 %v380
      %v382 = vpop.xlane.xlu0 %381
      %383 = vst.msk [vmem:[%s273] sm:$0xf] %vm374, %v382
      %s384 = smul.u32 2, %s21
      %p385 = scmp.lt.s32.totalorder %s20, 1
      %s386 = scalar_select %p385, %s20, 1
      %p387 = scmp.lt.s32.totalorder %s384, 1
      %s388 = scalar_select %p387, %s384, 1
      %s389 = smul.addr %s386, 2
      %s390 = sadd.s32 %s388, %s389
      %s391 = smul.addr %s390, 2
      %s392 = scalar_lea.vmem %s2, %s391
      %p393 = scmp.lt.s32.totalorder %s20, 1
      %s394 = scalar_select %p393, %s20, 1
      %p395 = scmp.lt.s32.totalorder %s21, 0
      %s396 = scalar_select %p395, %s21, 0
      %s397 = sadd.s32 %s396, %s394
      %s398 = smul.addr %s397, 4
      %s399 = scalar_lea.vmem %s3, %s398
      %p400 = scmp.lt.s32.totalorder %s20, 1
      %s401 = scalar_select %p400, %s20, 1
      %p402 = scmp.lt.s32.totalorder %s21, 0
      %s403 = scalar_select %p402, %s21, 0
      %s404 = sadd.s32 %s403, %s401
      %s405 = smul.addr %s404, 4
      %s406 = scalar_lea.vmem %s4, %s405
      // Predicated region
      $region29: #{deconv_bn_relu_forward.4} parent=27 // pred_check
        %p407 = pneg %p97
      $region30: #{deconv_bn_relu_forward.4} parent=27 // pred_check_branch
        %409 = sbr.rel (%p407) target = $region32
      $region31: #{deconv_bn_relu_forward.4} parent=27 // pred_region
        %s410 = smul.u32 2, %s21
      $region32: #{deconv_bn_relu_forward.4} parent=27 // pred_fallthru
        _
      // Predicated region
      $region33: #{deconv_bn_relu_forward.4} parent=27 // pred_check
        %p411 = pneg %p125
      $region34: #{deconv_bn_relu_forward.4} parent=27 // pred_check_branch
        %413 = sbr.rel (%p411) target = $region36
      $region35: #{deconv_bn_relu_forward.4} parent=27 // pred_region
        _
      $region36: #{deconv_bn_relu_forward.4} parent=27 // pred_fallthru
        _
      // Predicated region
      $region37: #{deconv_bn_relu_forward.4} parent=27 // pred_check
        %p414 = pneg %p153
      $region38: #{deconv_bn_relu_forward.4} parent=27 // pred_check_branch
        %416 = sbr.rel (%p414) target = $region40
      $region39: #{deconv_bn_relu_forward.4} parent=27 // pred_region
        _
      $region40: #{deconv_bn_relu_forward.4} parent=27 // pred_fallthru
        _
    $region28: #{deconv_bn_relu_forward.4} parent=5 // pred_fallthru
      _
    %p417 = scmp.le.s32.totalorder 2, %s11
    // Predicated region
    $region41: #{deconv_bn_relu_forward.4} parent=5 // pred_check
      %p418 = pneg %p417
    $region42: #{deconv_bn_relu_forward.4} parent=5 // pred_check_branch
      %420 = sbr.rel (%p418) target = $region44
    $region43: #{deconv_bn_relu_forward.4} parent=5 // pred_region
      %s421 = ssub.s32 %s11, 2
      // Predicated region
      $region45: #{deconv_bn_relu_forward.4} parent=43 // pred_check
        %p422 = pneg %p103
      $region46: #{deconv_bn_relu_forward.4} parent=43 // pred_check_branch
        %424 = sbr.rel (%p422) target = $region48
      $region47: #{deconv_bn_relu_forward.4} parent=43 // pred_region
        %s425 = smul.u32 2, %s23
        %p426 = scmp.lt.s32.totalorder %s22, 1
        %s427 = scalar_select %p426, %s22, 1
        %p428 = scmp.lt.s32.totalorder %s425, 1
        %s429 = scalar_select %p428, %s425, 1
        %s430 = smul.addr %s427, 2
        %s431 = sadd.s32 %s429, %s430
        %s432 = smul.addr %s431, 2
        %s433 = scalar_lea.vmem %s2, %s432
      $region48: #{deconv_bn_relu_forward.4} parent=43 // pred_fallthru
        _
      // Predicated region
      $region49: #{deconv_bn_relu_forward.4} parent=43 // pred_check
        %p434 = pneg %p131
      $region50: #{deconv_bn_relu_forward.4} parent=43 // pred_check_branch
        %436 = sbr.rel (%p434) target = $region52
      $region51: #{deconv_bn_relu_forward.4} parent=43 // pred_region
        %p437 = scmp.lt.s32.totalorder %s22, 1
        %s438 = scalar_select %p437, %s22, 1
        %p439 = scmp.lt.s32.totalorder %s23, 0
        %s440 = scalar_select %p439, %s23, 0
        %s441 = sadd.s32 %s440, %s438
        %s442 = smul.addr %s441, 4
        %s443 = scalar_lea.vmem %s3, %s442
      $region52: #{deconv_bn_relu_forward.4} parent=43 // pred_fallthru
        _
      // Predicated region
      $region53: #{deconv_bn_relu_forward.4} parent=43 // pred_check
        %p444 = pneg %p159
      $region54: #{deconv_bn_relu_forward.4} parent=43 // pred_check_branch
        %446 = sbr.rel (%p444) target = $region56
      $region55: #{deconv_bn_relu_forward.4} parent=43 // pred_region
        %p447 = scmp.lt.s32.totalorder %s22, 1
        %s448 = scalar_select %p447, %s22, 1
        %p449 = scmp.lt.s32.totalorder %s23, 0
        %s450 = scalar_select %p449, %s23, 0
        %s451 = sadd.s32 %s450, %s448
        %s452 = smul.addr %s451, 4
        %s453 = scalar_lea.vmem %s4, %s452
      $region56: #{deconv_bn_relu_forward.4} parent=43 // pred_fallthru
        _
    $region44: #{deconv_bn_relu_forward.4} parent=5 // pred_fallthru
      _
  $region6: #{deconv_bn_relu_forward.4} parent=0 // loop_footer
    %s15 = sadd.s32 1, %s11
  $region7: #{deconv_bn_relu_forward.4} parent=0 // loop_footer_branch
    %10 = sbr.rel target = $region3
  $region8: #{deconv_bn_relu_forward.4} parent=0 // loop_exit
    _

// kernel: deconv_bn_relu_forward.6
$region0: #{deconv_bn_relu_forward.6}
  #allocation0 [shape = 'u32[]', space=smem, size = 0x4, offset = 0x4, fixed_abs, tag = 'smem constant byte address 0x4 - core index']
  #allocation1 [shape = 'u32[144,128]{1,0:T(1,128)}', space=vmem, size = 0x12000, scoped, tag = 'internal scratch']
  #allocation2 [shape = 'f32[1]{0:T(128)S(6)}', space=smem, size = 0x200, scoped, tag = 'scoped memory for deconv_bn_relu_forward.6']
  %s0 = inlined_call_operand.vmem [shape: bf16[2,4,256], index: 0, kind: input, shape index: {}]
  %s1 = inlined_call_operand.vmem [shape: f32[8,4], index: 1, kind: input, shape index: {}]
  %s2 = inlined_call_operand.vmem [shape: f32[4,1], index: 2, kind: input, shape index: {}]
  %s3 = inlined_call_operand.vmem [shape: f32[4,1], index: 3, kind: input, shape index: {}]
  %s4 = inlined_call_operand.<no memory space> [shape: f32[1], index: 4, kind: input, shape index: {}]
  %s5 = inlined_call_operand.vmem [shape: f32[2,1,8,1], index: 5, kind: output, shape index: {0}]
  %s6 = inlined_call_operand.vmem [shape: f32[2,1,8,1], index: 6, kind: output, shape index: {1}]
  %7 = xla_tuple %s5, %s6
  %s8 = sld [smem:[#allocation0]]
  $region61: #{deconv_bn_relu_forward.6} parent=0
    _
  %s10 = ssub.s32 1, %s8
  %s11 = scalar_select 0, %s10, %s8
  %12 = sst [smem:[#allocation2]] %s4
  loop: start=0, step=1, limit=4
  $region2: #{deconv_bn_relu_forward.6} parent=0 // loop_pre_header
    _
  $region3: #{deconv_bn_relu_forward.6} parent=0 // loop_header
    %s14 = sphi 0, %s18
    %p15 = scmp.ge.s32.totalorder %s14, 4
    %s21 = sphi 0, %s33
    %s22 = sphi 0, %s29
    %s23 = sphi 0, %s21
    %s24 = sphi 0, %s22
    %s25 = sphi 0, %s23
    %s26 = sphi 0, %s24
    %s38 = sphi 0, %s40
    %s41 = sphi 0, %s38
    %s42 = sphi 0, %s41
    %s58 = sphi 0, %s42
    %s62 = sphi 0, %s62
    %s64 = sphi 0, %s62
    %s65 = sphi 0, %s64
    %s79 = sphi 0, %s65
    %s83 = sphi 0, %s83
    %s85 = sphi 0, %s83
    %s86 = sphi 0, %s85
    %s100 = sphi 0, %s86
    %s104 = sphi 0, %s104
    %s106 = sphi 0, %s104
    %s107 = sphi 0, %s106
    %s121 = sphi 0, %s107
    %s125 = sphi 0, %s125
    %s127 = sphi 0, %s125
    %s128 = sphi 0, %s127
    %s142 = sphi 0, %s128
    %s150 = sphi 0, %s152
    %s153 = sphi 0, %s150
    %s154 = sphi 0, %s153
    %s170 = sphi 0, %s154
    %s178 = sphi 0, %s180
    %s181 = sphi 0, %s178
    %s182 = sphi 0, %s181
    %s198 = sphi 0, %s182
  $region4: #{deconv_bn_relu_forward.6} parent=0 // loop_header_branch
    %17 = sbr.rel (%p15) target = $region8
  $region5: #{deconv_bn_relu_forward.6} parent=0 // loop_body
    %s19 = ssub.s32 %s14, 1
    %s20 = ssub.s32 %s14, 2
    %s27 = sadd.s32 1, %s22
    %p28 = scmp.ge.s32.totalorder %s27, 1
    %s29 = scalar_select %p28, 0, %s27
    %s30 = sadd.s32 1, %s21
    %s31 = scalar_select %p28, %s30, %s21
    %p32 = scmp.ge.s32.totalorder %s31, 2
    %s33 = scalar_select %p32, 0, %s31
    %s34 = ssub.s32 %s21, %s33
    %s35 = ssub.s32 %s22, %s29
    %s36 = sor.u32 %s34, %s35
    %p37 = scmp.eq.s32.totalorder %s36, 0
    %s39 = sadd.s32 %s38, 1
    %s40 = scalar_select %p37, %s38, %s39
    %p43 = pneg %p37
    %p44 = scmp.eq.s32.totalorder %s14, 1
    %p45 = por %p43, %p44
    %p46 = scmp.ne.s32.totalorder %s38, %s41
    %p47 = scmp.eq.s32.totalorder %s14, 0
    %p48 = por %p46, %p47
    %p49 = scmp.ne.s32.totalorder %s38, %s41
    %p50 = scmp.eq.s32.totalorder %s19, 1
    %p51 = por %p49, %p50
    %p52 = scmp.ne.s32.totalorder %s41, %s42
    %p53 = scmp.eq.s32.totalorder %s19, 0
    %p54 = por %p52, %p53
    %p55 = scmp.ne.s32.totalorder %s41, %s42
    %p56 = scmp.eq.s32.totalorder %s20, 1
    %p57 = por %p55, %p56
    %p59 = scmp.ne.s32.totalorder %s42, %s58
    %p60 = scmp.eq.s32.totalorder %s20, 0
    %p61 = por %p59, %p60
    %s63 = sadd.s32 %s62, 1
    %p66 = scmp.eq.s32.totalorder %s14, 1
    %p67 = scmp.ne.s32.totalorder %s62, %s64
    %p68 = scmp.eq.s32.totalorder %s14, 0
    %p69 = por %p67, %p68
    %p70 = scmp.ne.s32.totalorder %s62, %s64
    %p71 = scmp.eq.s32.totalorder %s19, 1
    %p72 = por %p70, %p71
    %p73 = scmp.ne.s32.totalorder %s64, %s65
    %p74 = scmp.eq.s32.totalorder %s19, 0
    %p75 = por %p73, %p74
    %p76 = scmp.ne.s32.totalorder %s64, %s65
    %p77 = scmp.eq.s32.totalorder %s20, 1
    %p78 = por %p76, %p77
    %p80 = scmp.ne.s32.totalorder %s65, %s79
    %p81 = scmp.eq.s32.totalorder %s20, 0
    %p82 = por %p80, %p81
    %s84 = sadd.s32 %s83, 1
    %p87 = scmp.eq.s32.totalorder %s14, 1
    %p88 = scmp.ne.s32.totalorder %s83, %s85
    %p89 = scmp.eq.s32.totalorder %s14, 0
    %p90 = por %p88, %p89
    %p91 = scmp.ne.s32.totalorder %s83, %s85
    %p92 = scmp.eq.s32.totalorder %s19, 1
    %p93 = por %p91, %p92
    %p94 = scmp.ne.s32.totalorder %s85, %s86
    %p95 = scmp.eq.s32.totalorder %s19, 0
    %p96 = por %p94, %p95
    %p97 = scmp.ne.s32.totalorder %s85, %s86
    %p98 = scmp.eq.s32.totalorder %s20, 1
    %p99 = por %p97, %p98
    %p101 = scmp.ne.s32.totalorder %s86, %s100
    %p102 = scmp.eq.s32.totalorder %s20, 0
    %p103 = por %p101, %p102
    %s105 = sadd.s32 %s104, 1
    %p108 = scmp.eq.s32.totalorder %s14, 1
    %p109 = scmp.ne.s32.totalorder %s104, %s106
    %p110 = scmp.eq.s32.totalorder %s14, 0
    %p111 = por %p109, %p110
    %p112 = scmp.ne.s32.totalorder %s104, %s106
    %p113 = scmp.eq.s32.totalorder %s19, 1
    %p114 = por %p112, %p113
    %p115 = scmp.ne.s32.totalorder %s106, %s107
    %p116 = scmp.eq.s32.totalorder %s19, 0
    %p117 = por %p115, %p116
    %p118 = scmp.ne.s32.totalorder %s106, %s107
    %p119 = scmp.eq.s32.totalorder %s20, 1
    %p120 = por %p118, %p119
    %p122 = scmp.ne.s32.totalorder %s107, %s121
    %p123 = scmp.eq.s32.totalorder %s20, 0
    %p124 = por %p122, %p123
    %s126 = sadd.s32 %s125, 1
    %p129 = scmp.eq.s32.totalorder %s14, 1
    %p130 = scmp.ne.s32.totalorder %s125, %s127
    %p131 = scmp.eq.s32.totalorder %s14, 0
    %p132 = por %p130, %p131
    %p133 = scmp.ne.s32.totalorder %s125, %s127
    %p134 = scmp.eq.s32.totalorder %s19, 1
    %p135 = por %p133, %p134
    %p136 = scmp.ne.s32.totalorder %s127, %s128
    %p137 = scmp.eq.s32.totalorder %s19, 0
    %p138 = por %p136, %p137
    %p139 = scmp.ne.s32.totalorder %s127, %s128
    %p140 = scmp.eq.s32.totalorder %s20, 1
    %p141 = por %p139, %p140
    %p143 = scmp.ne.s32.totalorder %s128, %s142
    %p144 = scmp.eq.s32.totalorder %s20, 0
    %p145 = por %p143, %p144
    %s146 = ssub.s32 %s21, %s33
    %s147 = ssub.s32 %s22, %s29
    %s148 = sor.u32 %s146, %s147
    %p149 = scmp.eq.s32.totalorder %s148, 0
    %s151 = sadd.s32 %s150, 1
    %s152 = scalar_select %p149, %s150, %s151
    %p155 = pneg %p149
    %p156 = scmp.eq.s32.totalorder %s14, 1
    %p157 = por %p155, %p156
    %p158 = scmp.ne.s32.totalorder %s150, %s153
    %p159 = scmp.eq.s32.totalorder %s14, 0
    %p160 = por %p158, %p159
    %p161 = scmp.ne.s32.totalorder %s150, %s153
    %p162 = scmp.eq.s32.totalorder %s19, 1
    %p163 = por %p161, %p162
    %p164 = scmp.ne.s32.totalorder %s153, %s154
    %p165 = scmp.eq.s32.totalorder %s19, 0
    %p166 = por %p164, %p165
    %p167 = scmp.ne.s32.totalorder %s153, %s154
    %p168 = scmp.eq.s32.totalorder %s20, 1
    %p169 = por %p167, %p168
    %p171 = scmp.ne.s32.totalorder %s154, %s170
    %p172 = scmp.eq.s32.totalorder %s20, 0
    %p173 = por %p171, %p172
    %s174 = ssub.s32 %s21, %s33
    %s175 = ssub.s32 %s22, %s29
    %s176 = sor.u32 %s174, %s175
    %p177 = scmp.eq.s32.totalorder %s176, 0
    %s179 = sadd.s32 %s178, 1
    %s180 = scalar_select %p177, %s178, %s179
    %p183 = pneg %p177
    %p184 = scmp.eq.s32.totalorder %s14, 1
    %p185 = por %p183, %p184
    %p186 = scmp.ne.s32.totalorder %s178, %s181
    %p187 = scmp.eq.s32.totalorder %s14, 0
    %p188 = por %p186, %p187
    %p189 = scmp.ne.s32.totalorder %s178, %s181
    %p190 = scmp.eq.s32.totalorder %s19, 1
    %p191 = por %p189, %p190
    %p192 = scmp.ne.s32.totalorder %s181, %s182
    %p193 = scmp.eq.s32.totalorder %s19, 0
    %p194 = por %p192, %p193
    %p195 = scmp.ne.s32.totalorder %s181, %s182
    %p196 = scmp.eq.s32.totalorder %s20, 1
    %p197 = por %p195, %p196
    %p199 = scmp.ne.s32.totalorder %s182, %s198
    %p200 = scmp.eq.s32.totalorder %s20, 0
    %p201 = por %p199, %p200
    %p202 = scmp.le.s32.totalorder 1, %s14
    %p203 = scmp.lt.s32.totalorder %s14, 3
    %p204 = pnand %p202, %p203
    %p205 = pneg %p204
    // Predicated region
    $region9: #{deconv_bn_relu_forward.6} parent=5 // pred_check
      _
    $region10: #{deconv_bn_relu_forward.6} parent=5 // pred_check_branch
      %207 = sbr.rel (%p204) target = $region12
    $region11: #{deconv_bn_relu_forward.6} parent=5 // pred_region
      %s208 = ssub.s32 %s14, 1
      // Predicated region
      $region13: #{deconv_bn_relu_forward.6} parent=11 // pred_check
        %p209 = pneg %p75
      $region14: #{deconv_bn_relu_forward.6} parent=11 // pred_check_branch
        %211 = sbr.rel (%p209) target = $region16
      $region15: #{deconv_bn_relu_forward.6} parent=11 // pred_region
        _
      $region16: #{deconv_bn_relu_forward.6} parent=11 // pred_fallthru
        _
      // Predicated region
      $region17: #{deconv_bn_relu_forward.6} parent=11 // pred_check
        %p212 = pneg %p96
      $region18: #{deconv_bn_relu_forward.6} parent=11 // pred_check_branch
        %214 = sbr.rel (%p212) target = $region20
      $region19: #{deconv_bn_relu_forward.6} parent=11 // pred_region
        _
      $region20: #{deconv_bn_relu_forward.6} parent=11 // pred_fallthru
        _
      // Predicated region
      $region21: #{deconv_bn_relu_forward.6} parent=11 // pred_check
        %p215 = pneg %p117
      $region22: #{deconv_bn_relu_forward.6} parent=11 // pred_check_branch
        %217 = sbr.rel (%p215) target = $region24
      $region23: #{deconv_bn_relu_forward.6} parent=11 // pred_region
        _
      $region24: #{deconv_bn_relu_forward.6} parent=11 // pred_fallthru
        _
      // Predicated region
      $region25: #{deconv_bn_relu_forward.6} parent=11 // pred_check
        %p218 = pneg %p138
      $region26: #{deconv_bn_relu_forward.6} parent=11 // pred_check_branch
        %220 = sbr.rel (%p218) target = $region28
      $region27: #{deconv_bn_relu_forward.6} parent=11 // pred_region
        _
      $region28: #{deconv_bn_relu_forward.6} parent=11 // pred_fallthru
        _
    $region12: #{deconv_bn_relu_forward.6} parent=5 // pred_fallthru
      _
    %p221 = scmp.lt.s32.totalorder %s14, 2
    // Predicated region
    $region29: #{deconv_bn_relu_forward.6} parent=5 // pred_check
      %p222 = pneg %p221
    $region30: #{deconv_bn_relu_forward.6} parent=5 // pred_check_branch
      %224 = sbr.rel (%p222) target = $region32
    $region31: #{deconv_bn_relu_forward.6} parent=5 // pred_region
      // Predicated region
      $region33: #{deconv_bn_relu_forward.6} parent=31 // pred_check
        %p225 = pneg %p48
      $region34: #{deconv_bn_relu_forward.6} parent=31 // pred_check_branch
        %227 = sbr.rel (%p225) target = $region36
      $region35: #{deconv_bn_relu_forward.6} parent=31 // pred_region
        %s228 = smul.u32 2, %s22
        %p229 = scmp.lt.s32.totalorder %s21, 1
        %s230 = scalar_select %p229, %s21, 1
        %p231 = scmp.lt.s32.totalorder %s228, 1
        %s232 = scalar_select %p231, %s228, 1
        %s233 = smul.addr %s230, 2
        %s234 = sadd.s32 %s232, %s233
        %s235 = smul.addr %s234, 2
        %s236 = scalar_lea.vmem %s0, %s235
        %s237 = smul.u32 2, %s22
      $region36: #{deconv_bn_relu_forward.6} parent=31 // pred_fallthru
        _
    $region32: #{deconv_bn_relu_forward.6} parent=5 // pred_fallthru
      _
    %p238 = scmp.le.s32.totalorder 1, %s14
    %p239 = scmp.lt.s32.totalorder %s14, 3
    %p240 = pnand %p238, %p239
    %p241 = pneg %p240
    // Predicated region
    $region37: #{deconv_bn_relu_forward.6} parent=5 // pred_check
      _
    $region38: #{deconv_bn_relu_forward.6} parent=5 // pred_check_branch
      %243 = sbr.rel (%p240) target = $region40
    $region39: #{deconv_bn_relu_forward.6} parent=5 // pred_region
      %s244 = ssub.s32 %s14, 1
      %s245 = smul.u32 2, %s24
      %p246 = scmp.lt.s32.totalorder %s23, 1
      %s247 = scalar_select %p246, %s23, 1
      %p248 = scmp.lt.s32.totalorder %s245, 1
      %s249 = scalar_select %p248, %s245, 1
      %s250 = smul.addr %s247, 2
      %s251 = sadd.s32 %s249, %s250
      %s252 = smul.addr %s251, 2
      %s253 = scalar_lea.vmem %s0, %s252
      %p254 = pneg %p54
      %p255 = pneg %p51
      %p256 = pneg %p75
      %p257 = pneg %p72
      %p258 = pneg %p96
      %p259 = pneg %p93
      %p260 = pneg %p117
      %p261 = pneg %p114
      %p262 = pneg %p138
      %p263 = pneg %p135
      %p264 = pneg %p166
      %p265 = pneg %p163
      %p266 = scmp.lt.s32.totalorder %s23, 1
      %s267 = scalar_select %p266, %s23, 1
      %p268 = scmp.lt.s32.totalorder %s24, 0
      %s269 = scalar_select %p268, %s24, 0
      %s270 = sadd.s32 %s269, %s267
      %s271 = smul.addr %s270, 8
      %s272 = scalar_lea.vmem %s5, %s271
      %p273 = pneg %p194
      %p274 = pneg %p191
      %p275 = scmp.lt.s32.totalorder %s23, 1
      %s276 = scalar_select %p275, %s23, 1
      %p277 = scmp.lt.s32.totalorder %s24, 0
      %s278 = scalar_select %p277, %s24, 0
      %s279 = sadd.s32 %s278, %s276
      %s280 = smul.addr %s279, 8
      %s281 = scalar_lea.vmem %s6, %s280
      %s282 = smul.u32 2, %s24
      %p283 = scmp.lt.s32.totalorder %s23, 1
      %s284 = scalar_select %p283, %s23, 1
      %p285 = scmp.lt.s32.totalorder %s282, 1
      %s286 = scalar_select %p285, %s282, 1
      %s287 = smul.addr %s284, 2
      %s288 = sadd.s32 %s286, %s287
      %s289 = smul.addr %s288, 2
      %s290 = scalar_lea.vmem %s0, %s289
      %s291 = smul.u32 2, %s24
      %p292 = scmp.lt.s32.totalorder %s23, 1
      %s293 = scalar_select %p292, %s23, 1
      %p294 = scmp.lt.s32.totalorder %s24, 0
      %s295 = scalar_select %p294, %s24, 0
      %s296 = sadd.s32 %s295, %s293
      %s297 = smul.addr %s296, 8
      %s298 = scalar_lea.vmem %s5, %s297
      %p299 = scmp.lt.s32.totalorder %s23, 1
      %s300 = scalar_select %p299, %s23, 1
      %p301 = scmp.lt.s32.totalorder %s24, 0
      %s302 = scalar_select %p301, %s24, 0
      %s303 = sadd.s32 %s302, %s300
      %s304 = smul.addr %s303, 8
      %s305 = scalar_lea.vmem %s6, %s304
      %v306 = vld [vmem:[%s290] sm:$0xf]
      %v307 = vunpack.c.l.bf16 %v306
      %v308 = vld [vmem:[%s2] sm:$0xf]
      %310 = vset.pattern.permute.xlu0 0
      %311 = vperm.xlu0 %310, %v308
      %v312 = vpop.permute.xlu0 %311
      %v314 = vunpack.c.l.s4 839922192
      %v315 = vunpack.c.0.s8 %v314
      %v316 = vlaneseq
      %v317 = vshrl.u32 %v316, 7
      %v318 = vsub.s32 %v315, %v317
      %v319 = vrot.slane %v312, %v318
      %v321 = vmul.f32 %v307, %v319
      %v322 = vld [vmem:[%s3] sm:$0xf]
      %324 = vset.pattern.permute.xlu0 0
      %325 = vperm.xlu0 %324, %v322
      %v326 = vpop.permute.xlu0 %325
      %v328 = vunpack.c.l.s4 839922192
      %v329 = vunpack.c.0.s8 %v328
      %v330 = vlaneseq
      %v331 = vshrl.u32 %v330, 7
      %v332 = vsub.s32 %v329, %v331
      %v333 = vrot.slane %v326, %v332
      %v335 = vadd.f32 %v321, %v333
      %vm336 = vcmp.ge.f32.partialorder %v335, 0.0
      %s337 = sld [smem:[#allocation2]]
      %v338 = vstv %s337
      %v339 = vmul.f32 %v338, %v335
      %v340 = vsel %vm336, %v335, %v339
      %v341 = vld [vmem:[%s1] sm:$0xff]
      %v343 = vcombine.high %v340, %v340
      %vm344 = vcmask 31744
      %v346 = vsel %vm344, %v341, 0
      %vm348 = vcmask 1043456
      %v349 = vsel %vm348, %v340, 0
      %v351 = vsel %vm348, %v343, 0
      %353 = vmatprep.subr.mxu0 %v351
      %354 = vmatpush1.msra.mxu0 %v349
      %355 = vmatprep.subr.mxu0 0.0
      %356 = vmatpush1.msra.mxu0 0.0
      %357 = vmatprep.subr.mxu0 0.0
      %358 = vmatpush1.msra.mxu0 0.0
      %359 = vmatprep.subr.mxu0 0.0
      %360 = vmatpush1.msra.mxu0 0.0
      %361 = vmatprep.subr.mxu0 0.0
      %362 = vmatpush1.msra.mxu0 0.0
      %363 = vmatprep.subr.mxu0 0.0
      %364 = vmatpush1.msra.mxu0 0.0
      %365 = vmatprep.subr.mxu0 0.0
      %366 = vmatpush1.msra.mxu0 0.0
      %367 = vmatprep.subr.mxu0 0.0
      %368 = vmatpush1.msra.mxu0 0.0
      %369 = vmatprep.subr.mxu0 0.0
      %370 = vmatpush1.msra.mxu0 0.0
      %371 = vmatprep.subr.mxu0 0.0
      %372 = vmatpush1.msra.mxu0 0.0
      %373 = vmatprep.subr.mxu0 0.0
      %374 = vmatpush1.msra.mxu0 0.0
      %375 = vmatprep.subr.mxu0 0.0
      %376 = vmatpush1.msra.mxu0 0.0
      %377 = vmatprep.subr.mxu0 0.0
      %378 = vmatpush1.msra.mxu0 0.0
      %379 = vmatprep.subr.mxu0 0.0
      %380 = vmatpush1.msra.mxu0 0.0
      %381 = vmatprep.subr.mxu0 0.0
      %382 = vmatpush1.msra.mxu0 0.0
      %383 = vmatprep.subr.mxu0 0.0
      %384 = vmatpush1.msra.mxu0 0.0
      %385 = vmatprep.subr.mxu0 0.0
      %386 = vmatpush1.msra.mxu0 0.0
      %387 = vmatprep.subr.mxu0 0.0
      %388 = vmatpush1.msra.mxu0 0.0
      %389 = vmatprep.subr.mxu0 0.0
      %390 = vmatpush1.msra.mxu0 0.0
      %391 = vmatprep.subr.mxu0 0.0
      %392 = vmatpush1.msra.mxu0 0.0
      %393 = vmatprep.subr.mxu0 0.0
      %394 = vmatpush1.msra.mxu0 0.0
      %395 = vmatprep.subr.mxu0 0.0
      %396 = vmatpush1.msra.mxu0 0.0
      %397 = vmatprep.subr.mxu0 0.0
      %398 = vmatpush1.msra.mxu0 0.0
      %399 = vmatprep.subr.mxu0 0.0
      %400 = vmatpush1.msra.mxu0 0.0
      %401 = vmatprep.subr.mxu0 0.0
      %402 = vmatpush1.msra.mxu0 0.0
      %403 = vmatprep.subr.mxu0 0.0
      %404 = vmatpush1.msra.mxu0 0.0
      %405 = vmatprep.subr.mxu0 0.0
      %406 = vmatpush1.msra.mxu0 0.0
      %407 = vmatprep.subr.mxu0 0.0
      %408 = vmatpush1.msra.mxu0 0.0
      %409 = vmatprep.subr.mxu0 0.0
      %410 = vmatpush1.msra.mxu0 0.0
      %411 = vmatprep.subr.mxu0 0.0
      %412 = vmatpush1.msra.mxu0 0.0
      %413 = vmatprep.subr.mxu0 0.0
      %414 = vmatpush1.msra.mxu0 0.0
      %415 = vmatprep.subr.mxu0 0.0
      %416 = vmatpush1.msra.mxu0 0.0
      %417 = vmatprep.mubr.f32.mxu0 0.0
      %418 = vmatmul.mubr.f32.gmra.mrb[0].mxu0 %v346
      %v419 = vpop.f32.mrb[0].mxu0
      %v420 = vadd.f32 0.0, %v419
      %v421 = vpop.f32.mrb[0].mxu0
      %v422 = vadd.f32 0.0, %v421
      %423 = vdwg.mxu0
      %v424 = vadd.f32 %v420, %v422
      %425 = vadd.xlane.f32.xlu0 %v424
      %v426 = vpop.xlane.xlu0 %425
      %vm427 = vcmask 7168
      %428 = vst.msk [vmem:[%s298] sm:$0xff] %vm427, %v426
      %v429 = vmul.f32 %v420, %v420
      %v430 = vmul.f32 %v422, %v422
      %v431 = vadd.f32 %v429, %v430
      %432 = vadd.xlane.f32.xlu0 %v431
      %v433 = vpop.xlane.xlu0 %432
      %434 = vst.msk [vmem:[%s305] sm:$0xff] %vm427, %v433
      %p435 = scmp.lt.s32.totalorder %s23, 1
      %s436 = scalar_select %p435, %s23, 1
      %p437 = scmp.lt.s32.totalorder %s24, 0
      %s438 = scalar_select %p437, %s24, 0
      %s439 = sadd.s32 %s438, %s436
      %s440 = smul.addr %s439, 8
      %s441 = scalar_lea.vmem %s5, %s440
      %p442 = scmp.lt.s32.totalorder %s23, 1
      %s443 = scalar_select %p442, %s23, 1
      %p444 = scmp.lt.s32.totalorder %s24, 0
      %s445 = scalar_select %p444, %s24, 0
      %s446 = sadd.s32 %s445, %s443
      %s447 = smul.addr %s446, 8
      %s448 = scalar_lea.vmem %s6, %s447
      // Predicated region
      $region41: #{deconv_bn_relu_forward.6} parent=39 // pred_check
        %p449 = pneg %p163
      $region42: #{deconv_bn_relu_forward.6} parent=39 // pred_check_branch
        %451 = sbr.rel (%p449) target = $region44
      $region43: #{deconv_bn_relu_forward.6} parent=39 // pred_region
        _
      $region44: #{deconv_bn_relu_forward.6} parent=39 // pred_fallthru
        _
      // Predicated region
      $region45: #{deconv_bn_relu_forward.6} parent=39 // pred_check
        %p452 = pneg %p191
      $region46: #{deconv_bn_relu_forward.6} parent=39 // pred_check_branch
        %454 = sbr.rel (%p452) target = $region48
      $region47: #{deconv_bn_relu_forward.6} parent=39 // pred_region
        _
      $region48: #{deconv_bn_relu_forward.6} parent=39 // pred_fallthru
        _
    $region40: #{deconv_bn_relu_forward.6} parent=5 // pred_fallthru
      _
    %p455 = scmp.le.s32.totalorder 2, %s14
    // Predicated region
    $region49: #{deconv_bn_relu_forward.6} parent=5 // pred_check
      %p456 = pneg %p455
    $region50: #{deconv_bn_relu_forward.6} parent=5 // pred_check_branch
      %458 = sbr.rel (%p456) target = $region52
    $region51: #{deconv_bn_relu_forward.6} parent=5 // pred_region
      %s459 = ssub.s32 %s14, 2
      // Predicated region
      $region53: #{deconv_bn_relu_forward.6} parent=51 // pred_check
        %p460 = pneg %p169
      $region54: #{deconv_bn_relu_forward.6} parent=51 // pred_check_branch
        %462 = sbr.rel (%p460) target = $region56
      $region55: #{deconv_bn_relu_forward.6} parent=51 // pred_region
        %p463 = scmp.lt.s32.totalorder %s25, 1
        %s464 = scalar_select %p463, %s25, 1
        %p465 = scmp.lt.s32.totalorder %s26, 0
        %s466 = scalar_select %p465, %s26, 0
        %s467 = sadd.s32 %s466, %s464
        %s468 = smul.addr %s467, 8
        %s469 = scalar_lea.vmem %s5, %s468
      $region56: #{deconv_bn_relu_forward.6} parent=51 // pred_fallthru
        _
      // Predicated region
      $region57: #{deconv_bn_relu_forward.6} parent=51 // pred_check
        %p470 = pneg %p197
      $region58: #{deconv_bn_relu_forward.6} parent=51 // pred_check_branch
        %472 = sbr.rel (%p470) target = $region60
      $region59: #{deconv_bn_relu_forward.6} parent=51 // pred_region
        %p473 = scmp.lt.s32.totalorder %s25, 1
        %s474 = scalar_select %p473, %s25, 1
        %p475 = scmp.lt.s32.totalorder %s26, 0
        %s476 = scalar_select %p475, %s26, 0
        %s477 = sadd.s32 %s476, %s474
        %s478 = smul.addr %s477, 8
        %s479 = scalar_lea.vmem %s6, %s478
      $region60: #{deconv_bn_relu_forward.6} parent=51 // pred_fallthru
        _
    $region52: #{deconv_bn_relu_forward.6} parent=5 // pred_fallthru
      _
  $region6: #{deconv_bn_relu_forward.6} parent=0 // loop_footer
    %s18 = sadd.s32 1, %s14
  $region7: #{deconv_bn_relu_forward.6} parent=0 // loop_footer_branch
    %13 = sbr.rel target = $region3
  $region8: #{deconv_bn_relu_forward.6} parent=0 // loop_exit
    _

// kernel: deconv_bn_relu_forward.7
$region0: #{deconv_bn_relu_forward.7}
  #allocation0 [shape = 'u32[]', space=smem, size = 0x4, offset = 0x4, fixed_abs, tag = 'smem constant byte address 0x4 - core index']
  #allocation1 [shape = 'u32[144,128]{1,0:T(1,128)}', space=vmem, size = 0x12000, scoped, tag = 'internal scratch']
  #allocation2 [shape = 'f32[1]{0:T(128)S(6)}', space=smem, size = 0x200, scoped, tag = 'scoped memory for deconv_bn_relu_forward.7']
  #allocation3 [shape = 'f32[1]{0:T(128)S(6)}', space=smem, size = 0x200, scoped, tag = 'scoped memory for deconv_bn_relu_forward.7']
  %s0 = inlined_call_operand.vmem [shape: bf16[2,4,256], index: 0, kind: input, shape index: {}]
  %s1 = inlined_call_operand.vmem [shape: f32[2,8,256], index: 1, kind: input, shape index: {}]
  %s2 = inlined_call_operand.vmem [shape: f32[8,4], index: 2, kind: input, shape index: {}]
  %s3 = inlined_call_operand.vmem [shape: f32[4,1], index: 3, kind: input, shape index: {}]
  %s4 = inlined_call_operand.vmem [shape: f32[4,1], index: 4, kind: input, shape index: {}]
  %s5 = inlined_call_operand.<no memory space> [shape: f32[1], index: 5, kind: input, shape index: {}]
  %s6 = inlined_call_operand.vmem [shape: f32[8,1], index: 6, kind: input, shape index: {}]
  %s7 = inlined_call_operand.vmem [shape: f32[8,1], index: 7, kind: input, shape index: {}]
  %s8 = inlined_call_operand.<no memory space> [shape: f32[1], index: 8, kind: input, shape index: {}]
  %s9 = inlined_call_operand.vmem [shape: f32[2,8,256], index: 9, kind: output, shape index: {}]
  %s10 = sld [smem:[#allocation0]]
  $region69: #{deconv_bn_relu_forward.7} parent=0
    _
  %s12 = ssub.s32 1, %s10
  %s13 = scalar_select 0, %s12, %s10
  %14 = sst [smem:[#allocation2]] %s5
  %15 = sst [smem:[#allocation3]] %s8
  loop: start=0, step=1, limit=4
  $region2: #{deconv_bn_relu_forward.7} parent=0 // loop_pre_header
    _
  $region3: #{deconv_bn_relu_forward.7} parent=0 // loop_header
    %s17 = sphi 0, %s21
    %p18 = scmp.ge.s32.totalorder %s17, 4
    %s24 = sphi 0, %s36
    %s25 = sphi 0, %s32
    %s26 = sphi 0, %s24
    %s27 = sphi 0, %s25
    %s28 = sphi 0, %s26
    %s29 = sphi 0, %s27
    %s41 = sphi 0, %s43
    %s44 = sphi 0, %s41
    %s45 = sphi 0, %s44
    %s61 = sphi 0, %s45
    %s69 = sphi 0, %s71
    %s72 = sphi 0, %s69
    %s73 = sphi 0, %s72
    %s89 = sphi 0, %s73
    %s93 = sphi 0, %s93
    %s95 = sphi 0, %s93
    %s96 = sphi 0, %s95
    %s110 = sphi 0, %s96
    %s114 = sphi 0, %s114
    %s116 = sphi 0, %s114
    %s117 = sphi 0, %s116
    %s131 = sphi 0, %s117
    %s135 = sphi 0, %s135
    %s137 = sphi 0, %s135
    %s138 = sphi 0, %s137
    %s152 = sphi 0, %s138
    %s156 = sphi 0, %s156
    %s158 = sphi 0, %s156
    %s159 = sphi 0, %s158
    %s173 = sphi 0, %s159
    %s177 = sphi 0, %s177
    %s179 = sphi 0, %s177
    %s180 = sphi 0, %s179
    %s194 = sphi 0, %s180
    %s198 = sphi 0, %s198
    %s200 = sphi 0, %s198
    %s201 = sphi 0, %s200
    %s215 = sphi 0, %s201
    %s219 = sphi 0, %s219
    %s221 = sphi 0, %s219
    %s222 = sphi 0, %s221
    %s236 = sphi 0, %s222
    %s244 = sphi 0, %s246
    %s247 = sphi 0, %s244
    %s248 = sphi 0, %s247
    %s264 = sphi 0, %s248
  $region4: #{deconv_bn_relu_forward.7} parent=0 // loop_header_branch
    %20 = sbr.rel (%p18) target = $region8
  $region5: #{deconv_bn_relu_forward.7} parent=0 // loop_body
    %s22 = ssub.s32 %s17, 1
    %s23 = ssub.s32 %s17, 2
    %s30 = sadd.s32 1, %s25
    %p31 = scmp.ge.s32.totalorder %s30, 1
    %s32 = scalar_select %p31, 0, %s30
    %s33 = sadd.s32 1, %s24
    %s34 = scalar_select %p31, %s33, %s24
    %p35 = scmp.ge.s32.totalorder %s34, 2
    %s36 = scalar_select %p35, 0, %s34
    %s37 = ssub.s32 %s24, %s36
    %s38 = ssub.s32 %s25, %s32
    %s39 = sor.u32 %s37, %s38
    %p40 = scmp.eq.s32.totalorder %s39, 0
    %s42 = sadd.s32 %s41, 1
    %s43 = scalar_select %p40, %s41, %s42
    %p46 = pneg %p40
    %p47 = scmp.eq.s32.totalorder %s17, 1
    %p48 = por %p46, %p47
    %p49 = scmp.ne.s32.totalorder %s41, %s44
    %p50 = scmp.eq.s32.totalorder %s17, 0
    %p51 = por %p49, %p50
    %p52 = scmp.ne.s32.totalorder %s41, %s44
    %p53 = scmp.eq.s32.totalorder %s22, 1
    %p54 = por %p52, %p53
    %p55 = scmp.ne.s32.totalorder %s44, %s45
    %p56 = scmp.eq.s32.totalorder %s22, 0
    %p57 = por %p55, %p56
    %p58 = scmp.ne.s32.totalorder %s44, %s45
    %p59 = scmp.eq.s32.totalorder %s23, 1
    %p60 = por %p58, %p59
    %p62 = scmp.ne.s32.totalorder %s45, %s61
    %p63 = scmp.eq.s32.totalorder %s23, 0
    %p64 = por %p62, %p63
    %s65 = ssub.s32 %s24, %s36
    %s66 = ssub.s32 %s25, %s32
    %s67 = sor.u32 %s65, %s66
    %p68 = scmp.eq.s32.totalorder %s67, 0
    %s70 = sadd.s32 %s69, 1
    %s71 = scalar_select %p68, %s69, %s70
    %p74 = pneg %p68
    %p75 = scmp.eq.s32.totalorder %s17, 1
    %p76 = por %p74, %p75
    %p77 = scmp.ne.s32.totalorder %s69, %s72
    %p78 = scmp.eq.s32.totalorder %s17, 0
    %p79 = por %p77, %p78
    %p80 = scmp.ne.s32.totalorder %s69, %s72
    %p81 = scmp.eq.s32.totalorder %s22, 1
    %p82 = por %p80, %p81
    %p83 = scmp.ne.s32.totalorder %s72, %s73
    %p84 = scmp.eq.s32.totalorder %s22, 0
    %p85 = por %p83, %p84
    %p86 = scmp.ne.s32.totalorder %s72, %s73
    %p87 = scmp.eq.s32.totalorder %s23, 1
    %p88 = por %p86, %p87
    %p90 = scmp.ne.s32.totalorder %s73, %s89
    %p91 = scmp.eq.s32.totalorder %s23, 0
    %p92 = por %p90, %p91
    %s94 = sadd.s32 %s93, 1
    %p97 = scmp.eq.s32.totalorder %s17, 1
    %p98 = scmp.ne.s32.totalorder %s93, %s95
    %p99 = scmp.eq.s32.totalorder %s17, 0
    %p100 = por %p98, %p99
    %p101 = scmp.ne.s32.totalorder %s93, %s95
    %p102 = scmp.eq.s32.totalorder %s22, 1
    %p103 = por %p101, %p102
    %p104 = scmp.ne.s32.totalorder %s95, %s96
    %p105 = scmp.eq.s32.totalorder %s22, 0
    %p106 = por %p104, %p105
    %p107 = scmp.ne.s32.totalorder %s95, %s96
    %p108 = scmp.eq.s32.totalorder %s23, 1
    %p109 = por %p107, %p108
    %p111 = scmp.ne.s32.totalorder %s96, %s110
    %p112 = scmp.eq.s32.totalorder %s23, 0
    %p113 = por %p111, %p112
    %s115 = sadd.s32 %s114, 1
    %p118 = scmp.eq.s32.totalorder %s17, 1
    %p119 = scmp.ne.s32.totalorder %s114, %s116
    %p120 = scmp.eq.s32.totalorder %s17, 0
    %p121 = por %p119, %p120
    %p122 = scmp.ne.s32.totalorder %s114, %s116
    %p123 = scmp.eq.s32.totalorder %s22, 1
    %p124 = por %p122, %p123
    %p125 = scmp.ne.s32.totalorder %s116, %s117
    %p126 = scmp.eq.s32.totalorder %s22, 0
    %p127 = por %p125, %p126
    %p128 = scmp.ne.s32.totalorder %s116, %s117
    %p129 = scmp.eq.s32.totalorder %s23, 1
    %p130 = por %p128, %p129
    %p132 = scmp.ne.s32.totalorder %s117, %s131
    %p133 = scmp.eq.s32.totalorder %s23, 0
    %p134 = por %p132, %p133
    %s136 = sadd.s32 %s135, 1
    %p139 = scmp.eq.s32.totalorder %s17, 1
    %p140 = scmp.ne.s32.totalorder %s135, %s137
    %p141 = scmp.eq.s32.totalorder %s17, 0
    %p142 = por %p140, %p141
    %p143 = scmp.ne.s32.totalorder %s135, %s137
    %p144 = scmp.eq.s32.totalorder %s22, 1
    %p145 = por %p143, %p144
    %p146 = scmp.ne.s32.totalorder %s137, %s138
    %p147 = scmp.eq.s32.totalorder %s22, 0
    %p148 = por %p146, %p147
    %p149 = scmp.ne.s32.totalorder %s137, %s138
    %p150 = scmp.eq.s32.totalorder %s23, 1
    %p151 = por %p149, %p150
    %p153 = scmp.ne.s32.totalorder %s138, %s152
    %p154 = scmp.eq.s32.totalorder %s23, 0
    %p155 = por %p153, %p154
    %s157 = sadd.s32 %s156, 1
    %p160 = scmp.eq.s32.totalorder %s17, 1
    %p161 = scmp.ne.s32.totalorder %s156, %s158
    %p162 = scmp.eq.s32.totalorder %s17, 0
    %p163 = por %p161, %p162
    %p164 = scmp.ne.s32.totalorder %s156, %s158
    %p165 = scmp.eq.s32.totalorder %s22, 1
    %p166 = por %p164, %p165
    %p167 = scmp.ne.s32.totalorder %s158, %s159
    %p168 = scmp.eq.s32.totalorder %s22, 0
    %p169 = por %p167, %p168
    %p170 = scmp.ne.s32.totalorder %s158, %s159
    %p171 = scmp.eq.s32.totalorder %s23, 1
    %p172 = por %p170, %p171
    %p174 = scmp.ne.s32.totalorder %s159, %s173
    %p175 = scmp.eq.s32.totalorder %s23, 0
    %p176 = por %p174, %p175
    %s178 = sadd.s32 %s177, 1
    %p181 = scmp.eq.s32.totalorder %s17, 1
    %p182 = scmp.ne.s32.totalorder %s177, %s179
    %p183 = scmp.eq.s32.totalorder %s17, 0
    %p184 = por %p182, %p183
    %p185 = scmp.ne.s32.totalorder %s177, %s179
    %p186 = scmp.eq.s32.totalorder %s22, 1
    %p187 = por %p185, %p186
    %p188 = scmp.ne.s32.totalorder %s179, %s180
    %p189 = scmp.eq.s32.totalorder %s22, 0
    %p190 = por %p188, %p189
    %p191 = scmp.ne.s32.totalorder %s179, %s180
    %p192 = scmp.eq.s32.totalorder %s23, 1
    %p193 = por %p191, %p192
    %p195 = scmp.ne.s32.totalorder %s180, %s194
    %p196 = scmp.eq.s32.totalorder %s23, 0
    %p197 = por %p195, %p196
    %s199 = sadd.s32 %s198, 1
    %p202 = scmp.eq.s32.totalorder %s17, 1
    %p203 = scmp.ne.s32.totalorder %s198, %s200
    %p204 = scmp.eq.s32.totalorder %s17, 0
    %p205 = por %p203, %p204
    %p206 = scmp.ne.s32.totalorder %s198, %s200
    %p207 = scmp.eq.s32.totalorder %s22, 1
    %p208 = por %p206, %p207
    %p209 = scmp.ne.s32.totalorder %s200, %s201
    %p210 = scmp.eq.s32.totalorder %s22, 0
    %p211 = por %p209, %p210
    %p212 = scmp.ne.s32.totalorder %s200, %s201
    %p213 = scmp.eq.s32.totalorder %s23, 1
    %p214 = por %p212, %p213
    %p216 = scmp.ne.s32.totalorder %s201, %s215
    %p217 = scmp.eq.s32.totalorder %s23, 0
    %p218 = por %p216, %p217
    %s220 = sadd.s32 %s219, 1
    %p223 = scmp.eq.s32.totalorder %s17, 1
    %p224 = scmp.ne.s32.totalorder %s219, %s221
    %p225 = scmp.eq.s32.totalorder %s17, 0
    %p226 = por %p224, %p225
    %p227 = scmp.ne.s32.totalorder %s219, %s221
    %p228 = scmp.eq.s32.totalorder %s22, 1
    %p229 = por %p227, %p228
    %p230 = scmp.ne.s32.totalorder %s221, %s222
    %p231 = scmp.eq.s32.totalorder %s22, 0
    %p232 = por %p230, %p231
    %p233 = scmp.ne.s32.totalorder %s221, %s222
    %p234 = scmp.eq.s32.totalorder %s23, 1
    %p235 = por %p233, %p234
    %p237 = scmp.ne.s32.totalorder %s222, %s236
    %p238 = scmp.eq.s32.totalorder %s23, 0
    %p239 = por %p237, %p238
    %s240 = ssub.s32 %s24, %s36
    %s241 = ssub.s32 %s25, %s32
    %s242 = sor.u32 %s240, %s241
    %p243 = scmp.eq.s32.totalorder %s242, 0
    %s245 = sadd.s32 %s244, 1
    %s246 = scalar_select %p243, %s244, %s245
    %p249 = pneg %p243
    %p250 = scmp.eq.s32.totalorder %s17, 1
    %p251 = por %p249, %p250
    %p252 = scmp.ne.s32.totalorder %s244, %s247
    %p253 = scmp.eq.s32.totalorder %s17, 0
    %p254 = por %p252, %p253
    %p255 = scmp.ne.s32.totalorder %s244, %s247
    %p256 = scmp.eq.s32.totalorder %s22, 1
    %p257 = por %p255, %p256
    %p258 = scmp.ne.s32.totalorder %s247, %s248
    %p259 = scmp.eq.s32.totalorder %s22, 0
    %p260 = por %p258, %p259
    %p261 = scmp.ne.s32.totalorder %s247, %s248
    %p262 = scmp.eq.s32.totalorder %s23, 1
    %p263 = por %p261, %p262
    %p265 = scmp.ne.s32.totalorder %s248, %s264
    %p266 = scmp.eq.s32.totalorder %s23, 0
    %p267 = por %p265, %p266
    %p268 = scmp.le.s32.totalorder 1, %s17
    %p269 = scmp.lt.s32.totalorder %s17, 3
    %p270 = pnand %p268, %p269
    %p271 = pneg %p270
    // Predicated region
    $region9: #{deconv_bn_relu_forward.7} parent=5 // pred_check
      _
    $region10: #{deconv_bn_relu_forward.7} parent=5 // pred_check_branch
      %273 = sbr.rel (%p270) target = $region12
    $region11: #{deconv_bn_relu_forward.7} parent=5 // pred_region
      %s274 = ssub.s32 %s17, 1
      // Predicated region
      $region13: #{deconv_bn_relu_forward.7} parent=11 // pred_check
        %p275 = pneg %p106
      $region14: #{deconv_bn_relu_forward.7} parent=11 // pred_check_branch
        %277 = sbr.rel (%p275) target = $region16
      $region15: #{deconv_bn_relu_forward.7} parent=11 // pred_region
        _
      $region16: #{deconv_bn_relu_forward.7} parent=11 // pred_fallthru
        _
      // Predicated region
      $region17: #{deconv_bn_relu_forward.7} parent=11 // pred_check
        %p278 = pneg %p127
      $region18: #{deconv_bn_relu_forward.7} parent=11 // pred_check_branch
        %280 = sbr.rel (%p278) target = $region20
      $region19: #{deconv_bn_relu_forward.7} parent=11 // pred_region
        _
      $region20: #{deconv_bn_relu_forward.7} parent=11 // pred_fallthru
        _
      // Predicated region
      $region21: #{deconv_bn_relu_forward.7} parent=11 // pred_check
        %p281 = pneg %p148
      $region22: #{deconv_bn_relu_forward.7} parent=11 // pred_check_branch
        %283 = sbr.rel (%p281) target = $region24
      $region23: #{deconv_bn_relu_forward.7} parent=11 // pred_region
        _
      $region24: #{deconv_bn_relu_forward.7} parent=11 // pred_fallthru
        _
      // Predicated region
      $region25: #{deconv_bn_relu_forward.7} parent=11 // pred_check
        %p284 = pneg %p169
      $region26: #{deconv_bn_relu_forward.7} parent=11 // pred_check_branch
        %286 = sbr.rel (%p284) target = $region28
      $region27: #{deconv_bn_relu_forward.7} parent=11 // pred_region
        _
      $region28: #{deconv_bn_relu_forward.7} parent=11 // pred_fallthru
        _
      // Predicated region
      $region29: #{deconv_bn_relu_forward.7} parent=11 // pred_check
        %p287 = pneg %p190
      $region30: #{deconv_bn_relu_forward.7} parent=11 // pred_check_branch
        %289 = sbr.rel (%p287) target = $region32
      $region31: #{deconv_bn_relu_forward.7} parent=11 // pred_region
        _
      $region32: #{deconv_bn_relu_forward.7} parent=11 // pred_fallthru
        _
      // Predicated region
      $region33: #{deconv_bn_relu_forward.7} parent=11 // pred_check
        %p290 = pneg %p211
      $region34: #{deconv_bn_relu_forward.7} parent=11 // pred_check_branch
        %292 = sbr.rel (%p290) target = $region36
      $region35: #{deconv_bn_relu_forward.7} parent=11 // pred_region
        _
      $region36: #{deconv_bn_relu_forward.7} parent=11 // pred_fallthru
        _
      // Predicated region
      $region37: #{deconv_bn_relu_forward.7} parent=11 // pred_check
        %p293 = pneg %p232
      $region38: #{deconv_bn_relu_forward.7} parent=11 // pred_check_branch
        %295 = sbr.rel (%p293) target = $region40
      $region39: #{deconv_bn_relu_forward.7} parent=11 // pred_region
        _
      $region40: #{deconv_bn_relu_forward.7} parent=11 // pred_fallthru
        _
    $region12: #{deconv_bn_relu_forward.7} parent=5 // pred_fallthru
      _
    %p296 = scmp.lt.s32.totalorder %s17, 2
    // Predicated region
    $region41: #{deconv_bn_relu_forward.7} parent=5 // pred_check
      %p297 = pneg %p296
    $region42: #{deconv_bn_relu_forward.7} parent=5 // pred_check_branch
      %299 = sbr.rel (%p297) target = $region44
    $region43: #{deconv_bn_relu_forward.7} parent=5 // pred_region
      // Predicated region
      $region45: #{deconv_bn_relu_forward.7} parent=43 // pred_check
        %p300 = pneg %p51
      $region46: #{deconv_bn_relu_forward.7} parent=43 // pred_check_branch
        %302 = sbr.rel (%p300) target = $region48
      $region47: #{deconv_bn_relu_forward.7} parent=43 // pred_region
        %s303 = smul.u32 2, %s25
        %p304 = scmp.lt.s32.totalorder %s24, 1
        %s305 = scalar_select %p304, %s24, 1
        %p306 = scmp.lt.s32.totalorder %s303, 1
        %s307 = scalar_select %p306, %s303, 1
        %s308 = smul.addr %s305, 2
        %s309 = sadd.s32 %s307, %s308
        %s310 = smul.addr %s309, 2
        %s311 = scalar_lea.vmem %s0, %s310
        %s312 = smul.u32 2, %s25
      $region48: #{deconv_bn_relu_forward.7} parent=43 // pred_fallthru
        _
      // Predicated region
      $region49: #{deconv_bn_relu_forward.7} parent=43 // pred_check
        %p313 = pneg %p79
      $region50: #{deconv_bn_relu_forward.7} parent=43 // pred_check_branch
        %315 = sbr.rel (%p313) target = $region52
      $region51: #{deconv_bn_relu_forward.7} parent=43 // pred_region
        %s316 = smul.u32 2, %s25
        %p317 = scmp.lt.s32.totalorder %s24, 1
        %s318 = scalar_select %p317, %s24, 1
        %p319 = scmp.lt.s32.totalorder %s316, 1
        %s320 = scalar_select %p319, %s316, 1
        %s321 = smul.addr %s318, 2
        %s322 = sadd.s32 %s320, %s321
        %s323 = smul.addr %s322, 8
        %s324 = scalar_lea.vmem %s1, %s323
        %s325 = smul.u32 2, %s25
      $region52: #{deconv_bn_relu_forward.7} parent=43 // pred_fallthru
        _
    $region44: #{deconv_bn_relu_forward.7} parent=5 // pred_fallthru
      _
    %p326 = scmp.le.s32.totalorder 1, %s17
    %p327 = scmp.lt.s32.totalorder %s17, 3
    %p328 = pnand %p326, %p327
    %p329 = pneg %p328
    // Predicated region
    $region53: #{deconv_bn_relu_forward.7} parent=5 // pred_check
      _
    $region54: #{deconv_bn_relu_forward.7} parent=5 // pred_check_branch
      %331 = sbr.rel (%p328) target = $region56
    $region55: #{deconv_bn_relu_forward.7} parent=5 // pred_region
      %s332 = ssub.s32 %s17, 1
      %s333 = smul.u32 2, %s27
      %p334 = scmp.lt.s32.totalorder %s26, 1
      %s335 = scalar_select %p334, %s26, 1
      %p336 = scmp.lt.s32.totalorder %s333, 1
      %s337 = scalar_select %p336, %s333, 1
      %s338 = smul.addr %s335, 2
      %s339 = sadd.s32 %s337, %s338
      %s340 = smul.addr %s339, 2
      %s341 = scalar_lea.vmem %s0, %s340
      %p342 = pneg %p57
      %p343 = pneg %p54
      %s344 = smul.u32 2, %s27
      %p345 = scmp.lt.s32.totalorder %s26, 1
      %s346 = scalar_select %p345, %s26, 1
      %p347 = scmp.lt.s32.totalorder %s344, 1
      %s348 = scalar_select %p347, %s344, 1
      %s349 = smul.addr %s346, 2
      %s350 = sadd.s32 %s348, %s349
      %s351 = smul.addr %s350, 8
      %s352 = scalar_lea.vmem %s1, %s351
      %p353 = pneg %p85
      %p354 = pneg %p82
      %p355 = pneg %p106
      %p356 = pneg %p103
      %p357 = pneg %p127
      %p358 = pneg %p124
      %p359 = pneg %p148
      %p360 = pneg %p145
      %p361 = pneg %p169
      %p362 = pneg %p166
      %p363 = pneg %p190
      %p364 = pneg %p187
      %p365 = pneg %p211
      %p366 = pneg %p208
      %p367 = pneg %p232
      %p368 = pneg %p229
      %p369 = pneg %p260
      %p370 = pneg %p257
      %s371 = smul.u32 2, %s27
      %p372 = scmp.lt.s32.totalorder %s26, 1
      %s373 = scalar_select %p372, %s26, 1
      %p374 = scmp.lt.s32.totalorder %s371, 1
      %s375 = scalar_select %p374, %s371, 1
      %s376 = smul.addr %s373, 2
      %s377 = sadd.s32 %s375, %s376
      %s378 = smul.addr %s377, 8
      %s379 = scalar_lea.vmem %s9, %s378
      %s380 = smul.u32 2, %s27
      %p381 = scmp.lt.s32.totalorder %s26, 1
      %s382 = scalar_select %p381, %s26, 1
      %p383 = scmp.lt.s32.totalorder %s380, 1
      %s384 = scalar_select %p383, %s380, 1
      %s385 = smul.addr %s382, 2
      %s386 = sadd.s32 %s384, %s385
      %s387 = smul.addr %s386, 2
      %s388 = scalar_lea.vmem %s0, %s387
      %s389 = smul.u32 2, %s27
      %s390 = smul.u32 2, %s27
      %p391 = scmp.lt.s32.totalorder %s26, 1
      %s392 = scalar_select %p391, %s26, 1
      %p393 = scmp.lt.s32.totalorder %s390, 1
      %s394 = scalar_select %p393, %s390, 1
      %s395 = smul.addr %s392, 2
      %s396 = sadd.s32 %s394, %s395
      %s397 = smul.addr %s396, 8
      %s398 = scalar_lea.vmem %s1, %s397
      %s399 = smul.u32 2, %s27
      %s400 = smul.u32 2, %s27
      %p401 = scmp.lt.s32.totalorder %s26, 1
      %s402 = scalar_select %p401, %s26, 1
      %p403 = scmp.lt.s32.totalorder %s400, 1
      %s404 = scalar_select %p403, %s400, 1
      %s405 = smul.addr %s402, 2
      %s406 = sadd.s32 %s404, %s405
      %s407 = smul.addr %s406, 8
      %s408 = scalar_lea.vmem %s9, %s407
      %s409 = smul.u32 2, %s27
      %v410 = vld [vmem:[%s388] sm:$0xf]
      %v411 = vunpack.c.l.bf16 %v410
      %v412 = vld [vmem:[%s3] sm:$0xf]
      %414 = vset.pattern.permute.xlu0 0
      %415 = vperm.xlu0 %414, %v412
      %v416 = vpop.permute.xlu0 %415
      %v418 = vunpack.c.l.s4 839922192
      %v419 = vunpack.c.0.s8 %v418
      %v420 = vlaneseq
      %v421 = vshrl.u32 %v420, 7
      %v422 = vsub.s32 %v419, %v421
      %v423 = vrot.slane %v416, %v422
      %v425 = vmul.f32 %v411, %v423
      %v426 = vld [vmem:[%s4] sm:$0xf]
      %428 = vset.pattern.permute.xlu0 0
      %429 = vperm.xlu0 %428, %v426
      %v430 = vpop.permute.xlu0 %429
      %v432 = vunpack.c.l.s4 839922192
      %v433 = vunpack.c.0.s8 %v432
      %v434 = vlaneseq
      %v435 = vshrl.u32 %v434, 7
      %v436 = vsub.s32 %v433, %v435
      %v437 = vrot.slane %v430, %v436
      %v439 = vadd.f32 %v425, %v437
      %vm440 = vcmp.ge.f32.partialorder %v439, 0.0
      %s441 = sld [smem:[#allocation2]]
      %v442 = vstv %s441
      %v443 = vmul.f32 %v442, %v439
      %v444 = vsel %vm440, %v439, %v443
      %v445 = vld [vmem:[%s2] sm:$0xff]
      %v447 = vcombine.high %v444, %v444
      %vm448 = vcmask 31744
      %v450 = vsel %vm448, %v445, 0
      %vm452 = vcmask 1043456
      %v453 = vsel %vm452, %v444, 0
      %v455 = vsel %vm452, %v447, 0
      %457 = vmatprep.subr.mxu0 %v455
      %458 = vmatpush1.msra.mxu0 %v453
      %459 = vmatprep.subr.mxu0 0.0
      %460 = vmatpush1.msra.mxu0 0.0
      %461 = vmatprep.subr.mxu0 0.0
      %462 = vmatpush1.msra.mxu0 0.0
      %463 = vmatprep.subr.mxu0 0.0
      %464 = vmatpush1.msra.mxu0 0.0
      %465 = vmatprep.subr.mxu0 0.0
      %466 = vmatpush1.msra.mxu0 0.0
      %467 = vmatprep.subr.mxu0 0.0
      %468 = vmatpush1.msra.mxu0 0.0
      %469 = vmatprep.subr.mxu0 0.0
      %470 = vmatpush1.msra.mxu0 0.0
      %471 = vmatprep.subr.mxu0 0.0
      %472 = vmatpush1.msra.mxu0 0.0
      %473 = vmatprep.subr.mxu0 0.0
      %474 = vmatpush1.msra.mxu0 0.0
      %475 = vmatprep.subr.mxu0 0.0
      %476 = vmatpush1.msra.mxu0 0.0
      %477 = vmatprep.subr.mxu0 0.0
      %478 = vmatpush1.msra.mxu0 0.0
      %479 = vmatprep.subr.mxu0 0.0
      %480 = vmatpush1.msra.mxu0 0.0
      %481 = vmatprep.subr.mxu0 0.0
      %482 = vmatpush1.msra.mxu0 0.0
      %483 = vmatprep.subr.mxu0 0.0
      %484 = vmatpush1.msra.mxu0 0.0
      %485 = vmatprep.subr.mxu0 0.0
      %486 = vmatpush1.msra.mxu0 0.0
      %487 = vmatprep.subr.mxu0 0.0
      %488 = vmatpush1.msra.mxu0 0.0
      %489 = vmatprep.subr.mxu0 0.0
      %490 = vmatpush1.msra.mxu0 0.0
      %491 = vmatprep.subr.mxu0 0.0
      %492 = vmatpush1.msra.mxu0 0.0
      %493 = vmatprep.subr.mxu0 0.0
      %494 = vmatpush1.msra.mxu0 0.0
      %495 = vmatprep.subr.mxu0 0.0
      %496 = vmatpush1.msra.mxu0 0.0
      %497 = vmatprep.subr.mxu0 0.0
      %498 = vmatpush1.msra.mxu0 0.0
      %499 = vmatprep.subr.mxu0 0.0
      %500 = vmatpush1.msra.mxu0 0.0
      %501 = vmatprep.subr.mxu0 0.0
      %502 = vmatpush1.msra.mxu0 0.0
      %503 = vmatprep.subr.mxu0 0.0
      %504 = vmatpush1.msra.mxu0 0.0
      %505 = vmatprep.subr.mxu0 0.0
      %506 = vmatpush1.msra.mxu0 0.0
      %507 = vmatprep.subr.mxu0 0.0
      %508 = vmatpush1.msra.mxu0 0.0
      %509 = vmatprep.subr.mxu0 0.0
      %510 = vmatpush1.msra.mxu0 0.0
      %511 = vmatprep.subr.mxu0 0.0
      %512 = vmatpush1.msra.mxu0 0.0
      %513 = vmatprep.subr.mxu0 0.0
      %514 = vmatpush1.msra.mxu0 0.0
      %515 = vmatprep.subr.mxu0 0.0
      %516 = vmatpush1.msra.mxu0 0.0
      %517 = vmatprep.subr.mxu0 0.0
      %518 = vmatpush1.msra.mxu0 0.0
      %519 = vmatprep.subr.mxu0 0.0
      %520 = vmatpush1.msra.mxu0 0.0
      %521 = vmatprep.mubr.f32.mxu0 0.0
      %522 = vmatmul.mubr.f32.gmra.mrb[0].mxu0 %v450
      %v523 = vpop.f32.mrb[0].mxu0
      %v524 = vadd.f32 0.0, %v523
      %v525 = vpop.f32.mrb[0].mxu0
      %v526 = vadd.f32 0.0, %v525
      %527 = vdwg.mxu0
      %v528 = vld [vmem:[%s6] sm:$0xff]
      %530 = vset.pattern.permute.xlu0 0
      %531 = vperm.xlu0 %530, %v528
      %v532 = vpop.permute.xlu0 %531
      %v534 = vmul.f32 %v524, %v532
      %v535 = vmul.f32 %v526, %v532
      %v536 = vld [vmem:[%s7] sm:$0xff]
      %538 = vset.pattern.permute.xlu0 0
      %539 = vperm.xlu0 %538, %v536
      %v540 = vpop.permute.xlu0 %539
      %v542 = vadd.f32 %v534, %v540
      %v543 = vadd.f32 %v535, %v540
      %v544 = vld [vmem:[%s398] sm:$0xff]
      %v545 = vld [vmem:[%s398 + $0x8] sm:$0xff]
      %v546 = vadd.f32 %v542, %v544
      %v547 = vadd.f32 %v543, %v545
      %vm548 = vcmp.ge.f32.partialorder %v546, 0.0
      %vm549 = vcmp.ge.f32.partialorder %v547, 0.0
      %s550 = sld [smem:[#allocation3]]
      %v551 = vstv %s550
      %v552 = vmul.f32 %v551, %v546
      %v553 = vmul.f32 %v551, %v547
      %v554 = vsel %vm548, %v546, %v552
      %v555 = vsel %vm549, %v547, %v553
      %556 = vst [vmem:[%s408] sm:$0xff] %v554
      %557 = vst [vmem:[%s408 + $0x8] sm:$0xff] %v555
      %s558 = smul.u32 2, %s27
      %p559 = scmp.lt.s32.totalorder %s26, 1
      %s560 = scalar_select %p559, %s26, 1
      %p561 = scmp.lt.s32.totalorder %s558, 1
      %s562 = scalar_select %p561, %s558, 1
      %s563 = smul.addr %s560, 2
      %s564 = sadd.s32 %s562, %s563
      %s565 = smul.addr %s564, 8
      %s566 = scalar_lea.vmem %s9, %s565
      // Predicated region
      $region57: #{deconv_bn_relu_forward.7} parent=55 // pred_check
        %p567 = pneg %p257
      $region58: #{deconv_bn_relu_forward.7} parent=55 // pred_check_branch
        %569 = sbr.rel (%p567) target = $region60
      $region59: #{deconv_bn_relu_forward.7} parent=55 // pred_region
        %s570 = smul.u32 2, %s27
      $region60: #{deconv_bn_relu_forward.7} parent=55 // pred_fallthru
        _
    $region56: #{deconv_bn_relu_forward.7} parent=5 // pred_fallthru
      _
    %p571 = scmp.le.s32.totalorder 2, %s17
    // Predicated region
    $region61: #{deconv_bn_relu_forward.7} parent=5 // pred_check
      %p572 = pneg %p571
    $region62: #{deconv_bn_relu_forward.7} parent=5 // pred_check_branch
      %574 = sbr.rel (%p572) target = $region64
    $region63: #{deconv_bn_relu_forward.7} parent=5 // pred_region
      %s575 = ssub.s32 %s17, 2
      // Predicated region
      $region65: #{deconv_bn_relu_forward.7} parent=63 // pred_check
        %p576 = pneg %p263
      $region66: #{deconv_bn_relu_forward.7} parent=63 // pred_check_branch
        %578 = sbr.rel (%p576) target = $region68
      $region67: #{deconv_bn_relu_forward.7} parent=63 // pred_region
        %s579 = smul.u32 2, %s29
        %p580 = scmp.lt.s32.totalorder %s28, 1
        %s581 = scalar_select %p580, %s28, 1
        %p582 = scmp.lt.s32.totalorder %s579, 1
        %s583 = scalar_select %p582, %s579, 1
        %s584 = smul.addr %s581, 2
        %s585 = sadd.s32 %s583, %s584
        %s586 = smul.addr %s585, 8
        %s587 = scalar_lea.vmem %s9, %s586
      $region68: #{deconv_bn_relu_forward.7} parent=63 // pred_fallthru
        _
    $region64: #{deconv_bn_relu_forward.7} parent=5 // pred_fallthru
      _
  $region6: #{deconv_bn_relu_forward.7} parent=0 // loop_footer
    %s21 = sadd.s32 1, %s17
  $region7: #{deconv_bn_relu_forward.7} parent=0 // loop_footer_branch
    %16 = sbr.rel target = $region3
  $region8: #{deconv_bn_relu_forward.7} parent=0 // loop_exit
    _

// kernel: deconv_bn_relu_forward.5
$region0: #{deconv_bn_relu_forward.5}
  #allocation0 [shape = 'u32[]', space=smem, size = 0x4, offset = 0x4, fixed_abs, tag = 'smem constant byte address 0x4 - core index']
  #allocation1 [shape = 'u32[144,128]{1,0:T(1,128)}', space=vmem, size = 0x12000, scoped, tag = 'internal scratch']
  #allocation2 [shape = 'f32[4,512]{1,0:T(4,128)}', space=vmem, size = 0x2000, scoped, tag = 'scratch operand']
  #allocation3 [shape = 'f32[1]{0:T(128)S(6)}', space=smem, size = 0x200, scoped, tag = 'scoped memory for deconv_bn_relu_forward.5']
  %s0 = inlined_call_operand.vmem [shape: bf16[2,4,256], index: 0, kind: input, shape index: {}]
  %s1 = inlined_call_operand.vmem [shape: f32[9,4,4], index: 1, kind: input, shape index: {}]
  %s2 = inlined_call_operand.vmem [shape: f32[4,1], index: 2, kind: input, shape index: {}]
  %s3 = inlined_call_operand.vmem [shape: f32[4,1], index: 3, kind: input, shape index: {}]
  %s4 = inlined_call_operand.<no memory space> [shape: f32[1], index: 4, kind: input, shape index: {}]
  %s5 = inlined_call_operand.vmem [shape: bf16[2,4,256], index: 5, kind: output, shape index: {0}]
  %s6 = inlined_call_operand.vmem [shape: f32[2,4,1], index: 6, kind: output, shape index: {1}]
  %s7 = inlined_call_operand.vmem [shape: f32[2,4,1], index: 7, kind: output, shape index: {2}]
  %8 = xla_tuple %s5, %s6, %s7
  %s9 = sld [smem:[#allocation0]]
  $region69: #{deconv_bn_relu_forward.5} parent=0
    _
  %s11 = ssub.s32 1, %s9
  %s12 = scalar_select 0, %s11, %s9
  %13 = sst [smem:[#allocation3]] %s4
  loop: start=0, step=1, limit=4
  $region2: #{deconv_bn_relu_forward.5} parent=0 // loop_pre_header
    _
  $region3: #{deconv_bn_relu_forward.5} parent=0 // loop_header
    %s15 = sphi 0, %s19
    %p16 = scmp.ge.s32.totalorder %s15, 4
    %s25 = sphi 0, %s27
    %s28 = sphi 0, %s25
    %s29 = sphi 0, %s28
    %s45 = sphi 0, %s29
    %s49 = sphi 0, %s49
    %s51 = sphi 0, %s49
    %s52 = sphi 0, %s51
    %s66 = sphi 0, %s52
    %s70 = sphi 0, %s70
    %s72 = sphi 0, %s70
    %s73 = sphi 0, %s72
    %s87 = sphi 0, %s73
    %s91 = sphi 0, %s91
    %s93 = sphi 0, %s91
    %s94 = sphi 0, %s93
    %s108 = sphi 0, %s94
    %s112 = sphi 0, %s112
    %s114 = sphi 0, %s112
    %s115 = sphi 0, %s114
    %s129 = sphi 0, %s115
    %s135 = sphi 0, %s137
    %s138 = sphi 0, %s135
    %s139 = sphi 0, %s138
    %s155 = sphi 0, %s139
    %s161 = sphi 0, %s163
    %s164 = sphi 0, %s161
    %s165 = sphi 0, %s164
    %s181 = sphi 0, %s165
    %s187 = sphi 0, %s189
    %s190 = sphi 0, %s187
    %s191 = sphi 0, %s190
    %s207 = sphi 0, %s191
  $region4: #{deconv_bn_relu_forward.5} parent=0 // loop_header_branch
    %18 = sbr.rel (%p16) target = $region8
  $region5: #{deconv_bn_relu_forward.5} parent=0 // loop_body
    %s20 = ssub.s32 %s15, 1
    %s21 = ssub.s32 %s15, 2
    %s22 = sadd.s32 %s15, 1
    %s23 = ssub.s32 %s15, %s22
    %p24 = scmp.eq.s32.totalorder %s23, 0
    %s26 = sadd.s32 %s25, 1
    %s27 = scalar_select %p24, %s25, %s26
    %p30 = pneg %p24
    %p31 = scmp.eq.s32.totalorder %s15, 1
    %p32 = por %p30, %p31
    %p33 = scmp.ne.s32.totalorder %s25, %s28
    %p34 = scmp.eq.s32.totalorder %s15, 0
    %p35 = por %p33, %p34
    %p36 = scmp.ne.s32.totalorder %s25, %s28
    %p37 = scmp.eq.s32.totalorder %s20, 1
    %p38 = por %p36, %p37
    %p39 = scmp.ne.s32.totalorder %s28, %s29
    %p40 = scmp.eq.s32.totalorder %s20, 0
    %p41 = por %p39, %p40
    %p42 = scmp.ne.s32.totalorder %s28, %s29
    %p43 = scmp.eq.s32.totalorder %s21, 1
    %p44 = por %p42, %p43
    %p46 = scmp.ne.s32.totalorder %s29, %s45
    %p47 = scmp.eq.s32.totalorder %s21, 0
    %p48 = por %p46, %p47
    %s50 = sadd.s32 %s49, 1
    %p53 = scmp.eq.s32.totalorder %s15, 1
    %p54 = scmp.ne.s32.totalorder %s49, %s51
    %p55 = scmp.eq.s32.totalorder %s15, 0
    %p56 = por %p54, %p55
    %p57 = scmp.ne.s32.totalorder %s49, %s51
    %p58 = scmp.eq.s32.totalorder %s20, 1
    %p59 = por %p57, %p58
    %p60 = scmp.ne.s32.totalorder %s51, %s52
    %p61 = scmp.eq.s32.totalorder %s20, 0
    %p62 = por %p60, %p61
    %p63 = scmp.ne.s32.totalorder %s51, %s52
    %p64 = scmp.eq.s32.totalorder %s21, 1
    %p65 = por %p63, %p64
    %p67 = scmp.ne.s32.totalorder %s52, %s66
    %p68 = scmp.eq.s32.totalorder %s21, 0
    %p69 = por %p67, %p68
    %s71 = sadd.s32 %s70, 1
    %p74 = scmp.eq.s32.totalorder %s15, 1
    %p75 = scmp.ne.s32.totalorder %s70, %s72
    %p76 = scmp.eq.s32.totalorder %s15, 0
    %p77 = por %p75, %p76
    %p78 = scmp.ne.s32.totalorder %s70, %s72
    %p79 = scmp.eq.s32.totalorder %s20, 1
    %p80 = por %p78, %p79
    %p81 = scmp.ne.s32.totalorder %s72, %s73
    %p82 = scmp.eq.s32.totalorder %s20, 0
    %p83 = por %p81, %p82
    %p84 = scmp.ne.s32.totalorder %s72, %s73
    %p85 = scmp.eq.s32.totalorder %s21, 1
    %p86 = por %p84, %p85
    %p88 = scmp.ne.s32.totalorder %s73, %s87
    %p89 = scmp.eq.s32.totalorder %s21, 0
    %p90 = por %p88, %p89
    %s92 = sadd.s32 %s91, 1
    %p95 = scmp.eq.s32.totalorder %s15, 1
    %p96 = scmp.ne.s32.totalorder %s91, %s93
    %p97 = scmp.eq.s32.totalorder %s15, 0
    %p98 = por %p96, %p97
    %p99 = scmp.ne.s32.totalorder %s91, %s93
    %p100 = scmp.eq.s32.totalorder %s20, 1
    %p101 = por %p99, %p100
    %p102 = scmp.ne.s32.totalorder %s93, %s94
    %p103 = scmp.eq.s32.totalorder %s20, 0
    %p104 = por %p102, %p103
    %p105 = scmp.ne.s32.totalorder %s93, %s94
    %p106 = scmp.eq.s32.totalorder %s21, 1
    %p107 = por %p105, %p106
    %p109 = scmp.ne.s32.totalorder %s94, %s108
    %p110 = scmp.eq.s32.totalorder %s21, 0
    %p111 = por %p109, %p110
    %s113 = sadd.s32 %s112, 1
    %p116 = scmp.eq.s32.totalorder %s15, 1
    %p117 = scmp.ne.s32.totalorder %s112, %s114
    %p118 = scmp.eq.s32.totalorder %s15, 0
    %p119 = por %p117, %p118
    %p120 = scmp.ne.s32.totalorder %s112, %s114
    %p121 = scmp.eq.s32.totalorder %s20, 1
    %p122 = por %p120, %p121
    %p123 = scmp.ne.s32.totalorder %s114, %s115
    %p124 = scmp.eq.s32.totalorder %s20, 0
    %p125 = por %p123, %p124
    %p126 = scmp.ne.s32.totalorder %s114, %s115
    %p127 = scmp.eq.s32.totalorder %s21, 1
    %p128 = por %p126, %p127
    %p130 = scmp.ne.s32.totalorder %s115, %s129
    %p131 = scmp.eq.s32.totalorder %s21, 0
    %p132 = por %p130, %p131
    %s133 = ssub.s32 %s15, %s22
    %p134 = scmp.eq.s32.totalorder %s133, 0
    %s136 = sadd.s32 %s135, 1
    %s137 = scalar_select %p134, %s135, %s136
    %p140 = pneg %p134
    %p141 = scmp.eq.s32.totalorder %s15, 1
    %p142 = por %p140, %p141
    %p143 = scmp.ne.s32.totalorder %s135, %s138
    %p144 = scmp.eq.s32.totalorder %s15, 0
    %p145 = por %p143, %p144
    %p146 = scmp.ne.s32.totalorder %s135, %s138
    %p147 = scmp.eq.s32.totalorder %s20, 1
    %p148 = por %p146, %p147
    %p149 = scmp.ne.s32.totalorder %s138, %s139
    %p150 = scmp.eq.s32.totalorder %s20, 0
    %p151 = por %p149, %p150
    %p152 = scmp.ne.s32.totalorder %s138, %s139
    %p153 = scmp.eq.s32.totalorder %s21, 1
    %p154 = por %p152, %p153
    %p156 = scmp.ne.s32.totalorder %s139, %s155
    %p157 = scmp.eq.s32.totalorder %s21, 0
    %p158 = por %p156, %p157
    %s159 = ssub.s32 %s15, %s22
    %p160 = scmp.eq.s32.totalorder %s159, 0
    %s162 = sadd.s32 %s161, 1
    %s163 = scalar_select %p160, %s161, %s162
    %p166 = pneg %p160
    %p167 = scmp.eq.s32.totalorder %s15, 1
    %p168 = por %p166, %p167
    %p169 = scmp.ne.s32.totalorder %s161, %s164
    %p170 = scmp.eq.s32.totalorder %s15, 0
    %p171 = por %p169, %p170
    %p172 = scmp.ne.s32.totalorder %s161, %s164
    %p173 = scmp.eq.s32.totalorder %s20, 1
    %p174 = por %p172, %p173
    %p175 = scmp.ne.s32.totalorder %s164, %s165
    %p176 = scmp.eq.s32.totalorder %s20, 0
    %p177 = por %p175, %p176
    %p178 = scmp.ne.s32.totalorder %s164, %s165
    %p179 = scmp.eq.s32.totalorder %s21, 1
    %p180 = por %p178, %p179
    %p182 = scmp.ne.s32.totalorder %s165, %s181
    %p183 = scmp.eq.s32.totalorder %s21, 0
    %p184 = por %p182, %p183
    %s185 = ssub.s32 %s15, %s22
    %p186 = scmp.eq.s32.totalorder %s185, 0
    %s188 = sadd.s32 %s187, 1
    %s189 = scalar_select %p186, %s187, %s188
    %p192 = pneg %p186
    %p193 = scmp.eq.s32.totalorder %s15, 1
    %p194 = por %p192, %p193
    %p195 = scmp.ne.s32.totalorder %s187, %s190
    %p196 = scmp.eq.s32.totalorder %s15, 0
    %p197 = por %p195, %p196
    %p198 = scmp.ne.s32.totalorder %s187, %s190
    %p199 = scmp.eq.s32.totalorder %s20, 1
    %p200 = por %p198, %p199
    %p201 = scmp.ne.s32.totalorder %s190, %s191
    %p202 = scmp.eq.s32.totalorder %s20, 0
    %p203 = por %p201, %p202
    %p204 = scmp.ne.s32.totalorder %s190, %s191
    %p205 = scmp.eq.s32.totalorder %s21, 1
    %p206 = por %p204, %p205
    %p208 = scmp.ne.s32.totalorder %s191, %s207
    %p209 = scmp.eq.s32.totalorder %s21, 0
    %p210 = por %p208, %p209
    %p211 = scmp.le.s32.totalorder 1, %s15
    %p212 = scmp.lt.s32.totalorder %s15, 3
    %p213 = pnand %p211, %p212
    %p214 = pneg %p213
    // Predicated region
    $region9: #{deconv_bn_relu_forward.5} parent=5 // pred_check
      _
    $region10: #{deconv_bn_relu_forward.5} parent=5 // pred_check_branch
      %216 = sbr.rel (%p213) target = $region12
    $region11: #{deconv_bn_relu_forward.5} parent=5 // pred_region
      %s217 = ssub.s32 %s15, 1
      // Predicated region
      $region13: #{deconv_bn_relu_forward.5} parent=11 // pred_check
        %p218 = pneg %p62
      $region14: #{deconv_bn_relu_forward.5} parent=11 // pred_check_branch
        %220 = sbr.rel (%p218) target = $region16
      $region15: #{deconv_bn_relu_forward.5} parent=11 // pred_region
        _
      $region16: #{deconv_bn_relu_forward.5} parent=11 // pred_fallthru
        _
      // Predicated region
      $region17: #{deconv_bn_relu_forward.5} parent=11 // pred_check
        %p221 = pneg %p83
      $region18: #{deconv_bn_relu_forward.5} parent=11 // pred_check_branch
        %223 = sbr.rel (%p221) target = $region20
      $region19: #{deconv_bn_relu_forward.5} parent=11 // pred_region
        _
      $region20: #{deconv_bn_relu_forward.5} parent=11 // pred_fallthru
        _
      // Predicated region
      $region21: #{deconv_bn_relu_forward.5} parent=11 // pred_check
        %p224 = pneg %p104
      $region22: #{deconv_bn_relu_forward.5} parent=11 // pred_check_branch
        %226 = sbr.rel (%p224) target = $region24
      $region23: #{deconv_bn_relu_forward.5} parent=11 // pred_region
        _
      $region24: #{deconv_bn_relu_forward.5} parent=11 // pred_fallthru
        _
      // Predicated region
      $region25: #{deconv_bn_relu_forward.5} parent=11 // pred_check
        %p227 = pneg %p125
      $region26: #{deconv_bn_relu_forward.5} parent=11 // pred_check_branch
        %229 = sbr.rel (%p227) target = $region28
      $region27: #{deconv_bn_relu_forward.5} parent=11 // pred_region
        _
      $region28: #{deconv_bn_relu_forward.5} parent=11 // pred_fallthru
        _
    $region12: #{deconv_bn_relu_forward.5} parent=5 // pred_fallthru
      _
    %p230 = scmp.lt.s32.totalorder %s15, 2
    // Predicated region
    $region29: #{deconv_bn_relu_forward.5} parent=5 // pred_check
      %p231 = pneg %p230
    $region30: #{deconv_bn_relu_forward.5} parent=5 // pred_check_branch
      %233 = sbr.rel (%p231) target = $region32
    $region31: #{deconv_bn_relu_forward.5} parent=5 // pred_region
      // Predicated region
      $region33: #{deconv_bn_relu_forward.5} parent=31 // pred_check
        %p234 = pneg %p35
      $region34: #{deconv_bn_relu_forward.5} parent=31 // pred_check_branch
        %236 = sbr.rel (%p234) target = $region36
      $region35: #{deconv_bn_relu_forward.5} parent=31 // pred_region
        %p237 = scmp.lt.s32.totalorder %s15, 1
        %s238 = scalar_select %p237, %s15, 1
        %s239 = smul.addr %s238, 2
        %s240 = smul.addr %s239, 2
        %s241 = scalar_lea.vmem %s0, %s240
      $region36: #{deconv_bn_relu_forward.5} parent=31 // pred_fallthru
        _
    $region32: #{deconv_bn_relu_forward.5} parent=5 // pred_fallthru
      _
    %p242 = scmp.le.s32.totalorder 1, %s15
    %p243 = scmp.lt.s32.totalorder %s15, 3
    %p244 = pnand %p242, %p243
    %p245 = pneg %p244
    // Predicated region
    $region37: #{deconv_bn_relu_forward.5} parent=5 // pred_check
      _
    $region38: #{deconv_bn_relu_forward.5} parent=5 // pred_check_branch
      %247 = sbr.rel (%p244) target = $region40
    $region39: #{deconv_bn_relu_forward.5} parent=5 // pred_region
      %s248 = ssub.s32 %s15, 1
      %p249 = scmp.lt.s32.totalorder %s20, 1
      %s250 = scalar_select %p249, %s20, 1
      %s251 = smul.addr %s250, 2
      %s252 = smul.addr %s251, 2
      %s253 = scalar_lea.vmem %s0, %s252
      %p254 = pneg %p41
      %p255 = pneg %p38
      %p256 = pneg %p62
      %p257 = pneg %p59
      %p258 = pneg %p83
      %p259 = pneg %p80
      %p260 = pneg %p104
      %p261 = pneg %p101
      %p262 = pneg %p125
      %p263 = pneg %p122
      %p264 = pneg %p151
      %p265 = pneg %p148
      %p266 = scmp.lt.s32.totalorder %s20, 1
      %s267 = scalar_select %p266, %s20, 1
      %s268 = smul.addr %s267, 2
      %s269 = smul.addr %s268, 2
      %s270 = scalar_lea.vmem %s5, %s269
      %p271 = pneg %p177
      %p272 = pneg %p174
      %p273 = scmp.lt.s32.totalorder %s20, 1
      %s274 = scalar_select %p273, %s20, 1
      %s275 = smul.addr %s274, 4
      %s276 = scalar_lea.vmem %s6, %s275
      %p277 = pneg %p203
      %p278 = pneg %p200
      %p279 = scmp.lt.s32.totalorder %s20, 1
      %s280 = scalar_select %p279, %s20, 1
      %s281 = smul.addr %s280, 4
      %s282 = scalar_lea.vmem %s7, %s281
      %p283 = scmp.lt.s32.totalorder %s20, 1
      %s284 = scalar_select %p283, %s20, 1
      %s285 = smul.addr %s284, 2
      %s286 = smul.addr %s285, 2
      %s287 = scalar_lea.vmem %s0, %s286
      %p288 = scmp.lt.s32.totalorder %s20, 1
      %s289 = scalar_select %p288, %s20, 1
      %s290 = smul.addr %s289, 2
      %s291 = smul.addr %s290, 2
      %s292 = scalar_lea.vmem %s5, %s291
      %p293 = scmp.lt.s32.totalorder %s20, 1
      %s294 = scalar_select %p293, %s20, 1
      %s295 = smul.addr %s294, 4
      %s296 = scalar_lea.vmem %s6, %s295
      %p297 = scmp.lt.s32.totalorder %s20, 1
      %s298 = scalar_select %p297, %s20, 1
      %s299 = smul.addr %s298, 4
      %s300 = scalar_lea.vmem %s7, %s299
      %v301 = vld [vmem:[%s287] sm:$0xf]
      %v302 = vunpack.c.l.bf16 %v301
      %v303 = vld [vmem:[%s2] sm:$0xf]
      %305 = vset.pattern.permute.xlu0 0
      %306 = vperm.xlu0 %305, %v303
      %v307 = vpop.permute.xlu0 %306
      %v309 = vunpack.c.l.s4 839922192
      %v310 = vunpack.c.0.s8 %v309
      %v311 = vlaneseq
      %v312 = vshrl.u32 %v311, 7
      %v313 = vsub.s32 %v310, %v312
      %v314 = vrot.slane %v307, %v313
      %v316 = vmul.f32 %v302, %v314
      %v317 = vld [vmem:[%s3] sm:$0xf]
      %319 = vset.pattern.permute.xlu0 0
      %320 = vperm.xlu0 %319, %v317
      %v321 = vpop.permute.xlu0 %320
      %v323 = vunpack.c.l.s4 839922192
      %v324 = vunpack.c.0.s8 %v323
      %v325 = vlaneseq
      %v326 = vshrl.u32 %v325, 7
      %v327 = vsub.s32 %v324, %v326
      %v328 = vrot.slane %v321, %v327
      %v330 = vadd.f32 %v316, %v328
      %vm331 = vcmp.ge.f32.partialorder %v330, 0.0
      %s332 = sld [smem:[#allocation3]]
      %v333 = vstv %s332
      %v334 = vmul.f32 %v333, %v330
      %v335 = vsel %vm331, %v330, %v334
      %336 = vst [vmem:[#allocation2] sm:$0xf] 0.0
      %337 = vst [vmem:[#allocation2 + $0x4] sm:$0xff] %v335
      %338 = vst [vmem:[#allocation2 + $0xc] sm:$0xf] 0.0
      %v339 = vlaneseq
      %v340 = vand.u32 %v339, 127
      %v341 = vadd.s32 %v340, 128
      %vm342 = vcmp.lt.s32.totalorder %v340, 0
      %v343 = vsub.s32 0, %v340
      %v344 = vsel %vm342, %v343, %v340
      %v345 = vshrl.u32 %v344, 4
      %v346 = vand.u32 %v344, 15
      %v347 = vsub.s32 0, %v346
      %v348 = vsel %vm342, %v347, %v346
      %vm349 = vcmp.lt.s32.totalorder %v341, 0
      %v350 = vsub.s32 0, %v341
      %v351 = vsel %vm349, %v350, %v341
      %v352 = vshrl.u32 %v351, 4
      %v353 = vand.u32 %v351, 15
      %v354 = vsub.s32 0, %v353
      %v355 = vsel %vm349, %v354, %v353
      %vm356 = vcmp.ne.s32.totalorder %v348, 0
      %vm357 = vcmp.ne.s32.totalorder %v355, 0
      %vm358 = vcmp.lt.s32.totalorder %v348, 0
      %vm359 = vcmp.lt.s32.totalorder %v355, 0
      %vm360 = vmand %vm358, %vm356
      %vm361 = vmand %vm359, %vm357
      %v362 = vadd.s32 %v348, 16
      %v363 = vadd.s32 %v355, 16
      %v364 = vsel %vm360, %v362, %v348
      %v365 = vsel %vm361, %v363, %v355
      %vm366 = vcmp.ge.s32.totalorder %v364, 2
      %vm367 = vcmp.ge.s32.totalorder %v365, 2
      %v368 = vsel %vm366, 1, 0
      %v369 = vsel %vm367, 1, 0
      %v370 = vcvt.s32.f32 %v368
      %v371 = vcvt.s32.f32 %v369
      %vm372 = vcmp.lt.s32.totalorder %v364, 14
      %vm373 = vcmp.lt.s32.totalorder %v365, 14
      %v374 = vsel %vm372, 1, 0
      %v375 = vsel %vm373, 1, 0
      %v376 = vcvt.s32.f32 %v374
      %v377 = vcvt.s32.f32 %v375
      %v378 = vld [vmem:[#allocation2] sm:$0xff]
      %v379 = vld [vmem:[#allocation2 + $0x8] sm:$0xf]
      %v382 = vcombine.low %v370, %v371
      %383 = vrot.lane.b32.xlu0 %v382, 94
      %v384 = vpop.permute.xlu0 %383
      %v385 = vrot.slane %v384, 4
      %vm386 = vcmask 769024
      %v387 = vsel %vm386, %v385, %v384
      %v390 = vmul.f32 %v378, %v387
      %v391 = vmul.f32 %v379, %v385
      %v392 = vld [vmem:[%s1] sm:$0xf]
      %s393 = scalar_lea.vmem %s1, 4
      %v394 = vld [vmem:[%s393] sm:$0xf]
      %v397 = vcombine.high %v378, %v378
      %398 = vrot.lane.b32.xlu0 %v378, 32
      %v399 = vpop.permute.xlu0 %398
      %400 = vrot.lane.b32.xlu0 %v397, 32
      %v401 = vpop.permute.xlu0 %400
      %402 = vrot.lane.b32.xlu0 %v379, 32
      %v403 = vpop.permute.xlu0 %402
      %vm404 = vcmask 261120
      %v405 = vsel %vm404, %v399, %v401
      %v406 = vsel %vm404, %v401, %v403
      %vm407 = vcmask 31744
      %v409 = vsel %vm407, %v394, 0
      %vm411 = vcmask 1043456
      %v412 = vsel %vm411, %v405, 0
      %v414 = vsel %vm411, %v406, 0
      %416 = vmatprep.subr.mxu0 %v414
      %417 = vmatpush1.msra.mxu0 %v412
      %418 = vmatprep.subr.mxu0 0.0
      %419 = vmatpush1.msra.mxu0 0.0
      %420 = vmatprep.subr.mxu0 0.0
      %421 = vmatpush1.msra.mxu0 0.0
      %422 = vmatprep.subr.mxu0 0.0
      %423 = vmatpush1.msra.mxu0 0.0
      %424 = vmatprep.subr.mxu0 0.0
      %425 = vmatpush1.msra.mxu0 0.0
      %426 = vmatprep.subr.mxu0 0.0
      %427 = vmatpush1.msra.mxu0 0.0
      %428 = vmatprep.subr.mxu0 0.0
      %429 = vmatpush1.msra.mxu0 0.0
      %430 = vmatprep.subr.mxu0 0.0
      %431 = vmatpush1.msra.mxu0 0.0
      %432 = vmatprep.subr.mxu0 0.0
      %433 = vmatpush1.msra.mxu0 0.0
      %434 = vmatprep.subr.mxu0 0.0
      %435 = vmatpush1.msra.mxu0 0.0
      %436 = vmatprep.subr.mxu0 0.0
      %437 = vmatpush1.msra.mxu0 0.0
      %438 = vmatprep.subr.mxu0 0.0
      %439 = vmatpush1.msra.mxu0 0.0
      %440 = vmatprep.subr.mxu0 0.0
      %441 = vmatpush1.msra.mxu0 0.0
      %442 = vmatprep.subr.mxu0 0.0
      %443 = vmatpush1.msra.mxu0 0.0
      %444 = vmatprep.subr.mxu0 0.0
      %445 = vmatpush1.msra.mxu0 0.0
      %446 = vmatprep.subr.mxu0 0.0
      %447 = vmatpush1.msra.mxu0 0.0
      %448 = vmatprep.subr.mxu0 0.0
      %449 = vmatpush1.msra.mxu0 0.0
      %450 = vmatprep.subr.mxu0 0.0
      %451 = vmatpush1.msra.mxu0 0.0
      %452 = vmatprep.subr.mxu0 0.0
      %453 = vmatpush1.msra.mxu0 0.0
      %454 = vmatprep.subr.mxu0 0.0
      %455 = vmatpush1.msra.mxu0 0.0
      %456 = vmatprep.subr.mxu0 0.0
      %457 = vmatpush1.msra.mxu0 0.0
      %458 = vmatprep.subr.mxu0 0.0
      %459 = vmatpush1.msra.mxu0 0.0
      %460 = vmatprep.subr.mxu0 0.0
      %461 = vmatpush1.msra.mxu0 0.0
      %462 = vmatprep.subr.mxu0 0.0
      %463 = vmatpush1.msra.mxu0 0.0
      %464 = vmatprep.subr.mxu0 0.0
      %465 = vmatpush1.msra.mxu0 0.0
      %466 = vmatprep.subr.mxu0 0.0
      %467 = vmatpush1.msra.mxu0 0.0
      %468 = vmatprep.subr.mxu0 0.0
      %469 = vmatpush1.msra.mxu0 0.0
      %470 = vmatprep.subr.mxu0 0.0
      %471 = vmatpush1.msra.mxu0 0.0
      %472 = vmatprep.subr.mxu0 0.0
      %473 = vmatpush1.msra.mxu0 0.0
      %474 = vmatprep.subr.mxu0 0.0
      %475 = vmatpush1.msra.mxu0 0.0
      %476 = vmatprep.subr.mxu0 0.0
      %477 = vmatpush1.msra.mxu0 0.0
      %478 = vmatprep.subr.mxu0 0.0
      %479 = vmatpush1.msra.mxu0 0.0
      %480 = vmatprep.mubr.f32.mxu0 0.0
      %481 = vmatmul.mubr.f32.gmra.mrb[0].mxu0 %v409
      %v482 = vpop.f32.mrb[0].mxu0
      %v483 = vadd.f32 0.0, %v482
      %v484 = vpop.f32.mrb[0].mxu0
      %v485 = vadd.f32 0.0, %v484
      %486 = vdwg.mxu0
      %v489 = vcombine.high %v390, %v390
      %490 = vrot.lane.b32.xlu0 %v390, 34
      %v491 = vpop.permute.xlu0 %490
      %492 = vrot.lane.b32.xlu0 %v489, 34
      %v493 = vpop.permute.xlu0 %492
      %494 = vrot.lane.b32.xlu0 %v391, 34
      %v495 = vpop.permute.xlu0 %494
      %vm496 = vcmask 277504
      %v497 = vsel %vm496, %v491, %v493
      %v498 = vsel %vm496, %v493, %v495
      %v500 = vsel %vm407, %v392, 0
      %v502 = vsel %vm411, %v497, 0
      %v504 = vsel %vm411, %v498, 0
      %506 = vmatprep.subr.mxu0 %v504
      %507 = vmatpush1.msra.mxu0 %v502
      %508 = vmatprep.subr.mxu0 0.0
      %509 = vmatpush1.msra.mxu0 0.0
      %510 = vmatprep.subr.mxu0 0.0
      %511 = vmatpush1.msra.mxu0 0.0
      %512 = vmatprep.subr.mxu0 0.0
      %513 = vmatpush1.msra.mxu0 0.0
      %514 = vmatprep.subr.mxu0 0.0
      %515 = vmatpush1.msra.mxu0 0.0
      %516 = vmatprep.subr.mxu0 0.0
      %517 = vmatpush1.msra.mxu0 0.0
      %518 = vmatprep.subr.mxu0 0.0
      %519 = vmatpush1.msra.mxu0 0.0
      %520 = vmatprep.subr.mxu0 0.0
      %521 = vmatpush1.msra.mxu0 0.0
      %522 = vmatprep.subr.mxu0 0.0
      %523 = vmatpush1.msra.mxu0 0.0
      %524 = vmatprep.subr.mxu0 0.0
      %525 = vmatpush1.msra.mxu0 0.0
      %526 = vmatprep.subr.mxu0 0.0
      %527 = vmatpush1.msra.mxu0 0.0
      %528 = vmatprep.subr.mxu0 0.0
      %529 = vmatpush1.msra.mxu0 0.0
      %530 = vmatprep.subr.mxu0 0.0
      %531 = vmatpush1.msra.mxu0 0.0
      %532 = vmatprep.subr.mxu0 0.0
      %533 = vmatpush1.msra.mxu0 0.0
      %534 = vmatprep.subr.mxu0 0.0
      %535 = vmatpush1.msra.mxu0 0.0
      %536 = vmatprep.subr.mxu0 0.0
      %537 = vmatpush1.msra.mxu0 0.0
      %538 = vmatprep.subr.mxu0 0.0
      %539 = vmatpush1.msra.mxu0 0.0
      %540 = vmatprep.subr.mxu0 0.0
      %541 = vmatpush1.msra.mxu0 0.0
      %542 = vmatprep.subr.mxu0 0.0
      %543 = vmatpush1.msra.mxu0 0.0
      %544 = vmatprep.subr.mxu0 0.0
      %545 = vmatpush1.msra.mxu0 0.0
      %546 = vmatprep.subr.mxu0 0.0
      %547 = vmatpush1.msra.mxu0 0.0
      %548 = vmatprep.subr.mxu0 0.0
      %549 = vmatpush1.msra.mxu0 0.0
      %550 = vmatprep.subr.mxu0 0.0
      %551 = vmatpush1.msra.mxu0 0.0
      %552 = vmatprep.subr.mxu0 0.0
      %553 = vmatpush1.msra.mxu0 0.0
      %554 = vmatprep.subr.mxu0 0.0
      %555 = vmatpush1.msra.mxu0 0.0
      %556 = vmatprep.subr.mxu0 0.0
      %557 = vmatpush1.msra.mxu0 0.0
      %558 = vmatprep.subr.mxu0 0.0
      %559 = vmatpush1.msra.mxu0 0.0
      %560 = vmatprep.subr.mxu0 0.0
      %561 = vmatpush1.msra.mxu0 0.0
      %562 = vmatprep.subr.mxu0 0.0
      %563 = vmatpush1.msra.mxu0 0.0
      %564 = vmatprep.subr.mxu0 0.0
      %565 = vmatpush1.msra.mxu0 0.0
      %566 = vmatprep.subr.mxu0 0.0
      %567 = vmatpush1.msra.mxu0 0.0
      %568 = vmatprep.subr.mxu0 0.0
      %569 = vmatpush1.msra.mxu0 0.0
      %570 = vmatprep.mubr.f32.mxu0 0.0
      %571 = vmatmul.mubr.f32.gmra.mrb[0].mxu0 %v500
      %v572 = vpop.f32.mrb[0].mxu0
      %v573 = vadd.f32 %v483, %v572
      %v574 = vpop.f32.mrb[0].mxu0
      %v575 = vadd.f32 %v485, %v574
      %576 = vdwg.mxu0
      %v579 = vcombine.low %v376, %v377
      %580 = vrot.lane.b32.xlu0 %v579, 98
      %v581 = vpop.permute.xlu0 %580
      %v582 = vrot.slane %v581, 4
      %vm583 = vcmask 801792
      %v584 = vsel %vm583, %v582, %v581
      %v587 = vmul.f32 %v378, %v584
      %v588 = vmul.f32 %v379, %v582
      %s589 = scalar_lea.vmem %s1, 8
      %v590 = vld [vmem:[%s589] sm:$0xf]
      %v593 = vcombine.high %v587, %v587
      %594 = vrot.lane.b32.xlu0 %v587, 30
      %v595 = vpop.permute.xlu0 %594
      %596 = vrot.lane.b32.xlu0 %v593, 30
      %v597 = vpop.permute.xlu0 %596
      %598 = vrot.lane.b32.xlu0 %v588, 30
      %v599 = vpop.permute.xlu0 %598
      %vm600 = vcmask 244736
      %v601 = vsel %vm600, %v595, %v597
      %v602 = vsel %vm600, %v597, %v599
      %v604 = vsel %vm407, %v590, 0
      %v606 = vsel %vm411, %v601, 0
      %v608 = vsel %vm411, %v602, 0
      %610 = vmatprep.subr.mxu0 %v608
      %611 = vmatpush1.msra.mxu0 %v606
      %612 = vmatprep.subr.mxu0 0.0
      %613 = vmatpush1.msra.mxu0 0.0
      %614 = vmatprep.subr.mxu0 0.0
      %615 = vmatpush1.msra.mxu0 0.0
      %616 = vmatprep.subr.mxu0 0.0
      %617 = vmatpush1.msra.mxu0 0.0
      %618 = vmatprep.subr.mxu0 0.0
      %619 = vmatpush1.msra.mxu0 0.0
      %620 = vmatprep.subr.mxu0 0.0
      %621 = vmatpush1.msra.mxu0 0.0
      %622 = vmatprep.subr.mxu0 0.0
      %623 = vmatpush1.msra.mxu0 0.0
      %624 = vmatprep.subr.mxu0 0.0
      %625 = vmatpush1.msra.mxu0 0.0
      %626 = vmatprep.subr.mxu0 0.0
      %627 = vmatpush1.msra.mxu0 0.0
      %628 = vmatprep.subr.mxu0 0.0
      %629 = vmatpush1.msra.mxu0 0.0
      %630 = vmatprep.subr.mxu0 0.0
      %631 = vmatpush1.msra.mxu0 0.0
      %632 = vmatprep.subr.mxu0 0.0
      %633 = vmatpush1.msra.mxu0 0.0
      %634 = vmatprep.subr.mxu0 0.0
      %635 = vmatpush1.msra.mxu0 0.0
      %636 = vmatprep.subr.mxu0 0.0
      %637 = vmatpush1.msra.mxu0 0.0
      %638 = vmatprep.subr.mxu0 0.0
      %639 = vmatpush1.msra.mxu0 0.0
      %640 = vmatprep.subr.mxu0 0.0
      %641 = vmatpush1.msra.mxu0 0.0
      %642 = vmatprep.subr.mxu0 0.0
      %643 = vmatpush1.msra.mxu0 0.0
      %644 = vmatprep.subr.mxu0 0.0
      %645 = vmatpush1.msra.mxu0 0.0
      %646 = vmatprep.subr.mxu0 0.0
      %647 = vmatpush1.msra.mxu0 0.0
      %648 = vmatprep.subr.mxu0 0.0
      %649 = vmatpush1.msra.mxu0 0.0
      %650 = vmatprep.subr.mxu0 0.0
      %651 = vmatpush1.msra.mxu0 0.0
      %652 = vmatprep.subr.mxu0 0.0
      %653 = vmatpush1.msra.mxu0 0.0
      %654 = vmatprep.subr.mxu0 0.0
      %655 = vmatpush1.msra.mxu0 0.0
      %656 = vmatprep.subr.mxu0 0.0
      %657 = vmatpush1.msra.mxu0 0.0
      %658 = vmatprep.subr.mxu0 0.0
      %659 = vmatpush1.msra.mxu0 0.0
      %660 = vmatprep.subr.mxu0 0.0
      %661 = vmatpush1.msra.mxu0 0.0
      %662 = vmatprep.subr.mxu0 0.0
      %663 = vmatpush1.msra.mxu0 0.0
      %664 = vmatprep.subr.mxu0 0.0
      %665 = vmatpush1.msra.mxu0 0.0
      %666 = vmatprep.subr.mxu0 0.0
      %667 = vmatpush1.msra.mxu0 0.0
      %668 = vmatprep.subr.mxu0 0.0
      %669 = vmatpush1.msra.mxu0 0.0
      %670 = vmatprep.subr.mxu0 0.0
      %671 = vmatpush1.msra.mxu0 0.0
      %672 = vmatprep.subr.mxu0 0.0
      %673 = vmatpush1.msra.mxu0 0.0
      %674 = vmatprep.mubr.f32.mxu0 0.0
      %675 = vmatmul.mubr.f32.gmra.mrb[0].mxu0 %v604
      %v676 = vpop.f32.mrb[0].mxu0
      %v677 = vadd.f32 0.0, %v676
      %v678 = vpop.f32.mrb[0].mxu0
      %v679 = vadd.f32 0.0, %v678
      %680 = vdwg.mxu0
      %v681 = vadd.f32 %v573, %v677
      %v682 = vadd.f32 %v575, %v679
      %683 = vrot.lane.b32.xlu0 %v382, 126
      %v684 = vpop.permute.xlu0 %683
      %v685 = vrot.slane %v684, 4
      %vm686 = vcmask 1031168
      %v687 = vsel %vm686, %v685, %v684
      %v690 = vmul.f32 %v378, %v687
      %v691 = vmul.f32 %v379, %v685
      %s692 = scalar_lea.vmem %s1, 12
      %v693 = vld [vmem:[%s692] sm:$0xf]
      %v696 = vcombine.high %v690, %v690
      %697 = vrot.lane.b32.xlu0 %v690, 2
      %v698 = vpop.permute.xlu0 %697
      %699 = vrot.lane.b32.xlu0 %v696, 2
      %v700 = vpop.permute.xlu0 %699
      %701 = vrot.lane.b32.xlu0 %v691, 2
      %v702 = vpop.permute.xlu0 %701
      %vm703 = vcmask 15360
      %v704 = vsel %vm703, %v698, %v700
      %v705 = vsel %vm703, %v700, %v702
      %v707 = vsel %vm407, %v693, 0
      %v709 = vsel %vm411, %v704, 0
      %v711 = vsel %vm411, %v705, 0
      %713 = vmatprep.subr.mxu0 %v711
      %714 = vmatpush1.msra.mxu0 %v709
      %715 = vmatprep.subr.mxu0 0.0
      %716 = vmatpush1.msra.mxu0 0.0
      %717 = vmatprep.subr.mxu0 0.0
      %718 = vmatpush1.msra.mxu0 0.0
      %719 = vmatprep.subr.mxu0 0.0
      %720 = vmatpush1.msra.mxu0 0.0
      %721 = vmatprep.subr.mxu0 0.0
      %722 = vmatpush1.msra.mxu0 0.0
      %723 = vmatprep.subr.mxu0 0.0
      %724 = vmatpush1.msra.mxu0 0.0
      %725 = vmatprep.subr.mxu0 0.0
      %726 = vmatpush1.msra.mxu0 0.0
      %727 = vmatprep.subr.mxu0 0.0
      %728 = vmatpush1.msra.mxu0 0.0
      %729 = vmatprep.subr.mxu0 0.0
      %730 = vmatpush1.msra.mxu0 0.0
      %731 = vmatprep.subr.mxu0 0.0
      %732 = vmatpush1.msra.mxu0 0.0
      %733 = vmatprep.subr.mxu0 0.0
      %734 = vmatpush1.msra.mxu0 0.0
      %735 = vmatprep.subr.mxu0 0.0
      %736 = vmatpush1.msra.mxu0 0.0
      %737 = vmatprep.subr.mxu0 0.0
      %738 = vmatpush1.msra.mxu0 0.0
      %739 = vmatprep.subr.mxu0 0.0
      %740 = vmatpush1.msra.mxu0 0.0
      %741 = vmatprep.subr.mxu0 0.0
      %742 = vmatpush1.msra.mxu0 0.0
      %743 = vmatprep.subr.mxu0 0.0
      %744 = vmatpush1.msra.mxu0 0.0
      %745 = vmatprep.subr.mxu0 0.0
      %746 = vmatpush1.msra.mxu0 0.0
      %747 = vmatprep.subr.mxu0 0.0
      %748 = vmatpush1.msra.mxu0 0.0
      %749 = vmatprep.subr.mxu0 0.0
      %750 = vmatpush1.msra.mxu0 0.0
      %751 = vmatprep.subr.mxu0 0.0
      %752 = vmatpush1.msra.mxu0 0.0
      %753 = vmatprep.subr.mxu0 0.0
      %754 = vmatpush1.msra.mxu0 0.0
      %755 = vmatprep.subr.mxu0 0.0
      %756 = vmatpush1.msra.mxu0 0.0
      %757 = vmatprep.subr.mxu0 0.0
      %758 = vmatpush1.msra.mxu0 0.0
      %759 = vmatprep.subr.mxu0 0.0
      %760 = vmatpush1.msra.mxu0 0.0
      %761 = vmatprep.subr.mxu0 0.0
      %762 = vmatpush1.msra.mxu0 0.0
      %763 = vmatprep.subr.mxu0 0.0
      %764 = vmatpush1.msra.mxu0 0.0
      %765 = vmatprep.subr.mxu0 0.0
      %766 = vmatpush1.msra.mxu0 0.0
      %767 = vmatprep.subr.mxu0 0.0
      %768 = vmatpush1.msra.mxu0 0.0
      %769 = vmatprep.subr.mxu0 0.0
      %770 = vmatpush1.msra.mxu0 0.0
      %771 = vmatprep.subr.mxu0 0.0
      %772 = vmatpush1.msra.mxu0 0.0
      %773 = vmatprep.subr.mxu0 0.0
      %774 = vmatpush1.msra.mxu0 0.0
      %775 = vmatprep.subr.mxu0 0.0
      %776 = vmatpush1.msra.mxu0 0.0
      %777 = vmatprep.mubr.f32.mxu0 0.0
      %778 = vmatmul.mubr.f32.gmra.mrb[0].mxu0 %v707
      %v779 = vpop.f32.mrb[0].mxu0
      %v780 = vadd.f32 0.0, %v779
      %v781 = vpop.f32.mrb[0].mxu0
      %v782 = vadd.f32 0.0, %v781
      %783 = vdwg.mxu0
      %v784 = vadd.f32 %v681, %v780
      %v785 = vadd.f32 %v682, %v782
      %v786 = vld [vmem:[#allocation2 + $0x4] sm:$0xff]
      %s787 = scalar_lea.vmem %s1, 16
      %v788 = vld [vmem:[%s787] sm:$0xf]
      %v790 = vcombine.high %v786, %v786
      %v792 = vsel %vm407, %v788, 0
      %v794 = vsel %vm411, %v786, 0
      %v796 = vsel %vm411, %v790, 0
      %798 = vmatprep.subr.mxu0 %v796
      %799 = vmatpush1.msra.mxu0 %v794
      %800 = vmatprep.subr.mxu0 0.0
      %801 = vmatpush1.msra.mxu0 0.0
      %802 = vmatprep.subr.mxu0 0.0
      %803 = vmatpush1.msra.mxu0 0.0
      %804 = vmatprep.subr.mxu0 0.0
      %805 = vmatpush1.msra.mxu0 0.0
      %806 = vmatprep.subr.mxu0 0.0
      %807 = vmatpush1.msra.mxu0 0.0
      %808 = vmatprep.subr.mxu0 0.0
      %809 = vmatpush1.msra.mxu0 0.0
      %810 = vmatprep.subr.mxu0 0.0
      %811 = vmatpush1.msra.mxu0 0.0
      %812 = vmatprep.subr.mxu0 0.0
      %813 = vmatpush1.msra.mxu0 0.0
      %814 = vmatprep.subr.mxu0 0.0
      %815 = vmatpush1.msra.mxu0 0.0
      %816 = vmatprep.subr.mxu0 0.0
      %817 = vmatpush1.msra.mxu0 0.0
      %818 = vmatprep.subr.mxu0 0.0
      %819 = vmatpush1.msra.mxu0 0.0
      %820 = vmatprep.subr.mxu0 0.0
      %821 = vmatpush1.msra.mxu0 0.0
      %822 = vmatprep.subr.mxu0 0.0
      %823 = vmatpush1.msra.mxu0 0.0
      %824 = vmatprep.subr.mxu0 0.0
      %825 = vmatpush1.msra.mxu0 0.0
      %826 = vmatprep.subr.mxu0 0.0
      %827 = vmatpush1.msra.mxu0 0.0
      %828 = vmatprep.subr.mxu0 0.0
      %829 = vmatpush1.msra.mxu0 0.0
      %830 = vmatprep.subr.mxu0 0.0
      %831 = vmatpush1.msra.mxu0 0.0
      %832 = vmatprep.subr.mxu0 0.0
      %833 = vmatpush1.msra.mxu0 0.0
      %834 = vmatprep.subr.mxu0 0.0
      %835 = vmatpush1.msra.mxu0 0.0
      %836 = vmatprep.subr.mxu0 0.0
      %837 = vmatpush1.msra.mxu0 0.0
      %838 = vmatprep.subr.mxu0 0.0
      %839 = vmatpush1.msra.mxu0 0.0
      %840 = vmatprep.subr.mxu0 0.0
      %841 = vmatpush1.msra.mxu0 0.0
      %842 = vmatprep.subr.mxu0 0.0
      %843 = vmatpush1.msra.mxu0 0.0
      %844 = vmatprep.subr.mxu0 0.0
      %845 = vmatpush1.msra.mxu0 0.0
      %846 = vmatprep.subr.mxu0 0.0
      %847 = vmatpush1.msra.mxu0 0.0
      %848 = vmatprep.subr.mxu0 0.0
      %849 = vmatpush1.msra.mxu0 0.0
      %850 = vmatprep.subr.mxu0 0.0
      %851 = vmatpush1.msra.mxu0 0.0
      %852 = vmatprep.subr.mxu0 0.0
      %853 = vmatpush1.msra.mxu0 0.0
      %854 = vmatprep.subr.mxu0 0.0
      %855 = vmatpush1.msra.mxu0 0.0
      %856 = vmatprep.subr.mxu0 0.0
      %857 = vmatpush1.msra.mxu0 0.0
      %858 = vmatprep.subr.mxu0 0.0
      %859 = vmatpush1.msra.mxu0 0.0
      %860 = vmatprep.subr.mxu0 0.0
      %861 = vmatpush1.msra.mxu0 0.0
      %862 = vmatprep.mubr.f32.mxu0 0.0
      %863 = vmatmul.mubr.f32.gmra.mrb[0].mxu0 %v792
      %v864 = vpop.f32.mrb[0].mxu0
      %v865 = vadd.f32 0.0, %v864
      %v866 = vpop.f32.mrb[0].mxu0
      %v867 = vadd.f32 0.0, %v866
      %868 = vdwg.mxu0
      %v869 = vadd.f32 %v784, %v865
      %v870 = vadd.f32 %v785, %v867
      %v871 = vld [vmem:[#allocation2 + $0x4] sm:$0xff]
      %v872 = vld [vmem:[#allocation2 + $0xc] sm:$0xf]
      %873 = vrot.lane.b32.xlu0 %v579, 2
      %v874 = vpop.permute.xlu0 %873
      %v875 = vrot.slane %v874, 4
      %v876 = vsel %vm703, %v875, %v874
      %v879 = vmul.f32 %v871, %v876
      %v880 = vmul.f32 %v872, %v875
      %s881 = scalar_lea.vmem %s1, 20
      %v882 = vld [vmem:[%s881] sm:$0xf]
      %v885 = vcombine.high %v879, %v879
      %886 = vrot.lane.b32.xlu0 %v879, 126
      %v887 = vpop.permute.xlu0 %886
      %888 = vrot.lane.b32.xlu0 %v885, 126
      %v889 = vpop.permute.xlu0 %888
      %890 = vrot.lane.b32.xlu0 %v880, 126
      %v891 = vpop.permute.xlu0 %890
      %v892 = vsel %vm686, %v887, %v889
      %v893 = vsel %vm686, %v889, %v891
      %v895 = vsel %vm407, %v882, 0
      %v897 = vsel %vm411, %v892, 0
      %v899 = vsel %vm411, %v893, 0
      %901 = vmatprep.subr.mxu0 %v899
      %902 = vmatpush1.msra.mxu0 %v897
      %903 = vmatprep.subr.mxu0 0.0
      %904 = vmatpush1.msra.mxu0 0.0
      %905 = vmatprep.subr.mxu0 0.0
      %906 = vmatpush1.msra.mxu0 0.0
      %907 = vmatprep.subr.mxu0 0.0
      %908 = vmatpush1.msra.mxu0 0.0
      %909 = vmatprep.subr.mxu0 0.0
      %910 = vmatpush1.msra.mxu0 0.0
      %911 = vmatprep.subr.mxu0 0.0
      %912 = vmatpush1.msra.mxu0 0.0
      %913 = vmatprep.subr.mxu0 0.0
      %914 = vmatpush1.msra.mxu0 0.0
      %915 = vmatprep.subr.mxu0 0.0
      %916 = vmatpush1.msra.mxu0 0.0
      %917 = vmatprep.subr.mxu0 0.0
      %918 = vmatpush1.msra.mxu0 0.0
      %919 = vmatprep.subr.mxu0 0.0
      %920 = vmatpush1.msra.mxu0 0.0
      %921 = vmatprep.subr.mxu0 0.0
      %922 = vmatpush1.msra.mxu0 0.0
      %923 = vmatprep.subr.mxu0 0.0
      %924 = vmatpush1.msra.mxu0 0.0
      %925 = vmatprep.subr.mxu0 0.0
      %926 = vmatpush1.msra.mxu0 0.0
      %927 = vmatprep.subr.mxu0 0.0
      %928 = vmatpush1.msra.mxu0 0.0
      %929 = vmatprep.subr.mxu0 0.0
      %930 = vmatpush1.msra.mxu0 0.0
      %931 = vmatprep.subr.mxu0 0.0
      %932 = vmatpush1.msra.mxu0 0.0
      %933 = vmatprep.subr.mxu0 0.0
      %934 = vmatpush1.msra.mxu0 0.0
      %935 = vmatprep.subr.mxu0 0.0
      %936 = vmatpush1.msra.mxu0 0.0
      %937 = vmatprep.subr.mxu0 0.0
      %938 = vmatpush1.msra.mxu0 0.0
      %939 = vmatprep.subr.mxu0 0.0
      %940 = vmatpush1.msra.mxu0 0.0
      %941 = vmatprep.subr.mxu0 0.0
      %942 = vmatpush1.msra.mxu0 0.0
      %943 = vmatprep.subr.mxu0 0.0
      %944 = vmatpush1.msra.mxu0 0.0
      %945 = vmatprep.subr.mxu0 0.0
      %946 = vmatpush1.msra.mxu0 0.0
      %947 = vmatprep.subr.mxu0 0.0
      %948 = vmatpush1.msra.mxu0 0.0
      %949 = vmatprep.subr.mxu0 0.0
      %950 = vmatpush1.msra.mxu0 0.0
      %951 = vmatprep.subr.mxu0 0.0
      %952 = vmatpush1.msra.mxu0 0.0
      %953 = vmatprep.subr.mxu0 0.0
      %954 = vmatpush1.msra.mxu0 0.0
      %955 = vmatprep.subr.mxu0 0.0
      %956 = vmatpush1.msra.mxu0 0.0
      %957 = vmatprep.subr.mxu0 0.0
      %958 = vmatpush1.msra.mxu0 0.0
      %959 = vmatprep.subr.mxu0 0.0
      %960 = vmatpush1.msra.mxu0 0.0
      %961 = vmatprep.subr.mxu0 0.0
      %962 = vmatpush1.msra.mxu0 0.0
      %963 = vmatprep.subr.mxu0 0.0
      %964 = vmatpush1.msra.mxu0 0.0
      %965 = vmatprep.mubr.f32.mxu0 0.0
      %966 = vmatmul.mubr.f32.gmra.mrb[0].mxu0 %v895
      %v967 = vpop.f32.mrb[0].mxu0
      %v968 = vadd.f32 0.0, %v967
      %v969 = vpop.f32.mrb[0].mxu0
      %v970 = vadd.f32 0.0, %v969
      %971 = vdwg.mxu0
      %v972 = vadd.f32 %v869, %v968
      %v973 = vadd.f32 %v870, %v970
      %974 = vrot.lane.b32.xlu0 %v382, 30
      %v975 = vpop.permute.xlu0 %974
      %v976 = vrot.slane %v975, 4
      %v977 = vsel %vm600, %v976, %v975
      %v980 = vmul.f32 %v871, %v977
      %v981 = vmul.f32 %v872, %v976
      %s982 = scalar_lea.vmem %s1, 24
      %v983 = vld [vmem:[%s982] sm:$0xf]
      %v986 = vcombine.high %v980, %v980
      %987 = vrot.lane.b32.xlu0 %v980, 98
      %v988 = vpop.permute.xlu0 %987
      %989 = vrot.lane.b32.xlu0 %v986, 98
      %v990 = vpop.permute.xlu0 %989
      %991 = vrot.lane.b32.xlu0 %v981, 98
      %v992 = vpop.permute.xlu0 %991
      %v993 = vsel %vm583, %v988, %v990
      %v994 = vsel %vm583, %v990, %v992
      %v996 = vsel %vm407, %v983, 0
      %v998 = vsel %vm411, %v993, 0
      %v1000 = vsel %vm411, %v994, 0
      %1002 = vmatprep.subr.mxu0 %v1000
      %1003 = vmatpush1.msra.mxu0 %v998
      %1004 = vmatprep.subr.mxu0 0.0
      %1005 = vmatpush1.msra.mxu0 0.0
      %1006 = vmatprep.subr.mxu0 0.0
      %1007 = vmatpush1.msra.mxu0 0.0
      %1008 = vmatprep.subr.mxu0 0.0
      %1009 = vmatpush1.msra.mxu0 0.0
      %1010 = vmatprep.subr.mxu0 0.0
      %1011 = vmatpush1.msra.mxu0 0.0
      %1012 = vmatprep.subr.mxu0 0.0
      %1013 = vmatpush1.msra.mxu0 0.0
      %1014 = vmatprep.subr.mxu0 0.0
      %1015 = vmatpush1.msra.mxu0 0.0
      %1016 = vmatprep.subr.mxu0 0.0
      %1017 = vmatpush1.msra.mxu0 0.0
      %1018 = vmatprep.subr.mxu0 0.0
      %1019 = vmatpush1.msra.mxu0 0.0
      %1020 = vmatprep.subr.mxu0 0.0
      %1021 = vmatpush1.msra.mxu0 0.0
      %1022 = vmatprep.subr.mxu0 0.0
      %1023 = vmatpush1.msra.mxu0 0.0
      %1024 = vmatprep.subr.mxu0 0.0
      %1025 = vmatpush1.msra.mxu0 0.0
      %1026 = vmatprep.subr.mxu0 0.0
      %1027 = vmatpush1.msra.mxu0 0.0
      %1028 = vmatprep.subr.mxu0 0.0
      %1029 = vmatpush1.msra.mxu0 0.0
      %1030 = vmatprep.subr.mxu0 0.0
      %1031 = vmatpush1.msra.mxu0 0.0
      %1032 = vmatprep.subr.mxu0 0.0
      %1033 = vmatpush1.msra.mxu0 0.0
      %1034 = vmatprep.subr.mxu0 0.0
      %1035 = vmatpush1.msra.mxu0 0.0
      %1036 = vmatprep.subr.mxu0 0.0
      %1037 = vmatpush1.msra.mxu0 0.0
      %1038 = vmatprep.subr.mxu0 0.0
      %1039 = vmatpush1.msra.mxu0 0.0
      %1040 = vmatprep.subr.mxu0 0.0
      %1041 = vmatpush1.msra.mxu0 0.0
      %1042 = vmatprep.subr.mxu0 0.0
      %1043 = vmatpush1.msra.mxu0 0.0
      %1044 = vmatprep.subr.mxu0 0.0
      %1045 = vmatpush1.msra.mxu0 0.0
      %1046 = vmatprep.subr.mxu0 0.0
      %1047 = vmatpush1.msra.mxu0 0.0
      %1048 = vmatprep.subr.mxu0 0.0
      %1049 = vmatpush1.msra.mxu0 0.0
      %1050 = vmatprep.subr.mxu0 0.0
      %1051 = vmatpush1.msra.mxu0 0.0
      %1052 = vmatprep.subr.mxu0 0.0
      %1053 = vmatpush1.msra.mxu0 0.0
      %1054 = vmatprep.subr.mxu0 0.0
      %1055 = vmatpush1.msra.mxu0 0.0
      %1056 = vmatprep.subr.mxu0 0.0
      %1057 = vmatpush1.msra.mxu0 0.0
      %1058 = vmatprep.subr.mxu0 0.0
      %1059 = vmatpush1.msra.mxu0 0.0
      %1060 = vmatprep.subr.mxu0 0.0
      %1061 = vmatpush1.msra.mxu0 0.0
      %1062 = vmatprep.subr.mxu0 0.0
      %1063 = vmatpush1.msra.mxu0 0.0
      %1064 = vmatprep.subr.mxu0 0.0
      %1065 = vmatpush1.msra.mxu0 0.0
      %1066 = vmatprep.mubr.f32.mxu0 0.0
      %1067 = vmatmul.mubr.f32.gmra.mrb[0].mxu0 %v996
      %v1068 = vpop.f32.mrb[0].mxu0
      %v1069 = vadd.f32 0.0, %v1068
      %v1070 = vpop.f32.mrb[0].mxu0
      %v1071 = vadd.f32 0.0, %v1070
      %1072 = vdwg.mxu0
      %v1073 = vadd.f32 %v972, %v1069
      %v1074 = vadd.f32 %v973, %v1071
      %s1075 = scalar_lea.vmem %s1, 28
      %v1076 = vld [vmem:[%s1075] sm:$0xf]
      %v1079 = vcombine.high %v871, %v871
      %1080 = vrot.lane.b32.xlu0 %v871, 96
      %v1081 = vpop.permute.xlu0 %1080
      %1082 = vrot.lane.b32.xlu0 %v1079, 96
      %v1083 = vpop.permute.xlu0 %1082
      %1084 = vrot.lane.b32.xlu0 %v872, 96
      %v1085 = vpop.permute.xlu0 %1084
      %vm1086 = vcmask 785408
      %v1087 = vsel %vm1086, %v1081, %v1083
      %v1088 = vsel %vm1086, %v1083, %v1085
      %v1090 = vsel %vm407, %v1076, 0
      %v1092 = vsel %vm411, %v1087, 0
      %v1094 = vsel %vm411, %v1088, 0
      %1096 = vmatprep.subr.mxu0 %v1094
      %1097 = vmatpush1.msra.mxu0 %v1092
      %1098 = vmatprep.subr.mxu0 0.0
      %1099 = vmatpush1.msra.mxu0 0.0
      %1100 = vmatprep.subr.mxu0 0.0
      %1101 = vmatpush1.msra.mxu0 0.0
      %1102 = vmatprep.subr.mxu0 0.0
      %1103 = vmatpush1.msra.mxu0 0.0
      %1104 = vmatprep.subr.mxu0 0.0
      %1105 = vmatpush1.msra.mxu0 0.0
      %1106 = vmatprep.subr.mxu0 0.0
      %1107 = vmatpush1.msra.mxu0 0.0
      %1108 = vmatprep.subr.mxu0 0.0
      %1109 = vmatpush1.msra.mxu0 0.0
      %1110 = vmatprep.subr.mxu0 0.0
      %1111 = vmatpush1.msra.mxu0 0.0
      %1112 = vmatprep.subr.mxu0 0.0
      %1113 = vmatpush1.msra.mxu0 0.0
      %1114 = vmatprep.subr.mxu0 0.0
      %1115 = vmatpush1.msra.mxu0 0.0
      %1116 = vmatprep.subr.mxu0 0.0
      %1117 = vmatpush1.msra.mxu0 0.0
      %1118 = vmatprep.subr.mxu0 0.0
      %1119 = vmatpush1.msra.mxu0 0.0
      %1120 = vmatprep.subr.mxu0 0.0
      %1121 = vmatpush1.msra.mxu0 0.0
      %1122 = vmatprep.subr.mxu0 0.0
      %1123 = vmatpush1.msra.mxu0 0.0
      %1124 = vmatprep.subr.mxu0 0.0
      %1125 = vmatpush1.msra.mxu0 0.0
      %1126 = vmatprep.subr.mxu0 0.0
      %1127 = vmatpush1.msra.mxu0 0.0
      %1128 = vmatprep.subr.mxu0 0.0
      %1129 = vmatpush1.msra.mxu0 0.0
      %1130 = vmatprep.subr.mxu0 0.0
      %1131 = vmatpush1.msra.mxu0 0.0
      %1132 = vmatprep.subr.mxu0 0.0
      %1133 = vmatpush1.msra.mxu0 0.0
      %1134 = vmatprep.subr.mxu0 0.0
      %1135 = vmatpush1.msra.mxu0 0.0
      %1136 = vmatprep.subr.mxu0 0.0
      %1137 = vmatpush1.msra.mxu0 0.0
      %1138 = vmatprep.subr.mxu0 0.0
      %1139 = vmatpush1.msra.mxu0 0.0
      %1140 = vmatprep.subr.mxu0 0.0
      %1141 = vmatpush1.msra.mxu0 0.0
      %1142 = vmatprep.subr.mxu0 0.0
      %1143 = vmatpush1.msra.mxu0 0.0
      %1144 = vmatprep.subr.mxu0 0.0
      %1145 = vmatpush1.msra.mxu0 0.0
      %1146 = vmatprep.subr.mxu0 0.0
      %1147 = vmatpush1.msra.mxu0 0.0
      %1148 = vmatprep.subr.mxu0 0.0
      %1149 = vmatpush1.msra.mxu0 0.0
      %1150 = vmatprep.subr.mxu0 0.0
      %1151 = vmatpush1.msra.mxu0 0.0
      %1152 = vmatprep.subr.mxu0 0.0
      %1153 = vmatpush1.msra.mxu0 0.0
      %1154 = vmatprep.subr.mxu0 0.0
      %1155 = vmatpush1.msra.mxu0 0.0
      %1156 = vmatprep.subr.mxu0 0.0
      %1157 = vmatpush1.msra.mxu0 0.0
      %1158 = vmatprep.subr.mxu0 0.0
      %1159 = vmatpush1.msra.mxu0 0.0
      %1160 = vmatprep.mubr.f32.mxu0 0.0
      %1161 = vmatmul.mubr.f32.gmra.mrb[0].mxu0 %v1090
      %v1162 = vpop.f32.mrb[0].mxu0
      %v1163 = vadd.f32 0.0, %v1162
      %v1164 = vpop.f32.mrb[0].mxu0
      %v1165 = vadd.f32 0.0, %v1164
      %1166 = vdwg.mxu0
      %v1167 = vadd.f32 %v1073, %v1163
      %v1168 = vadd.f32 %v1074, %v1165
      %1169 = vrot.lane.b32.xlu0 %v579, 34
      %v1170 = vpop.permute.xlu0 %1169
      %v1171 = vrot.slane %v1170, 4
      %v1172 = vsel %vm496, %v1171, %v1170
      %v1175 = vmul.f32 %v871, %v1172
      %v1176 = vmul.f32 %v872, %v1171
      %s1177 = scalar_lea.vmem %s1, 32
      %v1178 = vld [vmem:[%s1177] sm:$0xf]
      %v1181 = vcombine.high %v1175, %v1175
      %1182 = vrot.lane.b32.xlu0 %v1175, 94
      %v1183 = vpop.permute.xlu0 %1182
      %1184 = vrot.lane.b32.xlu0 %v1181, 94
      %v1185 = vpop.permute.xlu0 %1184
      %1186 = vrot.lane.b32.xlu0 %v1176, 94
      %v1187 = vpop.permute.xlu0 %1186
      %v1188 = vsel %vm386, %v1183, %v1185
      %v1189 = vsel %vm386, %v1185, %v1187
      %v1191 = vsel %vm407, %v1178, 0
      %v1193 = vsel %vm411, %v1188, 0
      %v1195 = vsel %vm411, %v1189, 0
      %1197 = vmatprep.subr.mxu0 %v1195
      %1198 = vmatpush1.msra.mxu0 %v1193
      %1199 = vmatprep.subr.mxu0 0.0
      %1200 = vmatpush1.msra.mxu0 0.0
      %1201 = vmatprep.subr.mxu0 0.0
      %1202 = vmatpush1.msra.mxu0 0.0
      %1203 = vmatprep.subr.mxu0 0.0
      %1204 = vmatpush1.msra.mxu0 0.0
      %1205 = vmatprep.subr.mxu0 0.0
      %1206 = vmatpush1.msra.mxu0 0.0
      %1207 = vmatprep.subr.mxu0 0.0
      %1208 = vmatpush1.msra.mxu0 0.0
      %1209 = vmatprep.subr.mxu0 0.0
      %1210 = vmatpush1.msra.mxu0 0.0
      %1211 = vmatprep.subr.mxu0 0.0
      %1212 = vmatpush1.msra.mxu0 0.0
      %1213 = vmatprep.subr.mxu0 0.0
      %1214 = vmatpush1.msra.mxu0 0.0
      %1215 = vmatprep.subr.mxu0 0.0
      %1216 = vmatpush1.msra.mxu0 0.0
      %1217 = vmatprep.subr.mxu0 0.0
      %1218 = vmatpush1.msra.mxu0 0.0
      %1219 = vmatprep.subr.mxu0 0.0
      %1220 = vmatpush1.msra.mxu0 0.0
      %1221 = vmatprep.subr.mxu0 0.0
      %1222 = vmatpush1.msra.mxu0 0.0
      %1223 = vmatprep.subr.mxu0 0.0
      %1224 = vmatpush1.msra.mxu0 0.0
      %1225 = vmatprep.subr.mxu0 0.0
      %1226 = vmatpush1.msra.mxu0 0.0
      %1227 = vmatprep.subr.mxu0 0.0
      %1228 = vmatpush1.msra.mxu0 0.0
      %1229 = vmatprep.subr.mxu0 0.0
      %1230 = vmatpush1.msra.mxu0 0.0
      %1231 = vmatprep.subr.mxu0 0.0
      %1232 = vmatpush1.msra.mxu0 0.0
      %1233 = vmatprep.subr.mxu0 0.0
      %1234 = vmatpush1.msra.mxu0 0.0
      %1235 = vmatprep.subr.mxu0 0.0
      %1236 = vmatpush1.msra.mxu0 0.0
      %1237 = vmatprep.subr.mxu0 0.0
      %1238 = vmatpush1.msra.mxu0 0.0
      %1239 = vmatprep.subr.mxu0 0.0
      %1240 = vmatpush1.msra.mxu0 0.0
      %1241 = vmatprep.subr.mxu0 0.0
      %1242 = vmatpush1.msra.mxu0 0.0
      %1243 = vmatprep.subr.mxu0 0.0
      %1244 = vmatpush1.msra.mxu0 0.0
      %1245 = vmatprep.subr.mxu0 0.0
      %1246 = vmatpush1.msra.mxu0 0.0
      %1247 = vmatprep.subr.mxu0 0.0
      %1248 = vmatpush1.msra.mxu0 0.0
      %1249 = vmatprep.subr.mxu0 0.0
      %1250 = vmatpush1.msra.mxu0 0.0
      %1251 = vmatprep.subr.mxu0 0.0
      %1252 = vmatpush1.msra.mxu0 0.0
      %1253 = vmatprep.subr.mxu0 0.0
      %1254 = vmatpush1.msra.mxu0 0.0
      %1255 = vmatprep.subr.mxu0 0.0
      %1256 = vmatpush1.msra.mxu0 0.0
      %1257 = vmatprep.subr.mxu0 0.0
      %1258 = vmatpush1.msra.mxu0 0.0
      %1259 = vmatprep.subr.mxu0 0.0
      %1260 = vmatpush1.msra.mxu0 0.0
      %1261 = vmatprep.mubr.f32.mxu0 0.0
      %1262 = vmatmul.mubr.f32.gmra.mrb[0].mxu0 %v1191
      %v1263 = vpop.f32.mrb[0].mxu0
      %v1264 = vadd.f32 0.0, %v1263
      %v1265 = vpop.f32.mrb[0].mxu0
      %v1266 = vadd.f32 0.0, %v1265
      %1267 = vdwg.mxu0
      %v1268 = vadd.f32 %v1167, %v1264
      %v1269 = vadd.f32 %v1168, %v1266
      %v1270 = vpack.c.bf16 %v1268, %v1268
      %v1271 = vpack.c.bf16 %v1269, %v1269
      %v1274 = vcombine.low %v1270, %v1271
      %v1276 = vunpack.c.l.s4 1983009808
      %v1277 = vunpack.c.0.s8 %v1276
      %v1278 = vlaneseq
      %v1279 = vshrl.u32 %v1278, 7
      %v1280 = vsub.s32 %v1277, %v1279
      %v1281 = vrot.slane %v1274, %v1280
      %1283 = vst [vmem:[%s292] sm:$0xf] %v1281
      %v1284 = vunpack.c.l.bf16 %v1270
      %v1285 = vunpack.c.l.bf16 %v1271
      %v1286 = vsel %vm411, %v1284, 0.0
      %v1287 = vsel %vm411, %v1285, 0.0
      %v1288 = vadd.f32 %v1286, %v1287
      %1289 = vadd.xlane.f32.xlu0 %v1288
      %v1290 = vpop.xlane.xlu0 %1289
      %v1291 = vadd.f32 %v1290, 0.0
      %v1292 = vmul.f32 %v1284, %v1284
      %v1293 = vmul.f32 %v1285, %v1285
      %v1294 = vsel %vm411, %v1292, 0.0
      %v1295 = vsel %vm411, %v1293, 0.0
      %v1296 = vadd.f32 %v1294, %v1295
      %1297 = vadd.xlane.f32.xlu0 %v1296
      %v1298 = vpop.xlane.xlu0 %1297
      %v1299 = vadd.f32 %v1298, 0.0
      %vm1300 = vcmask 3072
      %1301 = vst.msk [vmem:[%s296] sm:$0xf] %vm1300, %v1291
      %1302 = vst.msk [vmem:[%s300] sm:$0xf] %vm1300, %v1299
      %p1303 = scmp.lt.s32.totalorder %s20, 1
      %s1304 = scalar_select %p1303, %s20, 1
      %s1305 = smul.addr %s1304, 2
      %s1306 = smul.addr %s1305, 2
      %s1307 = scalar_lea.vmem %s5, %s1306
      %p1308 = scmp.lt.s32.totalorder %s20, 1
      %s1309 = scalar_select %p1308, %s20, 1
      %s1310 = smul.addr %s1309, 4
      %s1311 = scalar_lea.vmem %s6, %s1310
      %p1312 = scmp.lt.s32.totalorder %s20, 1
      %s1313 = scalar_select %p1312, %s20, 1
      %s1314 = smul.addr %s1313, 4
      %s1315 = scalar_lea.vmem %s7, %s1314
      // Predicated region
      $region41: #{deconv_bn_relu_forward.5} parent=39 // pred_check
        %p1316 = pneg %p148
      $region42: #{deconv_bn_relu_forward.5} parent=39 // pred_check_branch
        %1318 = sbr.rel (%p1316) target = $region44
      $region43: #{deconv_bn_relu_forward.5} parent=39 // pred_region
        _
      $region44: #{deconv_bn_relu_forward.5} parent=39 // pred_fallthru
        _
      // Predicated region
      $region45: #{deconv_bn_relu_forward.5} parent=39 // pred_check
        %p1319 = pneg %p174
      $region46: #{deconv_bn_relu_forward.5} parent=39 // pred_check_branch
        %1321 = sbr.rel (%p1319) target = $region48
      $region47: #{deconv_bn_relu_forward.5} parent=39 // pred_region
        _
      $region48: #{deconv_bn_relu_forward.5} parent=39 // pred_fallthru
        _
      // Predicated region
      $region49: #{deconv_bn_relu_forward.5} parent=39 // pred_check
        %p1322 = pneg %p200
      $region50: #{deconv_bn_relu_forward.5} parent=39 // pred_check_branch
        %1324 = sbr.rel (%p1322) target = $region52
      $region51: #{deconv_bn_relu_forward.5} parent=39 // pred_region
        _
      $region52: #{deconv_bn_relu_forward.5} parent=39 // pred_fallthru
        _
    $region40: #{deconv_bn_relu_forward.5} parent=5 // pred_fallthru
      _
    %p1325 = scmp.le.s32.totalorder 2, %s15
    // Predicated region
    $region53: #{deconv_bn_relu_forward.5} parent=5 // pred_check
      %p1326 = pneg %p1325
    $region54: #{deconv_bn_relu_forward.5} parent=5 // pred_check_branch
      %1328 = sbr.rel (%p1326) target = $region56
    $region55: #{deconv_bn_relu_forward.5} parent=5 // pred_region
      %s1329 = ssub.s32 %s15, 2
      // Predicated region
      $region57: #{deconv_bn_relu_forward.5} parent=55 // pred_check
        %p1330 = pneg %p154
      $region58: #{deconv_bn_relu_forward.5} parent=55 // pred_check_branch
        %1332 = sbr.rel (%p1330) target = $region60
      $region59: #{deconv_bn_relu_forward.5} parent=55 // pred_region
        %p1333 = scmp.lt.s32.totalorder %s21, 1
        %s1334 = scalar_select %p1333, %s21, 1
        %s1335 = smul.addr %s1334, 2
        %s1336 = smul.addr %s1335, 2
        %s1337 = scalar_lea.vmem %s5, %s1336
      $region60: #{deconv_bn_relu_forward.5} parent=55 // pred_fallthru
        _
      // Predicated region
      $region61: #{deconv_bn_relu_forward.5} parent=55 // pred_check
        %p1338 = pneg %p180
      $region62: #{deconv_bn_relu_forward.5} parent=55 // pred_check_branch
        %1340 = sbr.rel (%p1338) target = $region64
      $region63: #{deconv_bn_relu_forward.5} parent=55 // pred_region
        %p1341 = scmp.lt.s32.totalorder %s21, 1
        %s1342 = scalar_select %p1341, %s21, 1
        %s1343 = smul.addr %s1342, 4
        %s1344 = scalar_lea.vmem %s6, %s1343
      $region64: #{deconv_bn_relu_forward.5} parent=55 // pred_fallthru
        _
      // Predicated region
      $region65: #{deconv_bn_relu_forward.5} parent=55 // pred_check
        %p1345 = pneg %p206
      $region66: #{deconv_bn_relu_forward.5} parent=55 // pred_check_branch
        %1347 = sbr.rel (%p1345) target = $region68
      $region67: #{deconv_bn_relu_forward.5} parent=55 // pred_region
        %p1348 = scmp.lt.s32.totalorder %s21, 1
        %s1349 = scalar_select %p1348, %s21, 1
        %s1350 = smul.addr %s1349, 4
        %s1351 = scalar_lea.vmem %s7, %s1350
      $region68: #{deconv_bn_relu_forward.5} parent=55 // pred_fallthru
        _
    $region56: #{deconv_bn_relu_forward.5} parent=5 // pred_fallthru
      _
  $region6: #{deconv_bn_relu_forward.5} parent=0 // loop_footer
    %s19 = sadd.s32 1, %s15
  $region7: #{deconv_bn_relu_forward.5} parent=0 // loop_footer_branch
    %14 = sbr.rel target = $region3
  $region8: #{deconv_bn_relu_forward.5} parent=0 // loop_exit
    _

</llo_original>
